<compile_context>
chip_gen: v5e
topology: v5e:2x2
jax: 0.10.0
libtpu: 0.0.40
codegen_flags: <defaults>
</compile_context>

<pallas_src>
import functools
from math import ceil

import jax
import jax.numpy as jnp
from jax.experimental import pallas as pl
from jax.experimental.pallas import tpu as pltpu

_VMEM_LIMIT = 32 * 1024 * 1024


def _pixel_tile(p, cap=2048):
    """Largest divisor of p that is a multiple of 128 and <= cap (else p)."""
    if p % 128 != 0:
        return p
    t = min(p, cap)
    while p % t != 0:
        t -= 128
    return t


# ---------------------------------------------------------------------------
# Kernel 1: fused freup head.
# Stacked [mag; pha] (2C, T) -> block-diagonal 1x1 conv -> LeakyReLU(0.1) ->
# two padded (C, 2C) 1x1 convs -> Nyquist pre-scale -> polar->rect.
# cos/sin only on the non-zero quarter of the 2Hx2W target (rest is 0).
# ---------------------------------------------------------------------------
def _freup_fused_kernel(mp_ref, w1_ref, w2m_ref, w2p_ref, s_ref, re_ref, im_ref):
    s = s_ref[...]                                                  # (1, T)
    h = jnp.dot(w1_ref[...], mp_ref[...], preferred_element_type=jnp.float32)
    h = jnp.maximum(h, 0.1 * h)                                     # LeakyReLU(0.1)
    mag = jnp.dot(w2m_ref[...], h, preferred_element_type=jnp.float32) * s
    pha = jnp.dot(w2p_ref[...], h, preferred_element_type=jnp.float32) * s
    re_ref[...] = mag * jnp.cos(pha)
    im_ref[...] = mag * jnp.sin(pha)


def freup_fused(magpha, w1, w2m, w2p, scale, c):
    # magpha: (N, 2C, P) stacked |FFT| and angle; scale: (1, P)
    n, c2, p_ = magpha.shape
    t = _pixel_tile(p_)
    grid = (n, p_ // t)
    act_spec = pl.BlockSpec((None, c2, t), lambda i, j: (i, 0, j))
    out_spec = pl.BlockSpec((None, c, t), lambda i, j: (i, 0, j))
    return pl.pallas_call(
        _freup_fused_kernel,
        out_shape=(jax.ShapeDtypeStruct((n, c, p_), jnp.float32),
                   jax.ShapeDtypeStruct((n, c, p_), jnp.float32)),
        grid=grid,
        in_specs=[act_spec,
                  pl.BlockSpec((c2, c2), lambda i, j: (0, 0)),
                  pl.BlockSpec((c, c2), lambda i, j: (0, 0)),
                  pl.BlockSpec((c, c2), lambda i, j: (0, 0)),
                  pl.BlockSpec((1, t), lambda i, j: (0, j))],
        out_specs=(out_spec, out_spec),
        compiler_params=pltpu.CompilerParams(
            dimension_semantics=("parallel", "parallel"),
            vmem_limit_bytes=_VMEM_LIMIT),
    )(magpha, w1, w2m, w2p, scale)


# ---------------------------------------------------------------------------
# Kernel 2: 1x1 conv + per-channel bias (eval-mode BN folded host-side)
# + activation, channels-first, lane-dense (pixel axis padded to 128k).
# ---------------------------------------------------------------------------
def _conv1x1_kernel(x_ref, w_ref, b_ref, o_ref, *, act):
    y = jnp.dot(w_ref[...], x_ref[...], preferred_element_type=jnp.float32)
    y = y + b_ref[...]
    if act == "relu":
        y = jnp.maximum(y, 0.0)
    elif act == "tanh":
        y = jnp.tanh(y)
    o_ref[...] = y.astype(o_ref.dtype)


def conv1x1_affine_act(x, w, bias, act="none"):
    # x: (N, Cin, P); w: (Cout, Cin); bias: (Cout,)
    n, cin, p_ = x.shape
    cout = w.shape[0]
    p_pad = ((p_ + 127) // 128) * 128         # lane-dense output stores
    xp = jnp.pad(x, ((0, 0), (0, 0), (0, p_pad - p_))) if p_pad != p_ else x
    t = _pixel_tile(p_pad)
    out = pl.pallas_call(
        functools.partial(_conv1x1_kernel, act=act),
        out_shape=jax.ShapeDtypeStruct((n, cout, p_pad), jnp.float32),
        grid=(n, p_pad // t),
        in_specs=[pl.BlockSpec((None, cin, t), lambda i, j: (i, 0, j)),
                  pl.BlockSpec((cout, cin), lambda i, j: (0, 0)),
                  pl.BlockSpec((cout, 1), lambda i, j: (0, 0))],
        out_specs=pl.BlockSpec((None, cout, t), lambda i, j: (i, 0, j)),
        compiler_params=pltpu.CompilerParams(
            dimension_semantics=("parallel", "parallel"),
            vmem_limit_bytes=_VMEM_LIMIT),
    )(xp, w, bias.reshape(cout, 1))
    return out[:, :, :p_] if p_pad != p_ else out


# ---------------------------------------------------------------------------
# Kernel 3: 3x3 conv (stride 1, pad 1) + BN(folded) + activation.
# Input is ONE flat zero-padded slab (Cin, W+1 | H*W | W+1).  The 9 taps are
# static lane slices of it; row out-of-bounds falls into the zero padding,
# column wrap is masked; taps are written into a (9*Cin, H*W) VMEM im2col
# scratch, then a SINGLE (Cout, 9*Cin) @ (9*Cin, H*W) MXU matmul.
# ---------------------------------------------------------------------------
def _conv3x3_kernel(xp_ref, w_ref, b_ref, o_ref, col_ref, *, H, W, act):
    hw = H * W
    cin_p = xp_ref.shape[0]
    col_idx = jax.lax.broadcasted_iota(jnp.int32, (1, hw), 1) % W
    for di in range(3):
        for dj in range(3):
            t = di * 3 + dj
            start = (W + 1) + (di - 1) * W + (dj - 1)     # static, >= 0
            tap = xp_ref[:, start:start + hw]             # (Cin_p, H*W)
            if dj == 0:
                tap = jnp.where(col_idx >= 1, tap, 0.0)
            elif dj == 2:
                tap = jnp.where(col_idx < W - 1, tap, 0.0)
            col_ref[t * cin_p:(t + 1) * cin_p, :] = tap
    y = jnp.dot(w_ref[...], col_ref[...], preferred_element_type=jnp.float32)
    y = y + b_ref[...]
    if act == "relu":
        y = jnp.maximum(y, 0.0)
    elif act == "tanh":
        y = jnp.tanh(y)
    o_ref[...] = y.astype(o_ref.dtype)


def conv3x3(x, w, scale=None, shift=None, act="none"):
    # x: NCHW; w: torch conv layout (Cout, Cin, 3, 3); eval-mode BN folded in.
    # TODO(synk): for very large H*W on v7x a row-tile (+1-row halo) grid axis
    # would be needed; full-spatial-per-sample slabs are fine at these sizes.
    n, cin, h, wd = x.shape
    cout = w.shape[0]
    if scale is not None:
        w = w * scale[:, None, None, None]                # fold BN scale into weights
    if shift is None:
        shift = jnp.zeros((cout,), jnp.float32)
    cin_p = ((cin + 7) // 8) * 8                          # sublane-aligned im2col blocks
    if cin_p != cin:
        w = jnp.pad(w, ((0, 0), (0, cin_p - cin), (0, 0), (0, 0)))
    w_flat = jnp.transpose(w, (0, 2, 3, 1)).reshape(cout, 9 * cin_p)  # tap-major cols
    hw = h * wd
    pad = wd + 1
    x_flat = jnp.pad(x.reshape(n, cin, hw),
                     ((0, 0), (0, cin_p - cin), (pad, pad)))          # flat halo pad
    out = pl.pallas_call(
        functools.partial(_conv3x3_kernel, H=h, W=wd, act=act),
        out_shape=jax.ShapeDtypeStruct((n, cout, hw), jnp.float32),
        grid=(n,),
        in_specs=[pl.BlockSpec((None, cin_p, hw + 2 * pad), lambda i: (i, 0, 0)),
                  pl.BlockSpec((cout, 9 * cin_p), lambda i: (0, 0)),
                  pl.BlockSpec((cout, 1), lambda i: (0, 0))],
        out_specs=pl.BlockSpec((None, cout, hw), lambda i: (i, 0, 0)),
        scratch_shapes=[pltpu.VMEM((9 * cin_p, hw), jnp.float32)],
        compiler_params=pltpu.CompilerParams(
            dimension_semantics=("parallel",), vmem_limit_bytes=_VMEM_LIMIT),
    )(x_flat, w_flat, shift.reshape(cout, 1))
    return out.reshape(n, cout, h, wd)


# ---------------------------------------------------------------------------
# freup_Cornerdinterpolation
# ---------------------------------------------------------------------------
def freup_corner_interpolation(x, p):
    n, c, h, w = x.shape
    # TODO(synk): FFT / IFFT have no Pallas TPU primitive; they stay as XLA ops.
    fft_x = jnp.fft.fft2(x)
    magpha = jnp.concatenate([jnp.abs(fft_x), jnp.angle(fft_x)],
                             axis=1).reshape(n, 2 * c, h * w)

    # Nyquist pre-scale map: the reference multiplies the PLACED row h//2,
    # row h//2+h, col w//2, col w//2+w by 0.5 (even dims) on both Mag and Pha
    # before cos/sin; those rows/cols all come from source row h//2 / col w//2,
    # so pre-scaling the source is identical (0.25 at the intersection).
    row_s = jnp.ones((h,), jnp.float32)
    col_s = jnp.ones((w,), jnp.float32)
    if h % 2 == 0:
        row_s = row_s.at[h // 2].set(0.5)
    if w % 2 == 0:
        col_s = col_s.at[w // 2].set(0.5)
    scale = (row_s[:, None] * col_s[None, :]).reshape(1, h * w)

    # Block-diagonal fused amp/pha weights (tiny).
    z = jnp.zeros((c, c), jnp.float32)
    w1 = jnp.concatenate([jnp.concatenate([p["amp_w1"], z], axis=1),
                          jnp.concatenate([z, p["pha_w1"]], axis=1)], axis=0)
    w2m = jnp.concatenate([p["amp_w2"], z], axis=1)
    w2p = jnp.concatenate([z, p["pha_w2"]], axis=1)

    re, im = freup_fused(magpha, w1, w2m, w2p, scale, c)     # Pallas kernel
    cplx = (re + 1j * im).reshape(n, c, h, w)

    ir1 = h // 2 + 1
    ir2 = h // 2 + 1 if h % 2 == 1 else h // 2
    ic1 = w // 2 + 1
    ic2 = w // 2 + 1 if w % 2 == 1 else w // 2

    # Corner placement as two concatenates (zero bands included) on complex.
    zr = jnp.zeros((n, c, 2 * h - ir1 - (h - ir2), w), cplx.dtype)
    rows = jnp.concatenate([cplx[:, :, :ir1, :], zr, cplx[:, :, ir2:, :]], axis=2)
    zc = jnp.zeros((n, c, 2 * h, 2 * w - ic1 - (w - ic2)), cplx.dtype)
    full = jnp.concatenate([rows[:, :, :, :ic1], zc, rows[:, :, :, ic2:]], axis=3)

    out = jnp.fft.ifft2(full)
    return jnp.abs(out).astype(jnp.float32)


# ---------------------------------------------------------------------------
# FourierUnit
# TODO(synk): `FourierUnit` is referenced but not defined in the source file;
# the standard FFC FourierUnit (rfft2 -> 1x1 conv + BN + ReLU on stacked
# real/imag channels -> irfft2, norm='ortho', conv bias=False) is used here,
# with eval-mode BatchNorm using freshly-initialized running stats.
# ---------------------------------------------------------------------------
def fourier_unit(x, p):
    n, cin, h, w = x.shape
    ff = jnp.fft.rfft2(x, norm="ortho")                      # (N, Cin, H, Wr)
    wr = ff.shape[-1]
    st = jnp.stack([jnp.real(ff), jnp.imag(ff)], axis=2).reshape(n, cin * 2, h * wr)
    w_eff = p["fu_w"] * p["fu_bn_scale"][:, None]            # fold BN scale into weight
    y = conv1x1_affine_act(st, w_eff, p["fu_bn_shift"], act="relu")   # Pallas kernel
    cout2 = y.shape[1]
    y = y.reshape(n, cout2 // 2, 2, h, wr)
    yc = y[:, :, 0] + 1j * y[:, :, 1]
    return jnp.fft.irfft2(yc, s=(h, w), norm="ortho")


# ---------------------------------------------------------------------------
# fresup forward
# ---------------------------------------------------------------------------
def fresup_forward(x, p):
    xn = freup_corner_interpolation(x, p)                    # (N, C, 2H, 2W)
    n, c, h, w = xn.shape
    split_no = 2
    pad_h = ceil(h / split_no) * split_no - h
    pad_w = ceil(w / split_no) * split_no - w
    sh = (h + pad_h) // split_no
    sw = (w + pad_w) // split_no

    xs = jnp.pad(xn, ((0, 0), (0, 0), (pad_h, 0), (pad_w, 0))) if (pad_h or pad_w) else xn
    # cat(split(dim=H), dim=C) as one reshape+transpose
    xs = xs.reshape(n, c, split_no, sh, w + pad_w).transpose(0, 2, 1, 3, 4)
    xs = xs.reshape(n, split_no * c, sh, w + pad_w)
    xs_c = xs.shape[1]
    # cat(split(dim=W), dim=C)
    xs = xs.reshape(n, xs_c, sh, split_no, sw).transpose(0, 3, 1, 2, 4)
    xs = xs.reshape(n, split_no * xs_c, sh, sw)

    xs = fourier_unit(jnp.concatenate([xs, x], axis=1), p)
    xs = conv3x3(jnp.concatenate([xs, x], axis=1), p["lc_w"], act="none")

    # cat(split(dim=C, xs_c), dim=W)
    k = xs.shape[1] // xs_c
    xs = xs.reshape(n, k, xs_c, sh, sw).transpose(0, 2, 3, 1, 4).reshape(n, xs_c, sh, k * sw)
    # cat(split(dim=C, c), dim=H)
    k2 = xs.shape[1] // c
    xs = xs.reshape(n, k2, c, sh, k * sw).transpose(0, 2, 1, 3, 4).reshape(n, c, k2 * sh, k * sw)
    if pad_h or pad_w:
        xs = xs[:, :, pad_h:, pad_w:]

    out = conv3x3(jnp.concatenate([xs, xn], axis=1), p["conv_w"],
                  p["conv_bn_scale"], p["conv_bn_shift"], act="tanh")
    return out


# ---------------------------------------------------------------------------
# Deterministic parameter init (synthetic, no checkpoint)
# ---------------------------------------------------------------------------
def init_params(key, channels):
    ks = jax.random.split(key, 8)

    def conv_w(k, cout, cin, kh=1, kw=1):
        shape = (cout, cin, kh, kw) if (kh > 1 or kw > 1) else (cout, cin)
        fan_in = cin * kh * kw
        return jax.random.normal(k, shape, jnp.float32) / jnp.sqrt(fan_in)

    def bn_eval(num, eps=1e-5):
        gamma = jnp.ones((num,), jnp.float32)
        beta = jnp.zeros((num,), jnp.float32)
        rmean = jnp.zeros((num,), jnp.float32)
        rvar = jnp.ones((num,), jnp.float32)
        scale = gamma / jnp.sqrt(rvar + eps)
        shift = beta - rmean * scale
        return scale, shift

    c = channels
    fu_scale, fu_shift = bn_eval(2 * 4 * c)
    cv_scale, cv_shift = bn_eval(c)
    return {
        "amp_w1": conv_w(ks[0], c, c),
        "amp_w2": conv_w(ks[1], c, c),
        "pha_w1": conv_w(ks[2], c, c),
        "pha_w2": conv_w(ks[3], c, c),
        "fu_w": conv_w(ks[4], 2 * 4 * c, 2 * 5 * c),
        "fu_bn_scale": fu_scale, "fu_bn_shift": fu_shift,
        "lc_w": conv_w(ks[5], 4 * c, 5 * c, 3, 3),
        "conv_w": conv_w(ks[6], c, 2 * c, 3, 3),
        "conv_bn_scale": cv_scale, "conv_bn_shift": cv_shift,
    }


if __name__ == "__main__":
    channels = 4
    key = jax.random.PRNGKey(0)
    kx, kp = jax.random.split(key)
    x = jax.random.normal(kx, (2, channels, 16, 16), jnp.float32)
    params = init_params(kp, channels)

    fwd = jax.jit(fresup_forward)
    out = jax.block_until_ready(fwd(x, params))
    assert out.shape == (2, channels, 32, 32), out.shape
    assert bool(jnp.all(jnp.isfinite(out)))
    print("KERNEL_OK")
</pallas_src>

<mosaic_0001>
module attributes {stable_mosaic.version = 11 : i64} {
  func.func @_freup_fused_kernel(%arg0: i32, %arg1: i32, %arg2: memref<1x8x256xf32, #tpu.memory_space<vmem>>, %arg3: memref<8x8xf32, #tpu.memory_space<vmem>>, %arg4: memref<4x8xf32, #tpu.memory_space<vmem>>, %arg5: memref<4x8xf32, #tpu.memory_space<vmem>>, %arg6: memref<1x256xf32, #tpu.memory_space<vmem>>, %arg7: memref<1x4x256xf32, #tpu.memory_space<vmem>>, %arg8: memref<1x4x256xf32, #tpu.memory_space<vmem>>) attributes {dimension_semantics = [#tpu.dimension_semantics<parallel>, #tpu.dimension_semantics<parallel>], iteration_bounds = array<i64: 2, 1>, scalar_prefetch = 0 : i64, scratch_operands = 0 : i64, tpu.core_type = #tpu.core_type<tc>, window_params = [{transform_indices = @transform_0, window_bounds = array<i64: 1, 8, 256>}, {pipeline_mode = #tpu.pipeline_mode<synchronous>, transform_indices = @transform_1, window_bounds = array<i64: 8, 8>}, {pipeline_mode = #tpu.pipeline_mode<synchronous>, transform_indices = @transform_2, window_bounds = array<i64: 4, 8>}, {pipeline_mode = #tpu.pipeline_mode<synchronous>, transform_indices = @transform_3, window_bounds = array<i64: 4, 8>}, {transform_indices = @transform_4, window_bounds = array<i64: 1, 256>}, {transform_indices = @transform_5, window_bounds = array<i64: 1, 4, 256>}, {transform_indices = @transform_6, window_bounds = array<i64: 1, 4, 256>}]} {
    %c0 = arith.constant 0 : index
    %c0_0 = arith.constant 0 : index
    %0 = vector.load %arg6[%c0, %c0_0] : memref<1x256xf32, #tpu.memory_space<vmem>>, vector<1x256xf32>
    %c0_1 = arith.constant 0 : index
    %c0_2 = arith.constant 0 : index
    %1 = vector.load %arg3[%c0_1, %c0_2] : memref<8x8xf32, #tpu.memory_space<vmem>>, vector<8x8xf32>
    %c0_3 = arith.constant 0 : index
    %c0_4 = arith.constant 0 : index
    %c0_5 = arith.constant 0 : index
    %2 = vector.load %arg2[%c0_3, %c0_4, %c0_5] : memref<1x8x256xf32, #tpu.memory_space<vmem>>, vector<1x8x256xf32>
    %3 = vector.shape_cast %2 : vector<1x8x256xf32> to vector<8x256xf32>
    %cst = arith.constant dense<0.000000e+00> : vector<8x256xf32>
    %4 = tpu.matmul %1, %3, %cst {dimension_numbers = #tpu.dot_dimension_numbers<[1], [0], [0], [1], [0, 0, 1, 1], [], []>} : vector<8x8xf32>, vector<8x256xf32>, vector<8x256xf32> -> vector<8x256xf32>
    %cst_6 = arith.constant 1.000000e-01 : f32
    %5 = vector.broadcast %cst_6 : f32 to vector<8x256xf32>
    %6 = arith.mulf %5, %4 : vector<8x256xf32>
    %7 = arith.maximumf %4, %6 : vector<8x256xf32>
    %c0_7 = arith.constant 0 : index
    %c0_8 = arith.constant 0 : index
    %8 = vector.load %arg4[%c0_7, %c0_8] : memref<4x8xf32, #tpu.memory_space<vmem>>, vector<4x8xf32>
    %cst_9 = arith.constant dense<0.000000e+00> : vector<4x256xf32>
    %9 = tpu.matmul %8, %7, %cst_9 {dimension_numbers = #tpu.dot_dimension_numbers<[1], [0], [0], [1], [0, 0, 1, 1], [], []>} : vector<4x8xf32>, vector<8x256xf32>, vector<4x256xf32> -> vector<4x256xf32>
    %10 = vector.broadcast %0 : vector<1x256xf32> to vector<4x256xf32>
    %11 = arith.mulf %9, %10 : vector<4x256xf32>
    %c0_10 = arith.constant 0 : index
    %c0_11 = arith.constant 0 : index
    %12 = vector.load %arg5[%c0_10, %c0_11] : memref<4x8xf32, #tpu.memory_space<vmem>>, vector<4x8xf32>
    %cst_12 = arith.constant dense<0.000000e+00> : vector<4x256xf32>
    %13 = tpu.matmul %12, %7, %cst_12 {dimension_numbers = #tpu.dot_dimension_numbers<[1], [0], [0], [1], [0, 0, 1, 1], [], []>} : vector<4x8xf32>, vector<8x256xf32>, vector<4x256xf32> -> vector<4x256xf32>
    %14 = vector.broadcast %0 : vector<1x256xf32> to vector<4x256xf32>
    %15 = arith.mulf %13, %14 : vector<4x256xf32>
    %16 = math.cos %15 : vector<4x256xf32>
    %17 = arith.mulf %11, %16 : vector<4x256xf32>
    %c0_13 = arith.constant 0 : index
    %c0_14 = arith.constant 0 : index
    %c0_15 = arith.constant 0 : index
    %18 = vector.load %arg7[%c0_13, %c0_14, %c0_15] : memref<1x4x256xf32, #tpu.memory_space<vmem>>, vector<1x4x256xf32>
    %19 = vector.shape_cast %18 : vector<1x4x256xf32> to vector<4x256xf32>
    %20 = vector.shape_cast %17 : vector<4x256xf32> to vector<1x4x256xf32>
    tpu.vector_store %arg7[%c0_13, %c0_14, %c0_15], %20 {strides = array<i32>} : memref<1x4x256xf32, #tpu.memory_space<vmem>>, vector<1x4x256xf32>,
    %21 = math.sin %15 : vector<4x256xf32>
    %22 = arith.mulf %11, %21 : vector<4x256xf32>
    %c0_16 = arith.constant 0 : index
    %c0_17 = arith.constant 0 : index
    %c0_18 = arith.constant 0 : index
    %23 = vector.load %arg8[%c0_16, %c0_17, %c0_18] : memref<1x4x256xf32, #tpu.memory_space<vmem>>, vector<1x4x256xf32>
    %24 = vector.shape_cast %23 : vector<1x4x256xf32> to vector<4x256xf32>
    %25 = vector.shape_cast %22 : vector<4x256xf32> to vector<1x4x256xf32>
    tpu.vector_store %arg8[%c0_16, %c0_17, %c0_18], %25 {strides = array<i32>} : memref<1x4x256xf32, #tpu.memory_space<vmem>>, vector<1x4x256xf32>,
    return
  }
  func.func @transform_0(%arg0: i32, %arg1: i32) -> (i32, i32, i32) {
    %c0_i32 = arith.constant 0 : i32
    %c0_i32_0 = arith.constant 0 : i32
    return %arg0, %c0_i32, %arg1 : i32, i32, i32
  }
  func.func @transform_1(%arg0: i32, %arg1: i32) -> (i32, i32) {
    %c0_i32 = arith.constant 0 : i32
    %c0_i32_0 = arith.constant 0 : i32
    %c0_i32_1 = arith.constant 0 : i32
    return %c0_i32, %c0_i32_0 : i32, i32
  }
  func.func @transform_2(%arg0: i32, %arg1: i32) -> (i32, i32) {
    %c0_i32 = arith.constant 0 : i32
    %c0_i32_0 = arith.constant 0 : i32
    %c0_i32_1 = arith.constant 0 : i32
    return %c0_i32, %c0_i32_0 : i32, i32
  }
  func.func @transform_3(%arg0: i32, %arg1: i32) -> (i32, i32) {
    %c0_i32 = arith.constant 0 : i32
    %c0_i32_0 = arith.constant 0 : i32
    %c0_i32_1 = arith.constant 0 : i32
    return %c0_i32, %c0_i32_0 : i32, i32
  }
  func.func @transform_4(%arg0: i32, %arg1: i32) -> (i32, i32) {
    %c0_i32 = arith.constant 0 : i32
    %c0_i32_0 = arith.constant 0 : i32
    return %c0_i32, %arg1 : i32, i32
  }
  func.func @transform_5(%arg0: i32, %arg1: i32) -> (i32, i32, i32) {
    %c0_i32 = arith.constant 0 : i32
    %c0_i32_0 = arith.constant 0 : i32
    return %arg0, %c0_i32, %arg1 : i32, i32, i32
  }
  func.func @transform_6(%arg0: i32, %arg1: i32) -> (i32, i32, i32) {
    %c0_i32 = arith.constant 0 : i32
    %c0_i32_0 = arith.constant 0 : i32
    return %arg0, %c0_i32, %arg1 : i32, i32, i32
  }
}

module attributes {stable_mosaic.version = 11 : i64} {
  func.func @_conv1x1_kernel(%arg0: i32, %arg1: i32, %arg2: memref<1x40x256xf32, #tpu.memory_space<vmem>>, %arg3: memref<32x40xf32, #tpu.memory_space<vmem>>, %arg4: memref<32x1xf32, #tpu.memory_space<vmem>>, %arg5: memref<1x32x256xf32, #tpu.memory_space<vmem>>) attributes {dimension_semantics = [#tpu.dimension_semantics<parallel>, #tpu.dimension_semantics<parallel>], iteration_bounds = array<i64: 2, 1>, scalar_prefetch = 0 : i64, scratch_operands = 0 : i64, tpu.core_type = #tpu.core_type<tc>, window_params = [{transform_indices = @transform_0, window_bounds = array<i64: 1, 40, 256>}, {pipeline_mode = #tpu.pipeline_mode<synchronous>, transform_indices = @transform_1, window_bounds = array<i64: 32, 40>}, {pipeline_mode = #tpu.pipeline_mode<synchronous>, transform_indices = @transform_2, window_bounds = array<i64: 32, 1>}, {transform_indices = @transform_3, window_bounds = array<i64: 1, 32, 256>}]} {
    %c0 = arith.constant 0 : index
    %c0_0 = arith.constant 0 : index
    %0 = vector.load %arg3[%c0, %c0_0] : memref<32x40xf32, #tpu.memory_space<vmem>>, vector<32x40xf32>
    %c0_1 = arith.constant 0 : index
    %c0_2 = arith.constant 0 : index
    %c0_3 = arith.constant 0 : index
    %1 = vector.load %arg2[%c0_1, %c0_2, %c0_3] : memref<1x40x256xf32, #tpu.memory_space<vmem>>, vector<1x40x256xf32>
    %2 = vector.shape_cast %1 : vector<1x40x256xf32> to vector<40x256xf32>
    %cst = arith.constant dense<0.000000e+00> : vector<32x256xf32>
    %3 = tpu.matmul %0, %2, %cst {dimension_numbers = #tpu.dot_dimension_numbers<[1], [0], [0], [1], [0, 0, 1, 1], [], []>} : vector<32x40xf32>, vector<40x256xf32>, vector<32x256xf32> -> vector<32x256xf32>
    %c0_4 = arith.constant 0 : index
    %c0_5 = arith.constant 0 : index
    %4 = vector.load %arg4[%c0_4, %c0_5] : memref<32x1xf32, #tpu.memory_space<vmem>>, vector<32x1xf32>
    %5 = vector.broadcast %4 : vector<32x1xf32> to vector<32x256xf32>
    %6 = arith.addf %3, %5 : vector<32x256xf32>
    %cst_6 = arith.constant 0.000000e+00 : f32
    %7 = vector.broadcast %cst_6 : f32 to vector<32x256xf32>
    %8 = arith.maximumf %6, %7 : vector<32x256xf32>
    %c0_7 = arith.constant 0 : index
    %c0_8 = arith.constant 0 : index
    %c0_9 = arith.constant 0 : index
    %9 = vector.load %arg5[%c0_7, %c0_8, %c0_9] : memref<1x32x256xf32, #tpu.memory_space<vmem>>, vector<1x32x256xf32>
    %10 = vector.shape_cast %9 : vector<1x32x256xf32> to vector<32x256xf32>
    %11 = vector.shape_cast %8 : vector<32x256xf32> to vector<1x32x256xf32>
    tpu.vector_store %arg5[%c0_7, %c0_8, %c0_9], %11 {strides = array<i32>} : memref<1x32x256xf32, #tpu.memory_space<vmem>>, vector<1x32x256xf32>,
    return
  }
  func.func @transform_0(%arg0: i32, %arg1: i32) -> (i32, i32, i32) {
    %c0_i32 = arith.constant 0 : i32
    %c0_i32_0 = arith.constant 0 : i32
    return %arg0, %c0_i32, %arg1 : i32, i32, i32
  }
  func.func @transform_1(%arg0: i32, %arg1: i32) -> (i32, i32) {
    %c0_i32 = arith.constant 0 : i32
    %c0_i32_0 = arith.constant 0 : i32
    %c0_i32_1 = arith.constant 0 : i32
    return %c0_i32, %c0_i32_0 : i32, i32
  }
  func.func @transform_2(%arg0: i32, %arg1: i32) -> (i32, i32) {
    %c0_i32 = arith.constant 0 : i32
    %c0_i32_0 = arith.constant 0 : i32
    %c0_i32_1 = arith.constant 0 : i32
    return %c0_i32, %c0_i32_0 : i32, i32
  }
  func.func @transform_3(%arg0: i32, %arg1: i32) -> (i32, i32, i32) {
    %c0_i32 = arith.constant 0 : i32
    %c0_i32_0 = arith.constant 0 : i32
    return %arg0, %c0_i32, %arg1 : i32, i32, i32
  }
}

module attributes {stable_mosaic.version = 11 : i64} {
  func.func @_conv3x3_kernel(%arg0: i32, %arg1: memref<1x24x290xf32, #tpu.memory_space<vmem>>, %arg2: memref<16x216xf32, #tpu.memory_space<vmem>>, %arg3: memref<16x1xf32, #tpu.memory_space<vmem>>, %arg4: memref<1x16x256xf32, #tpu.memory_space<vmem>>, %arg5: memref<216x256xf32, #tpu.memory_space<vmem>>) attributes {dimension_semantics = [#tpu.dimension_semantics<parallel>], iteration_bounds = array<i64: 2>, scalar_prefetch = 0 : i64, scratch_operands = 1 : i64, tpu.core_type = #tpu.core_type<tc>, window_params = [{transform_indices = @transform_0, window_bounds = array<i64: 1, 24, 290>}, {pipeline_mode = #tpu.pipeline_mode<synchronous>, transform_indices = @transform_1, window_bounds = array<i64: 16, 216>}, {pipeline_mode = #tpu.pipeline_mode<synchronous>, transform_indices = @transform_2, window_bounds = array<i64: 16, 1>}, {transform_indices = @transform_3, window_bounds = array<i64: 1, 16, 256>}]} {
    %0 = tpu.iota {dimensions = array<i32: 1>} : vector<1x256xi32>
    %c16_i32 = arith.constant 16 : i32
    %c0_i32 = arith.constant 0 : i32
    %1 = arith.cmpi eq, %c16_i32, %c0_i32 : i32
    %c1_i32 = arith.constant 1 : i32
    %2 = arith.select %1, %c1_i32, %c16_i32 : i32
    %3 = vector.broadcast %2 : i32 to vector<1x256xi32>
    %4 = arith.remsi %0, %3 : vector<1x256xi32>
    %c0_i32_0 = arith.constant 0 : i32
    %5 = vector.broadcast %c0_i32_0 : i32 to vector<1x256xi32>
    %6 = arith.cmpi ne, %4, %5 : vector<1x256xi32>
    %c0_i32_1 = arith.constant 0 : i32
    %7 = vector.broadcast %c0_i32_1 : i32 to vector<1x256xi32>
    %8 = arith.cmpi slt, %4, %7 : vector<1x256xi32>
    %c0_i32_2 = arith.constant 0 : i32
    %9 = arith.cmpi slt, %2, %c0_i32_2 : i32
    %10 = vector.broadcast %9 : i1 to vector<1x256xi1>
    %11 = vector.broadcast %10 : vector<1x256xi1> to vector<1x256xi1>
    %12 = arith.xori %8, %11 : vector<1x256xi1>
    %13 = arith.andi %12, %6 : vector<1x256xi1>
    %14 = vector.broadcast %2 : i32 to vector<1x256xi32>
    %15 = arith.addi %4, %14 : vector<1x256xi32>
    %16 = arith.select %13, %15, %4 : vector<1x256xi1>, vector<1x256xi32>
    %c0 = arith.constant 0 : index
    %c0_3 = arith.constant 0 : index
    %c0_4 = arith.constant 0 : index
    %17 = vector.load %arg1[%c0, %c0_3, %c0_4] : memref<1x24x290xf32, #tpu.memory_space<vmem>>, vector<1x24x256xf32>
    %18 = vector.shape_cast %17 : vector<1x24x256xf32> to vector<24x256xf32>
    %c1_i32_5 = arith.constant 1 : i32
    %19 = vector.broadcast %c1_i32_5 : i32 to vector<1x256xi32>
    %20 = arith.cmpi sge, %16, %19 : vector<1x256xi32>
    %cst = arith.constant 0.000000e+00 : f32
    %21 = vector.shape_cast %20 : vector<1x256xi1> to vector<1x256xi1>
    %22 = vector.broadcast %21 : vector<1x256xi1> to vector<24x256xi1>
    %23 = vector.broadcast %cst : f32 to vector<24x256xf32>
    %24 = arith.select %22, %18, %23 : vector<24x256xi1>, vector<24x256xf32>
    %c0_6 = arith.constant 0 : index
    %c0_7 = arith.constant 0 : index
    %25 = vector.load %arg5[%c0_6, %c0_7] : memref<216x256xf32, #tpu.memory_space<vmem>>, vector<24x256xf32>
    tpu.vector_store %arg5[%c0_6, %c0_7], %24 {strides = array<i32>} : memref<216x256xf32, #tpu.memory_space<vmem>>, vector<24x256xf32>,
    %c0_8 = arith.constant 0 : index
    %c0_9 = arith.constant 0 : index
    %c1 = arith.constant 1 : index
    %26 = vector.load %arg1[%c0_8, %c0_9, %c1] : memref<1x24x290xf32, #tpu.memory_space<vmem>>, vector<1x24x256xf32>
    %27 = vector.shape_cast %26 : vector<1x24x256xf32> to vector<24x256xf32>
    %c24 = arith.constant 24 : index
    %c0_10 = arith.constant 0 : index
    %28 = vector.load %arg5[%c24, %c0_10] : memref<216x256xf32, #tpu.memory_space<vmem>>, vector<24x256xf32>
    tpu.vector_store %arg5[%c24, %c0_10], %27 {strides = array<i32>} : memref<216x256xf32, #tpu.memory_space<vmem>>, vector<24x256xf32>,
    %c0_11 = arith.constant 0 : index
    %c0_12 = arith.constant 0 : index
    %c2 = arith.constant 2 : index
    %29 = vector.load %arg1[%c0_11, %c0_12, %c2] : memref<1x24x290xf32, #tpu.memory_space<vmem>>, vector<1x24x256xf32>
    %30 = vector.shape_cast %29 : vector<1x24x256xf32> to vector<24x256xf32>
    %c15_i32 = arith.constant 15 : i32
    %31 = vector.broadcast %c15_i32 : i32 to vector<1x256xi32>
    %32 = arith.cmpi slt, %16, %31 : vector<1x256xi32>
    %cst_13 = arith.constant 0.000000e+00 : f32
    %33 = vector.shape_cast %32 : vector<1x256xi1> to vector<1x256xi1>
    %34 = vector.broadcast %33 : vector<1x256xi1> to vector<24x256xi1>
    %35 = vector.broadcast %cst_13 : f32 to vector<24x256xf32>
    %36 = arith.select %34, %30, %35 : vector<24x256xi1>, vector<24x256xf32>
    %c48 = arith.constant 48 : index
    %c0_14 = arith.constant 0 : index
    %37 = vector.load %arg5[%c48, %c0_14] : memref<216x256xf32, #tpu.memory_space<vmem>>, vector<24x256xf32>
    tpu.vector_store %arg5[%c48, %c0_14], %36 {strides = array<i32>} : memref<216x256xf32, #tpu.memory_space<vmem>>, vector<24x256xf32>,
    %c0_15 = arith.constant 0 : index
    %c0_16 = arith.constant 0 : index
    %c16 = arith.constant 16 : index
    %38 = vector.load %arg1[%c0_15, %c0_16, %c16] : memref<1x24x290xf32, #tpu.memory_space<vmem>>, vector<1x24x256xf32>
    %39 = vector.shape_cast %38 : vector<1x24x256xf32> to vector<24x256xf32>
    %c1_i32_17 = arith.constant 1 : i32
    %40 = vector.broadcast %c1_i32_17 : i32 to vector<1x256xi32>
    %41 = arith.cmpi sge, %16, %40 : vector<1x256xi32>
    %cst_18 = arith.constant 0.000000e+00 : f32
    %42 = vector.shape_cast %41 : vector<1x256xi1> to vector<1x256xi1>
    %43 = vector.broadcast %42 : vector<1x256xi1> to vector<24x256xi1>
    %44 = vector.broadcast %cst_18 : f32 to vector<24x256xf32>
    %45 = arith.select %43, %39, %44 : vector<24x256xi1>, vector<24x256xf32>
    %c72 = arith.constant 72 : index
    %c0_19 = arith.constant 0 : index
    %46 = vector.load %arg5[%c72, %c0_19] : memref<216x256xf32, #tpu.memory_space<vmem>>, vector<24x256xf32>
    tpu.vector_store %arg5[%c72, %c0_19], %45 {strides = array<i32>} : memref<216x256xf32, #tpu.memory_space<vmem>>, vector<24x256xf32>,
    %c0_20 = arith.constant 0 : index
    %c0_21 = arith.constant 0 : index
    %c17 = arith.constant 17 : index
    %47 = vector.load %arg1[%c0_20, %c0_21, %c17] : memref<1x24x290xf32, #tpu.memory_space<vmem>>, vector<1x24x256xf32>
    %48 = vector.shape_cast %47 : vector<1x24x256xf32> to vector<24x256xf32>
    %c96 = arith.constant 96 : index
    %c0_22 = arith.constant 0 : index
    %49 = vector.load %arg5[%c96, %c0_22] : memref<216x256xf32, #tpu.memory_space<vmem>>, vector<24x256xf32>
    tpu.vector_store %arg5[%c96, %c0_22], %48 {strides = array<i32>} : memref<216x256xf32, #tpu.memory_space<vmem>>, vector<24x256xf32>,
    %c0_23 = arith.constant 0 : index
    %c0_24 = arith.constant 0 : index
    %c18 = arith.constant 18 : index
    %50 = vector.load %arg1[%c0_23, %c0_24, %c18] : memref<1x24x290xf32, #tpu.memory_space<vmem>>, vector<1x24x256xf32>
    %51 = vector.shape_cast %50 : vector<1x24x256xf32> to vector<24x256xf32>
    %c15_i32_25 = arith.constant 15 : i32
    %52 = vector.broadcast %c15_i32_25 : i32 to vector<1x256xi32>
    %53 = arith.cmpi slt, %16, %52 : vector<1x256xi32>
    %cst_26 = arith.constant 0.000000e+00 : f32
    %54 = vector.shape_cast %53 : vector<1x256xi1> to vector<1x256xi1>
    %55 = vector.broadcast %54 : vector<1x256xi1> to vector<24x256xi1>
    %56 = vector.broadcast %cst_26 : f32 to vector<24x256xf32>
    %57 = arith.select %55, %51, %56 : vector<24x256xi1>, vector<24x256xf32>
    %c120 = arith.constant 120 : index
    %c0_27 = arith.constant 0 : index
    %58 = vector.load %arg5[%c120, %c0_27] : memref<216x256xf32, #tpu.memory_space<vmem>>, vector<24x256xf32>
    tpu.vector_store %arg5[%c120, %c0_27], %57 {strides = array<i32>} : memref<216x256xf32, #tpu.memory_space<vmem>>, vector<24x256xf32>,
    %c0_28 = arith.constant 0 : index
    %c0_29 = arith.constant 0 : index
    %c32 = arith.constant 32 : index
    %59 = vector.load %arg1[%c0_28, %c0_29, %c32] : memref<1x24x290xf32, #tpu.memory_space<vmem>>, vector<1x24x256xf32>
    %60 = vector.shape_cast %59 : vector<1x24x256xf32> to vector<24x256xf32>
    %c1_i32_30 = arith.constant 1 : i32
    %61 = vector.broadcast %c1_i32_30 : i32 to vector<1x256xi32>
    %62 = arith.cmpi sge, %16, %61 : vector<1x256xi32>
    %cst_31 = arith.constant 0.000000e+00 : f32
    %63 = vector.shape_cast %62 : vector<1x256xi1> to vector<1x256xi1>
    %64 = vector.broadcast %63 : vector<1x256xi1> to vector<24x256xi1>
    %65 = vector.broadcast %cst_31 : f32 to vector<24x256xf32>
    %66 = arith.select %64, %60, %65 : vector<24x256xi1>, vector<24x256xf32>
    %c144 = arith.constant 144 : index
    %c0_32 = arith.constant 0 : index
    %67 = vector.load %arg5[%c144, %c0_32] : memref<216x256xf32, #tpu.memory_space<vmem>>, vector<24x256xf32>
    tpu.vector_store %arg5[%c144, %c0_32], %66 {strides = array<i32>} : memref<216x256xf32, #tpu.memory_space<vmem>>, vector<24x256xf32>,
    %c0_33 = arith.constant 0 : index
    %c0_34 = arith.constant 0 : index
    %c33 = arith.constant 33 : index
    %68 = vector.load %arg1[%c0_33, %c0_34, %c33] : memref<1x24x290xf32, #tpu.memory_space<vmem>>, vector<1x24x256xf32>
    %69 = vector.shape_cast %68 : vector<1x24x256xf32> to vector<24x256xf32>
    %c168 = arith.constant 168 : index
    %c0_35 = arith.constant 0 : index
    %70 = vector.load %arg5[%c168, %c0_35] : memref<216x256xf32, #tpu.memory_space<vmem>>, vector<24x256xf32>
    tpu.vector_store %arg5[%c168, %c0_35], %69 {strides = array<i32>} : memref<216x256xf32, #tpu.memory_space<vmem>>, vector<24x256xf32>,
    %c0_36 = arith.constant 0 : index
    %c0_37 = arith.constant 0 : index
    %c34 = arith.constant 34 : index
    %71 = vector.load %arg1[%c0_36, %c0_37, %c34] : memref<1x24x290xf32, #tpu.memory_space<vmem>>, vector<1x24x256xf32>
    %72 = vector.shape_cast %71 : vector<1x24x256xf32> to vector<24x256xf32>
    %c15_i32_38 = arith.constant 15 : i32
    %73 = vector.broadcast %c15_i32_38 : i32 to vector<1x256xi32>
    %74 = arith.cmpi slt, %16, %73 : vector<1x256xi32>
    %cst_39 = arith.constant 0.000000e+00 : f32
    %75 = vector.shape_cast %74 : vector<1x256xi1> to vector<1x256xi1>
    %76 = vector.broadcast %75 : vector<1x256xi1> to vector<24x256xi1>
    %77 = vector.broadcast %cst_39 : f32 to vector<24x256xf32>
    %78 = arith.select %76, %72, %77 : vector<24x256xi1>, vector<24x256xf32>
    %c192 = arith.constant 192 : index
    %c0_40 = arith.constant 0 : index
    %79 = vector.load %arg5[%c192, %c0_40] : memref<216x256xf32, #tpu.memory_space<vmem>>, vector<24x256xf32>
    tpu.vector_store %arg5[%c192, %c0_40], %78 {strides = array<i32>} : memref<216x256xf32, #tpu.memory_space<vmem>>, vector<24x256xf32>,
    %c0_41 = arith.constant 0 : index
    %c0_42 = arith.constant 0 : index
    %80 = vector.load %arg2[%c0_41, %c0_42] : memref<16x216xf32, #tpu.memory_space<vmem>>, vector<16x216xf32>
    %c0_43 = arith.constant 0 : index
    %c0_44 = arith.constant 0 : index
    %81 = vector.load %arg5[%c0_43, %c0_44] : memref<216x256xf32, #tpu.memory_space<vmem>>, vector<216x256xf32>
    %cst_45 = arith.constant dense<0.000000e+00> : vector<16x256xf32>
    %82 = tpu.matmul %80, %81, %cst_45 {dimension_numbers = #tpu.dot_dimension_numbers<[1], [0], [0], [1], [0, 0, 1, 1], [], []>} : vector<16x216xf32>, vector<216x256xf32>, vector<16x256xf32> -> vector<16x256xf32>
    %c0_46 = arith.constant 0 : index
    %c0_47 = arith.constant 0 : index
    %83 = vector.load %arg3[%c0_46, %c0_47] : memref<16x1xf32, #tpu.memory_space<vmem>>, vector<16x1xf32>
    %84 = vector.broadcast %83 : vector<16x1xf32> to vector<16x256xf32>
    %85 = arith.addf %82, %84 : vector<16x256xf32>
    %c0_48 = arith.constant 0 : index
    %c0_49 = arith.constant 0 : index
    %c0_50 = arith.constant 0 : index
    %86 = vector.load %arg4[%c0_48, %c0_49, %c0_50] : memref<1x16x256xf32, #tpu.memory_space<vmem>>, vector<1x16x256xf32>
    %87 = vector.shape_cast %86 : vector<1x16x256xf32> to vector<16x256xf32>
    %88 = vector.shape_cast %85 : vector<16x256xf32> to vector<1x16x256xf32>
    tpu.vector_store %arg4[%c0_48, %c0_49, %c0_50], %88 {strides = array<i32>} : memref<1x16x256xf32, #tpu.memory_space<vmem>>, vector<1x16x256xf32>,
    return
  }
  func.func @transform_0(%arg0: i32) -> (i32, i32, i32) {
    %c0_i32 = arith.constant 0 : i32
    %c0_i32_0 = arith.constant 0 : i32
    %c0_i32_1 = arith.constant 0 : i32
    return %arg0, %c0_i32, %c0_i32_0 : i32, i32, i32
  }
  func.func @transform_1(%arg0: i32) -> (i32, i32) {
    %c0_i32 = arith.constant 0 : i32
    %c0_i32_0 = arith.constant 0 : i32
    %c0_i32_1 = arith.constant 0 : i32
    return %c0_i32, %c0_i32_0 : i32, i32
  }
  func.func @transform_2(%arg0: i32) -> (i32, i32) {
    %c0_i32 = arith.constant 0 : i32
    %c0_i32_0 = arith.constant 0 : i32
    %c0_i32_1 = arith.constant 0 : i32
    return %c0_i32, %c0_i32_0 : i32, i32
  }
  func.func @transform_3(%arg0: i32) -> (i32, i32, i32) {
    %c0_i32 = arith.constant 0 : i32
    %c0_i32_0 = arith.constant 0 : i32
    %c0_i32_1 = arith.constant 0 : i32
    return %arg0, %c0_i32, %c0_i32_0 : i32, i32, i32
  }
}

module attributes {stable_mosaic.version = 11 : i64} {
  func.func @_conv3x3_kernel(%arg0: i32, %arg1: memref<1x8x1090xf32, #tpu.memory_space<vmem>>, %arg2: memref<4x72xf32, #tpu.memory_space<vmem>>, %arg3: memref<4x1xf32, #tpu.memory_space<vmem>>, %arg4: memref<1x4x1024xf32, #tpu.memory_space<vmem>>, %arg5: memref<72x1024xf32, #tpu.memory_space<vmem>>) attributes {dimension_semantics = [#tpu.dimension_semantics<parallel>], iteration_bounds = array<i64: 2>, scalar_prefetch = 0 : i64, scratch_operands = 1 : i64, tpu.core_type = #tpu.core_type<tc>, window_params = [{transform_indices = @transform_0, window_bounds = array<i64: 1, 8, 1090>}, {pipeline_mode = #tpu.pipeline_mode<synchronous>, transform_indices = @transform_1, window_bounds = array<i64: 4, 72>}, {pipeline_mode = #tpu.pipeline_mode<synchronous>, transform_indices = @transform_2, window_bounds = array<i64: 4, 1>}, {transform_indices = @transform_3, window_bounds = array<i64: 1, 4, 1024>}]} {
    %0 = tpu.iota {dimensions = array<i32: 1>} : vector<1x1024xi32>
    %c32_i32 = arith.constant 32 : i32
    %c0_i32 = arith.constant 0 : i32
    %1 = arith.cmpi eq, %c32_i32, %c0_i32 : i32
    %c1_i32 = arith.constant 1 : i32
    %2 = arith.select %1, %c1_i32, %c32_i32 : i32
    %3 = vector.broadcast %2 : i32 to vector<1x1024xi32>
    %4 = arith.remsi %0, %3 : vector<1x1024xi32>
    %c0_i32_0 = arith.constant 0 : i32
    %5 = vector.broadcast %c0_i32_0 : i32 to vector<1x1024xi32>
    %6 = arith.cmpi ne, %4, %5 : vector<1x1024xi32>
    %c0_i32_1 = arith.constant 0 : i32
    %7 = vector.broadcast %c0_i32_1 : i32 to vector<1x1024xi32>
    %8 = arith.cmpi slt, %4, %7 : vector<1x1024xi32>
    %c0_i32_2 = arith.constant 0 : i32
    %9 = arith.cmpi slt, %2, %c0_i32_2 : i32
    %10 = vector.broadcast %9 : i1 to vector<1x1024xi1>
    %11 = vector.broadcast %10 : vector<1x1024xi1> to vector<1x1024xi1>
    %12 = arith.xori %8, %11 : vector<1x1024xi1>
    %13 = arith.andi %12, %6 : vector<1x1024xi1>
    %14 = vector.broadcast %2 : i32 to vector<1x1024xi32>
    %15 = arith.addi %4, %14 : vector<1x1024xi32>
    %16 = arith.select %13, %15, %4 : vector<1x1024xi1>, vector<1x1024xi32>
    %c0 = arith.constant 0 : index
    %c0_3 = arith.constant 0 : index
    %c0_4 = arith.constant 0 : index
    %17 = vector.load %arg1[%c0, %c0_3, %c0_4] : memref<1x8x1090xf32, #tpu.memory_space<vmem>>, vector<1x8x1024xf32>
    %18 = vector.shape_cast %17 : vector<1x8x1024xf32> to vector<8x1024xf32>
    %c1_i32_5 = arith.constant 1 : i32
    %19 = vector.broadcast %c1_i32_5 : i32 to vector<1x1024xi32>
    %20 = arith.cmpi sge, %16, %19 : vector<1x1024xi32>
    %cst = arith.constant 0.000000e+00 : f32
    %21 = vector.shape_cast %20 : vector<1x1024xi1> to vector<1x1024xi1>
    %22 = vector.broadcast %21 : vector<1x1024xi1> to vector<8x1024xi1>
    %23 = vector.broadcast %cst : f32 to vector<8x1024xf32>
    %24 = arith.select %22, %18, %23 : vector<8x1024xi1>, vector<8x1024xf32>
    %c0_6 = arith.constant 0 : index
    %c0_7 = arith.constant 0 : index
    %25 = vector.load %arg5[%c0_6, %c0_7] : memref<72x1024xf32, #tpu.memory_space<vmem>>, vector<8x1024xf32>
    tpu.vector_store %arg5[%c0_6, %c0_7], %24 {strides = array<i32>} : memref<72x1024xf32, #tpu.memory_space<vmem>>, vector<8x1024xf32>,
    %c0_8 = arith.constant 0 : index
    %c0_9 = arith.constant 0 : index
    %c1 = arith.constant 1 : index
    %26 = vector.load %arg1[%c0_8, %c0_9, %c1] : memref<1x8x1090xf32, #tpu.memory_space<vmem>>, vector<1x8x1024xf32>
    %27 = vector.shape_cast %26 : vector<1x8x1024xf32> to vector<8x1024xf32>
    %c8 = arith.constant 8 : index
    %c0_10 = arith.constant 0 : index
    %28 = vector.load %arg5[%c8, %c0_10] : memref<72x1024xf32, #tpu.memory_space<vmem>>, vector<8x1024xf32>
    tpu.vector_store %arg5[%c8, %c0_10], %27 {strides = array<i32>} : memref<72x1024xf32, #tpu.memory_space<vmem>>, vector<8x1024xf32>,
    %c0_11 = arith.constant 0 : index
    %c0_12 = arith.constant 0 : index
    %c2 = arith.constant 2 : index
    %29 = vector.load %arg1[%c0_11, %c0_12, %c2] : memref<1x8x1090xf32, #tpu.memory_space<vmem>>, vector<1x8x1024xf32>
    %30 = vector.shape_cast %29 : vector<1x8x1024xf32> to vector<8x1024xf32>
    %c31_i32 = arith.constant 31 : i32
    %31 = vector.broadcast %c31_i32 : i32 to vector<1x1024xi32>
    %32 = arith.cmpi slt, %16, %31 : vector<1x1024xi32>
    %cst_13 = arith.constant 0.000000e+00 : f32
    %33 = vector.shape_cast %32 : vector<1x1024xi1> to vector<1x1024xi1>
    %34 = vector.broadcast %33 : vector<1x1024xi1> to vector<8x1024xi1>
    %35 = vector.broadcast %cst_13 : f32 to vector<8x1024xf32>
    %36 = arith.select %34, %30, %35 : vector<8x1024xi1>, vector<8x1024xf32>
    %c16 = arith.constant 16 : index
    %c0_14 = arith.constant 0 : index
    %37 = vector.load %arg5[%c16, %c0_14] : memref<72x1024xf32, #tpu.memory_space<vmem>>, vector<8x1024xf32>
    tpu.vector_store %arg5[%c16, %c0_14], %36 {strides = array<i32>} : memref<72x1024xf32, #tpu.memory_space<vmem>>, vector<8x1024xf32>,
    %c0_15 = arith.constant 0 : index
    %c0_16 = arith.constant 0 : index
    %c32 = arith.constant 32 : index
    %38 = vector.load %arg1[%c0_15, %c0_16, %c32] : memref<1x8x1090xf32, #tpu.memory_space<vmem>>, vector<1x8x1024xf32>
    %39 = vector.shape_cast %38 : vector<1x8x1024xf32> to vector<8x1024xf32>
    %c1_i32_17 = arith.constant 1 : i32
    %40 = vector.broadcast %c1_i32_17 : i32 to vector<1x1024xi32>
    %41 = arith.cmpi sge, %16, %40 : vector<1x1024xi32>
    %cst_18 = arith.constant 0.000000e+00 : f32
    %42 = vector.shape_cast %41 : vector<1x1024xi1> to vector<1x1024xi1>
    %43 = vector.broadcast %42 : vector<1x1024xi1> to vector<8x1024xi1>
    %44 = vector.broadcast %cst_18 : f32 to vector<8x1024xf32>
    %45 = arith.select %43, %39, %44 : vector<8x1024xi1>, vector<8x1024xf32>
    %c24 = arith.constant 24 : index
    %c0_19 = arith.constant 0 : index
    %46 = vector.load %arg5[%c24, %c0_19] : memref<72x1024xf32, #tpu.memory_space<vmem>>, vector<8x1024xf32>
    tpu.vector_store %arg5[%c24, %c0_19], %45 {strides = array<i32>} : memref<72x1024xf32, #tpu.memory_space<vmem>>, vector<8x1024xf32>,
    %c0_20 = arith.constant 0 : index
    %c0_21 = arith.constant 0 : index
    %c33 = arith.constant 33 : index
    %47 = vector.load %arg1[%c0_20, %c0_21, %c33] : memref<1x8x1090xf32, #tpu.memory_space<vmem>>, vector<1x8x1024xf32>
    %48 = vector.shape_cast %47 : vector<1x8x1024xf32> to vector<8x1024xf32>
    %c32_22 = arith.constant 32 : index
    %c0_23 = arith.constant 0 : index
    %49 = vector.load %arg5[%c32_22, %c0_23] : memref<72x1024xf32, #tpu.memory_space<vmem>>, vector<8x1024xf32>
    tpu.vector_store %arg5[%c32_22, %c0_23], %48 {strides = array<i32>} : memref<72x1024xf32, #tpu.memory_space<vmem>>, vector<8x1024xf32>,
    %c0_24 = arith.constant 0 : index
    %c0_25 = arith.constant 0 : index
    %c34 = arith.constant 34 : index
    %50 = vector.load %arg1[%c0_24, %c0_25, %c34] : memref<1x8x1090xf32, #tpu.memory_space<vmem>>, vector<1x8x1024xf32>
    %51 = vector.shape_cast %50 : vector<1x8x1024xf32> to vector<8x1024xf32>
    %c31_i32_26 = arith.constant 31 : i32
    %52 = vector.broadcast %c31_i32_26 : i32 to vector<1x1024xi32>
    %53 = arith.cmpi slt, %16, %52 : vector<1x1024xi32>
    %cst_27 = arith.constant 0.000000e+00 : f32
    %54 = vector.shape_cast %53 : vector<1x1024xi1> to vector<1x1024xi1>
    %55 = vector.broadcast %54 : vector<1x1024xi1> to vector<8x1024xi1>
    %56 = vector.broadcast %cst_27 : f32 to vector<8x1024xf32>
    %57 = arith.select %55, %51, %56 : vector<8x1024xi1>, vector<8x1024xf32>
    %c40 = arith.constant 40 : index
    %c0_28 = arith.constant 0 : index
    %58 = vector.load %arg5[%c40, %c0_28] : memref<72x1024xf32, #tpu.memory_space<vmem>>, vector<8x1024xf32>
    tpu.vector_store %arg5[%c40, %c0_28], %57 {strides = array<i32>} : memref<72x1024xf32, #tpu.memory_space<vmem>>, vector<8x1024xf32>,
    %c0_29 = arith.constant 0 : index
    %c0_30 = arith.constant 0 : index
    %c64 = arith.constant 64 : index
    %59 = vector.load %arg1[%c0_29, %c0_30, %c64] : memref<1x8x1090xf32, #tpu.memory_space<vmem>>, vector<1x8x1024xf32>
    %60 = vector.shape_cast %59 : vector<1x8x1024xf32> to vector<8x1024xf32>
    %c1_i32_31 = arith.constant 1 : i32
    %61 = vector.broadcast %c1_i32_31 : i32 to vector<1x1024xi32>
    %62 = arith.cmpi sge, %16, %61 : vector<1x1024xi32>
    %cst_32 = arith.constant 0.000000e+00 : f32
    %63 = vector.shape_cast %62 : vector<1x1024xi1> to vector<1x1024xi1>
    %64 = vector.broadcast %63 : vector<1x1024xi1> to vector<8x1024xi1>
    %65 = vector.broadcast %cst_32 : f32 to vector<8x1024xf32>
    %66 = arith.select %64, %60, %65 : vector<8x1024xi1>, vector<8x1024xf32>
    %c48 = arith.constant 48 : index
    %c0_33 = arith.constant 0 : index
    %67 = vector.load %arg5[%c48, %c0_33] : memref<72x1024xf32, #tpu.memory_space<vmem>>, vector<8x1024xf32>
    tpu.vector_store %arg5[%c48, %c0_33], %66 {strides = array<i32>} : memref<72x1024xf32, #tpu.memory_space<vmem>>, vector<8x1024xf32>,
    %c0_34 = arith.constant 0 : index
    %c0_35 = arith.constant 0 : index
    %c65 = arith.constant 65 : index
    %68 = vector.load %arg1[%c0_34, %c0_35, %c65] : memref<1x8x1090xf32, #tpu.memory_space<vmem>>, vector<1x8x1024xf32>
    %69 = vector.shape_cast %68 : vector<1x8x1024xf32> to vector<8x1024xf32>
    %c56 = arith.constant 56 : index
    %c0_36 = arith.constant 0 : index
    %70 = vector.load %arg5[%c56, %c0_36] : memref<72x1024xf32, #tpu.memory_space<vmem>>, vector<8x1024xf32>
    tpu.vector_store %arg5[%c56, %c0_36], %69 {strides = array<i32>} : memref<72x1024xf32, #tpu.memory_space<vmem>>, vector<8x1024xf32>,
    %c0_37 = arith.constant 0 : index
    %c0_38 = arith.constant 0 : index
    %c66 = arith.constant 66 : index
    %71 = vector.load %arg1[%c0_37, %c0_38, %c66] : memref<1x8x1090xf32, #tpu.memory_space<vmem>>, vector<1x8x1024xf32>
    %72 = vector.shape_cast %71 : vector<1x8x1024xf32> to vector<8x1024xf32>
    %c31_i32_39 = arith.constant 31 : i32
    %73 = vector.broadcast %c31_i32_39 : i32 to vector<1x1024xi32>
    %74 = arith.cmpi slt, %16, %73 : vector<1x1024xi32>
    %cst_40 = arith.constant 0.000000e+00 : f32
    %75 = vector.shape_cast %74 : vector<1x1024xi1> to vector<1x1024xi1>
    %76 = vector.broadcast %75 : vector<1x1024xi1> to vector<8x1024xi1>
    %77 = vector.broadcast %cst_40 : f32 to vector<8x1024xf32>
    %78 = arith.select %76, %72, %77 : vector<8x1024xi1>, vector<8x1024xf32>
    %c64_41 = arith.constant 64 : index
    %c0_42 = arith.constant 0 : index
    %79 = vector.load %arg5[%c64_41, %c0_42] : memref<72x1024xf32, #tpu.memory_space<vmem>>, vector<8x1024xf32>
    tpu.vector_store %arg5[%c64_41, %c0_42], %78 {strides = array<i32>} : memref<72x1024xf32, #tpu.memory_space<vmem>>, vector<8x1024xf32>,
    %c0_43 = arith.constant 0 : index
    %c0_44 = arith.constant 0 : index
    %80 = vector.load %arg2[%c0_43, %c0_44] : memref<4x72xf32, #tpu.memory_space<vmem>>, vector<4x72xf32>
    %c0_45 = arith.constant 0 : index
    %c0_46 = arith.constant 0 : index
    %81 = vector.load %arg5[%c0_45, %c0_46] : memref<72x1024xf32, #tpu.memory_space<vmem>>, vector<72x1024xf32>
    %cst_47 = arith.constant dense<0.000000e+00> : vector<4x1024xf32>
    %82 = tpu.matmul %80, %81, %cst_47 {dimension_numbers = #tpu.dot_dimension_numbers<[1], [0], [0], [1], [0, 0, 1, 1], [], []>} : vector<4x72xf32>, vector<72x1024xf32>, vector<4x1024xf32> -> vector<4x1024xf32>
    %c0_48 = arith.constant 0 : index
    %c0_49 = arith.constant 0 : index
    %83 = vector.load %arg3[%c0_48, %c0_49] : memref<4x1xf32, #tpu.memory_space<vmem>>, vector<4x1xf32>
    %84 = vector.broadcast %83 : vector<4x1xf32> to vector<4x1024xf32>
    %85 = arith.addf %82, %84 : vector<4x1024xf32>
    %86 = math.tanh %85 : vector<4x1024xf32>
    %c0_50 = arith.constant 0 : index
    %c0_51 = arith.constant 0 : index
    %c0_52 = arith.constant 0 : index
    %87 = vector.load %arg4[%c0_50, %c0_51, %c0_52] : memref<1x4x1024xf32, #tpu.memory_space<vmem>>, vector<1x4x1024xf32>
    %88 = vector.shape_cast %87 : vector<1x4x1024xf32> to vector<4x1024xf32>
    %89 = vector.shape_cast %86 : vector<4x1024xf32> to vector<1x4x1024xf32>
    tpu.vector_store %arg4[%c0_50, %c0_51, %c0_52], %89 {strides = array<i32>} : memref<1x4x1024xf32, #tpu.memory_space<vmem>>, vector<1x4x1024xf32>,
    return
  }
  func.func @transform_0(%arg0: i32) -> (i32, i32, i32) {
    %c0_i32 = arith.constant 0 : i32
    %c0_i32_0 = arith.constant 0 : i32
    %c0_i32_1 = arith.constant 0 : i32
    return %arg0, %c0_i32, %c0_i32_0 : i32, i32, i32
  }
  func.func @transform_1(%arg0: i32) -> (i32, i32) {
    %c0_i32 = arith.constant 0 : i32
    %c0_i32_0 = arith.constant 0 : i32
    %c0_i32_1 = arith.constant 0 : i32
    return %c0_i32, %c0_i32_0 : i32, i32
  }
  func.func @transform_2(%arg0: i32) -> (i32, i32) {
    %c0_i32 = arith.constant 0 : i32
    %c0_i32_0 = arith.constant 0 : i32
    %c0_i32_1 = arith.constant 0 : i32
    return %c0_i32, %c0_i32_0 : i32, i32
  }
  func.func @transform_3(%arg0: i32) -> (i32, i32, i32) {
    %c0_i32 = arith.constant 0 : i32
    %c0_i32_0 = arith.constant 0 : i32
    %c0_i32_1 = arith.constant 0 : i32
    return %arg0, %c0_i32, %c0_i32_0 : i32, i32, i32
  }
}

</mosaic_0001>

<llo_original>
// kernel: fresup_forward.4
$region0: #{fresup_forward.4}
  #allocation0 [shape = 'u32[]', space=smem, size = 0x4, offset = 0x4, fixed_abs, tag = 'smem constant byte address 0x4 - core index']
  #allocation1 [shape = 'u32[72,128]{1,0:T(1,128)}', space=vmem, size = 0x9000, scoped, tag = 'internal scratch']
  %s0 = inlined_call_operand.vmem [shape: f32[2,8,256], index: 0, kind: input, shape index: {}]
  %s1 = inlined_call_operand.vmem [shape: f32[8,8], index: 1, kind: input, shape index: {}]
  %s2 = inlined_call_operand.vmem [shape: f32[4,8], index: 2, kind: input, shape index: {}]
  %s3 = inlined_call_operand.vmem [shape: f32[4,8], index: 3, kind: input, shape index: {}]
  %s4 = inlined_call_operand.vmem [shape: f32[1,256], index: 4, kind: input, shape index: {}]
  %s5 = inlined_call_operand.vmem [shape: f32[2,4,256], index: 5, kind: output, shape index: {0}]
  %s6 = inlined_call_operand.vmem [shape: f32[2,4,256], index: 6, kind: output, shape index: {1}]
  %7 = xla_tuple %s5, %s6
  %s8 = sld [smem:[#allocation0]]
  $region61: #{fresup_forward.4} parent=0
    _
  %s10 = ssub.s32 1, %s8
  %s11 = scalar_select 0, %s10, %s8
  loop: start=0, step=1, limit=4
  $region2: #{fresup_forward.4} parent=0 // loop_pre_header
    _
  $region3: #{fresup_forward.4} parent=0 // loop_header
    %s13 = sphi 0, %s17
    %p14 = scmp.ge.s32.totalorder %s13, 4
    %s20 = sphi 0, %s32
    %s21 = sphi 0, %s28
    %s22 = sphi 0, %s20
    %s23 = sphi 0, %s21
    %s24 = sphi 0, %s22
    %s25 = sphi 0, %s23
    %s37 = sphi 0, %s39
    %s40 = sphi 0, %s37
    %s41 = sphi 0, %s40
    %s57 = sphi 0, %s41
    %s61 = sphi 0, %s61
    %s63 = sphi 0, %s61
    %s64 = sphi 0, %s63
    %s78 = sphi 0, %s64
    %s82 = sphi 0, %s82
    %s84 = sphi 0, %s82
    %s85 = sphi 0, %s84
    %s99 = sphi 0, %s85
    %s103 = sphi 0, %s103
    %s105 = sphi 0, %s103
    %s106 = sphi 0, %s105
    %s120 = sphi 0, %s106
    %s126 = sphi 0, %s128
    %s129 = sphi 0, %s126
    %s130 = sphi 0, %s129
    %s146 = sphi 0, %s130
    %s154 = sphi 0, %s156
    %s157 = sphi 0, %s154
    %s158 = sphi 0, %s157
    %s174 = sphi 0, %s158
    %s182 = sphi 0, %s184
    %s185 = sphi 0, %s182
    %s186 = sphi 0, %s185
    %s202 = sphi 0, %s186
  $region4: #{fresup_forward.4} parent=0 // loop_header_branch
    %16 = sbr.rel (%p14) target = $region8
  $region5: #{fresup_forward.4} parent=0 // loop_body
    %s18 = ssub.s32 %s13, 1
    %s19 = ssub.s32 %s13, 2
    %s26 = sadd.s32 1, %s21
    %p27 = scmp.ge.s32.totalorder %s26, 1
    %s28 = scalar_select %p27, 0, %s26
    %s29 = sadd.s32 1, %s20
    %s30 = scalar_select %p27, %s29, %s20
    %p31 = scmp.ge.s32.totalorder %s30, 2
    %s32 = scalar_select %p31, 0, %s30
    %s33 = ssub.s32 %s20, %s32
    %s34 = ssub.s32 %s21, %s28
    %s35 = sor.u32 %s33, %s34
    %p36 = scmp.eq.s32.totalorder %s35, 0
    %s38 = sadd.s32 %s37, 1
    %s39 = scalar_select %p36, %s37, %s38
    %p42 = pneg %p36
    %p43 = scmp.eq.s32.totalorder %s13, 1
    %p44 = por %p42, %p43
    %p45 = scmp.ne.s32.totalorder %s37, %s40
    %p46 = scmp.eq.s32.totalorder %s13, 0
    %p47 = por %p45, %p46
    %p48 = scmp.ne.s32.totalorder %s37, %s40
    %p49 = scmp.eq.s32.totalorder %s18, 1
    %p50 = por %p48, %p49
    %p51 = scmp.ne.s32.totalorder %s40, %s41
    %p52 = scmp.eq.s32.totalorder %s18, 0
    %p53 = por %p51, %p52
    %p54 = scmp.ne.s32.totalorder %s40, %s41
    %p55 = scmp.eq.s32.totalorder %s19, 1
    %p56 = por %p54, %p55
    %p58 = scmp.ne.s32.totalorder %s41, %s57
    %p59 = scmp.eq.s32.totalorder %s19, 0
    %p60 = por %p58, %p59
    %s62 = sadd.s32 %s61, 1
    %p65 = scmp.eq.s32.totalorder %s13, 1
    %p66 = scmp.ne.s32.totalorder %s61, %s63
    %p67 = scmp.eq.s32.totalorder %s13, 0
    %p68 = por %p66, %p67
    %p69 = scmp.ne.s32.totalorder %s61, %s63
    %p70 = scmp.eq.s32.totalorder %s18, 1
    %p71 = por %p69, %p70
    %p72 = scmp.ne.s32.totalorder %s63, %s64
    %p73 = scmp.eq.s32.totalorder %s18, 0
    %p74 = por %p72, %p73
    %p75 = scmp.ne.s32.totalorder %s63, %s64
    %p76 = scmp.eq.s32.totalorder %s19, 1
    %p77 = por %p75, %p76
    %p79 = scmp.ne.s32.totalorder %s64, %s78
    %p80 = scmp.eq.s32.totalorder %s19, 0
    %p81 = por %p79, %p80
    %s83 = sadd.s32 %s82, 1
    %p86 = scmp.eq.s32.totalorder %s13, 1
    %p87 = scmp.ne.s32.totalorder %s82, %s84
    %p88 = scmp.eq.s32.totalorder %s13, 0
    %p89 = por %p87, %p88
    %p90 = scmp.ne.s32.totalorder %s82, %s84
    %p91 = scmp.eq.s32.totalorder %s18, 1
    %p92 = por %p90, %p91
    %p93 = scmp.ne.s32.totalorder %s84, %s85
    %p94 = scmp.eq.s32.totalorder %s18, 0
    %p95 = por %p93, %p94
    %p96 = scmp.ne.s32.totalorder %s84, %s85
    %p97 = scmp.eq.s32.totalorder %s19, 1
    %p98 = por %p96, %p97
    %p100 = scmp.ne.s32.totalorder %s85, %s99
    %p101 = scmp.eq.s32.totalorder %s19, 0
    %p102 = por %p100, %p101
    %s104 = sadd.s32 %s103, 1
    %p107 = scmp.eq.s32.totalorder %s13, 1
    %p108 = scmp.ne.s32.totalorder %s103, %s105
    %p109 = scmp.eq.s32.totalorder %s13, 0
    %p110 = por %p108, %p109
    %p111 = scmp.ne.s32.totalorder %s103, %s105
    %p112 = scmp.eq.s32.totalorder %s18, 1
    %p113 = por %p111, %p112
    %p114 = scmp.ne.s32.totalorder %s105, %s106
    %p115 = scmp.eq.s32.totalorder %s18, 0
    %p116 = por %p114, %p115
    %p117 = scmp.ne.s32.totalorder %s105, %s106
    %p118 = scmp.eq.s32.totalorder %s19, 1
    %p119 = por %p117, %p118
    %p121 = scmp.ne.s32.totalorder %s106, %s120
    %p122 = scmp.eq.s32.totalorder %s19, 0
    %p123 = por %p121, %p122
    %s124 = ssub.s32 %s21, %s28
    %p125 = scmp.eq.s32.totalorder %s124, 0
    %s127 = sadd.s32 %s126, 1
    %s128 = scalar_select %p125, %s126, %s127
    %p131 = pneg %p125
    %p132 = scmp.eq.s32.totalorder %s13, 1
    %p133 = por %p131, %p132
    %p134 = scmp.ne.s32.totalorder %s126, %s129
    %p135 = scmp.eq.s32.totalorder %s13, 0
    %p136 = por %p134, %p135
    %p137 = scmp.ne.s32.totalorder %s126, %s129
    %p138 = scmp.eq.s32.totalorder %s18, 1
    %p139 = por %p137, %p138
    %p140 = scmp.ne.s32.totalorder %s129, %s130
    %p141 = scmp.eq.s32.totalorder %s18, 0
    %p142 = por %p140, %p141
    %p143 = scmp.ne.s32.totalorder %s129, %s130
    %p144 = scmp.eq.s32.totalorder %s19, 1
    %p145 = por %p143, %p144
    %p147 = scmp.ne.s32.totalorder %s130, %s146
    %p148 = scmp.eq.s32.totalorder %s19, 0
    %p149 = por %p147, %p148
    %s150 = ssub.s32 %s20, %s32
    %s151 = ssub.s32 %s21, %s28
    %s152 = sor.u32 %s150, %s151
    %p153 = scmp.eq.s32.totalorder %s152, 0
    %s155 = sadd.s32 %s154, 1
    %s156 = scalar_select %p153, %s154, %s155
    %p159 = pneg %p153
    %p160 = scmp.eq.s32.totalorder %s13, 1
    %p161 = por %p159, %p160
    %p162 = scmp.ne.s32.totalorder %s154, %s157
    %p163 = scmp.eq.s32.totalorder %s13, 0
    %p164 = por %p162, %p163
    %p165 = scmp.ne.s32.totalorder %s154, %s157
    %p166 = scmp.eq.s32.totalorder %s18, 1
    %p167 = por %p165, %p166
    %p168 = scmp.ne.s32.totalorder %s157, %s158
    %p169 = scmp.eq.s32.totalorder %s18, 0
    %p170 = por %p168, %p169
    %p171 = scmp.ne.s32.totalorder %s157, %s158
    %p172 = scmp.eq.s32.totalorder %s19, 1
    %p173 = por %p171, %p172
    %p175 = scmp.ne.s32.totalorder %s158, %s174
    %p176 = scmp.eq.s32.totalorder %s19, 0
    %p177 = por %p175, %p176
    %s178 = ssub.s32 %s20, %s32
    %s179 = ssub.s32 %s21, %s28
    %s180 = sor.u32 %s178, %s179
    %p181 = scmp.eq.s32.totalorder %s180, 0
    %s183 = sadd.s32 %s182, 1
    %s184 = scalar_select %p181, %s182, %s183
    %p187 = pneg %p181
    %p188 = scmp.eq.s32.totalorder %s13, 1
    %p189 = por %p187, %p188
    %p190 = scmp.ne.s32.totalorder %s182, %s185
    %p191 = scmp.eq.s32.totalorder %s13, 0
    %p192 = por %p190, %p191
    %p193 = scmp.ne.s32.totalorder %s182, %s185
    %p194 = scmp.eq.s32.totalorder %s18, 1
    %p195 = por %p193, %p194
    %p196 = scmp.ne.s32.totalorder %s185, %s186
    %p197 = scmp.eq.s32.totalorder %s18, 0
    %p198 = por %p196, %p197
    %p199 = scmp.ne.s32.totalorder %s185, %s186
    %p200 = scmp.eq.s32.totalorder %s19, 1
    %p201 = por %p199, %p200
    %p203 = scmp.ne.s32.totalorder %s186, %s202
    %p204 = scmp.eq.s32.totalorder %s19, 0
    %p205 = por %p203, %p204
    %p206 = scmp.le.s32.totalorder 1, %s13
    %p207 = scmp.lt.s32.totalorder %s13, 3
    %p208 = pnand %p206, %p207
    %p209 = pneg %p208
    // Predicated region
    $region9: #{fresup_forward.4} parent=5 // pred_check
      _
    $region10: #{fresup_forward.4} parent=5 // pred_check_branch
      %211 = sbr.rel (%p208) target = $region12
    $region11: #{fresup_forward.4} parent=5 // pred_region
      %s212 = ssub.s32 %s13, 1
      // Predicated region
      $region13: #{fresup_forward.4} parent=11 // pred_check
        %p213 = pneg %p74
      $region14: #{fresup_forward.4} parent=11 // pred_check_branch
        %215 = sbr.rel (%p213) target = $region16
      $region15: #{fresup_forward.4} parent=11 // pred_region
        _
      $region16: #{fresup_forward.4} parent=11 // pred_fallthru
        _
      // Predicated region
      $region17: #{fresup_forward.4} parent=11 // pred_check
        %p216 = pneg %p95
      $region18: #{fresup_forward.4} parent=11 // pred_check_branch
        %218 = sbr.rel (%p216) target = $region20
      $region19: #{fresup_forward.4} parent=11 // pred_region
        _
      $region20: #{fresup_forward.4} parent=11 // pred_fallthru
        _
      // Predicated region
      $region21: #{fresup_forward.4} parent=11 // pred_check
        %p219 = pneg %p116
      $region22: #{fresup_forward.4} parent=11 // pred_check_branch
        %221 = sbr.rel (%p219) target = $region24
      $region23: #{fresup_forward.4} parent=11 // pred_region
        _
      $region24: #{fresup_forward.4} parent=11 // pred_fallthru
        _
      // Predicated region
      $region25: #{fresup_forward.4} parent=11 // pred_check
        %p222 = pneg %p142
      $region26: #{fresup_forward.4} parent=11 // pred_check_branch
        %224 = sbr.rel (%p222) target = $region28
      $region27: #{fresup_forward.4} parent=11 // pred_region
        %s225 = smul.u32 2, %s23
        %p226 = scmp.lt.s32.totalorder %s225, 1
        %s227 = scalar_select %p226, %s225, 1
        %s228 = scalar_lea.vmem %s4, %s227
        %s229 = smul.u32 2, %s23
      $region28: #{fresup_forward.4} parent=11 // pred_fallthru
        _
    $region12: #{fresup_forward.4} parent=5 // pred_fallthru
      _
    %p230 = scmp.lt.s32.totalorder %s13, 2
    // Predicated region
    $region29: #{fresup_forward.4} parent=5 // pred_check
      %p231 = pneg %p230
    $region30: #{fresup_forward.4} parent=5 // pred_check_branch
      %233 = sbr.rel (%p231) target = $region32
    $region31: #{fresup_forward.4} parent=5 // pred_region
      // Predicated region
      $region33: #{fresup_forward.4} parent=31 // pred_check
        %p234 = pneg %p47
      $region34: #{fresup_forward.4} parent=31 // pred_check_branch
        %236 = sbr.rel (%p234) target = $region36
      $region35: #{fresup_forward.4} parent=31 // pred_region
        %s237 = smul.u32 2, %s21
        %p238 = scmp.lt.s32.totalorder %s20, 1
        %s239 = scalar_select %p238, %s20, 1
        %p240 = scmp.lt.s32.totalorder %s237, 1
        %s241 = scalar_select %p240, %s237, 1
        %s242 = smul.addr %s239, 2
        %s243 = sadd.s32 %s241, %s242
        %s244 = smul.addr %s243, 8
        %s245 = scalar_lea.vmem %s0, %s244
        %s246 = smul.u32 2, %s21
      $region36: #{fresup_forward.4} parent=31 // pred_fallthru
        _
    $region32: #{fresup_forward.4} parent=5 // pred_fallthru
      _
    %p247 = scmp.le.s32.totalorder 1, %s13
    %p248 = scmp.lt.s32.totalorder %s13, 3
    %p249 = pnand %p247, %p248
    %p250 = pneg %p249
    // Predicated region
    $region37: #{fresup_forward.4} parent=5 // pred_check
      _
    $region38: #{fresup_forward.4} parent=5 // pred_check_branch
      %252 = sbr.rel (%p249) target = $region40
    $region39: #{fresup_forward.4} parent=5 // pred_region
      %s253 = ssub.s32 %s13, 1
      %s254 = smul.u32 2, %s23
      %p255 = scmp.lt.s32.totalorder %s22, 1
      %s256 = scalar_select %p255, %s22, 1
      %p257 = scmp.lt.s32.totalorder %s254, 1
      %s258 = scalar_select %p257, %s254, 1
      %s259 = smul.addr %s256, 2
      %s260 = sadd.s32 %s258, %s259
      %s261 = smul.addr %s260, 8
      %s262 = scalar_lea.vmem %s0, %s261
      %p263 = pneg %p53
      %p264 = pneg %p50
      %p265 = pneg %p74
      %p266 = pneg %p71
      %p267 = pneg %p95
      %p268 = pneg %p92
      %p269 = pneg %p116
      %p270 = pneg %p113
      %s271 = smul.u32 2, %s23
      %p272 = scmp.lt.s32.totalorder %s271, 1
      %s273 = scalar_select %p272, %s271, 1
      %s274 = scalar_lea.vmem %s4, %s273
      %p275 = pneg %p142
      %p276 = pneg %p139
      %p277 = pneg %p170
      %p278 = pneg %p167
      %s279 = smul.u32 2, %s23
      %p280 = scmp.lt.s32.totalorder %s22, 1
      %s281 = scalar_select %p280, %s22, 1
      %p282 = scmp.lt.s32.totalorder %s279, 1
      %s283 = scalar_select %p282, %s279, 1
      %s284 = smul.addr %s281, 2
      %s285 = sadd.s32 %s283, %s284
      %s286 = smul.addr %s285, 4
      %s287 = scalar_lea.vmem %s5, %s286
      %p288 = pneg %p198
      %p289 = pneg %p195
      %s290 = smul.u32 2, %s23
      %p291 = scmp.lt.s32.totalorder %s22, 1
      %s292 = scalar_select %p291, %s22, 1
      %p293 = scmp.lt.s32.totalorder %s290, 1
      %s294 = scalar_select %p293, %s290, 1
      %s295 = smul.addr %s292, 2
      %s296 = sadd.s32 %s294, %s295
      %s297 = smul.addr %s296, 4
      %s298 = scalar_lea.vmem %s6, %s297
      %s299 = smul.u32 2, %s23
      %p300 = scmp.lt.s32.totalorder %s22, 1
      %s301 = scalar_select %p300, %s22, 1
      %p302 = scmp.lt.s32.totalorder %s299, 1
      %s303 = scalar_select %p302, %s299, 1
      %s304 = smul.addr %s301, 2
      %s305 = sadd.s32 %s303, %s304
      %s306 = smul.addr %s305, 8
      %s307 = scalar_lea.vmem %s0, %s306
      %s308 = smul.u32 2, %s23
      %s309 = smul.u32 2, %s23
      %p310 = scmp.lt.s32.totalorder %s309, 1
      %s311 = scalar_select %p310, %s309, 1
      %s312 = scalar_lea.vmem %s4, %s311
      %s313 = smul.u32 2, %s23
      %s314 = smul.u32 2, %s23
      %p315 = scmp.lt.s32.totalorder %s22, 1
      %s316 = scalar_select %p315, %s22, 1
      %p317 = scmp.lt.s32.totalorder %s314, 1
      %s318 = scalar_select %p317, %s314, 1
      %s319 = smul.addr %s316, 2
      %s320 = sadd.s32 %s318, %s319
      %s321 = smul.addr %s320, 4
      %s322 = scalar_lea.vmem %s5, %s321
      %s323 = smul.u32 2, %s23
      %s324 = smul.u32 2, %s23
      %p325 = scmp.lt.s32.totalorder %s22, 1
      %s326 = scalar_select %p325, %s22, 1
      %p327 = scmp.lt.s32.totalorder %s324, 1
      %s328 = scalar_select %p327, %s324, 1
      %s329 = smul.addr %s326, 2
      %s330 = sadd.s32 %s328, %s329
      %s331 = smul.addr %s330, 4
      %s332 = scalar_lea.vmem %s6, %s331
      %s333 = smul.u32 2, %s23
      %v334 = vld [vmem:[%s312] sm:$0x3]
      %v335 = vld [vmem:[%s1] sm:$0xff]
      %v336 = vld [vmem:[%s307] sm:$0xff]
      %v337 = vld [vmem:[%s307 + $0x8] sm:$0xff]
      %vm338 = vcmask 64512
      %v340 = vsel %vm338, %v335, 0
      %342 = vmatpush.msra.mxu0 0.0
      %343 = vmatpush.msra.mxu0 0.0
      %344 = vmatpush.msra.mxu0 0.0
      %345 = vmatpush.msra.mxu0 0.0
      %346 = vmatpush.msra.mxu0 0.0
      %347 = vmatpush.msra.mxu0 0.0
      %348 = vmatpush.msra.mxu0 0.0
      %349 = vmatpush.msra.mxu0 0.0
      %350 = vmatpush.msra.mxu0 0.0
      %351 = vmatpush.msra.mxu0 0.0
      %352 = vmatpush.msra.mxu0 0.0
      %353 = vmatpush.msra.mxu0 0.0
      %354 = vmatpush.msra.mxu0 0.0
      %355 = vmatpush.msra.mxu0 0.0
      %356 = vmatpush.msra.mxu0 0.0
      %357 = vmatpush.msra.mxu0 %v336
      %358 = vmatmul.f32.gmra.mxu0 %v340
      %v359 = vpop.f32.mrf.mxu0
      %v360 = vadd.f32 0.0, %v359
      %361 = vdwg.mxu0
      %362 = vmatpush.msra.mxu0 0.0
      %363 = vmatpush.msra.mxu0 0.0
      %364 = vmatpush.msra.mxu0 0.0
      %365 = vmatpush.msra.mxu0 0.0
      %366 = vmatpush.msra.mxu0 0.0
      %367 = vmatpush.msra.mxu0 0.0
      %368 = vmatpush.msra.mxu0 0.0
      %369 = vmatpush.msra.mxu0 0.0
      %370 = vmatpush.msra.mxu0 0.0
      %371 = vmatpush.msra.mxu0 0.0
      %372 = vmatpush.msra.mxu0 0.0
      %373 = vmatpush.msra.mxu0 0.0
      %374 = vmatpush.msra.mxu0 0.0
      %375 = vmatpush.msra.mxu0 0.0
      %376 = vmatpush.msra.mxu0 0.0
      %377 = vmatpush.msra.mxu0 %v337
      %378 = vmatmul.f32.gmra.mxu0 %v340
      %v379 = vpop.f32.mrf.mxu0
      %v380 = vadd.f32 0.0, %v379
      %381 = vdwg.mxu0
      %v382 = vmul.f32 %v360, 0.1
      %v383 = vmul.f32 %v380, 0.1
      %v384 = vmax.f32 %v360, %v382
      %v385 = vmax.f32 %v380, %v383
      %v386 = vld [vmem:[%s2] sm:$0xf]
      %v388 = vsel %vm338, %v386, 0
      %390 = vmatpush.msra.mxu0 0.0
      %391 = vmatpush.msra.mxu0 0.0
      %392 = vmatpush.msra.mxu0 0.0
      %393 = vmatpush.msra.mxu0 0.0
      %394 = vmatpush.msra.mxu0 0.0
      %395 = vmatpush.msra.mxu0 0.0
      %396 = vmatpush.msra.mxu0 0.0
      %397 = vmatpush.msra.mxu0 0.0
      %398 = vmatpush.msra.mxu0 0.0
      %399 = vmatpush.msra.mxu0 0.0
      %400 = vmatpush.msra.mxu0 0.0
      %401 = vmatpush.msra.mxu0 0.0
      %402 = vmatpush.msra.mxu0 0.0
      %403 = vmatpush.msra.mxu0 0.0
      %404 = vmatpush.msra.mxu0 0.0
      %405 = vmatpush.msra.mxu0 %v384
      %406 = vmatmul.f32.gmra.mxu0 %v388
      %v407 = vpop.f32.mrf.mxu0
      %v408 = vadd.f32 0.0, %v407
      %409 = vdwg.mxu0
      %410 = vmatpush.msra.mxu0 0.0
      %411 = vmatpush.msra.mxu0 0.0
      %412 = vmatpush.msra.mxu0 0.0
      %413 = vmatpush.msra.mxu0 0.0
      %414 = vmatpush.msra.mxu0 0.0
      %415 = vmatpush.msra.mxu0 0.0
      %416 = vmatpush.msra.mxu0 0.0
      %417 = vmatpush.msra.mxu0 0.0
      %418 = vmatpush.msra.mxu0 0.0
      %419 = vmatpush.msra.mxu0 0.0
      %420 = vmatpush.msra.mxu0 0.0
      %421 = vmatpush.msra.mxu0 0.0
      %422 = vmatpush.msra.mxu0 0.0
      %423 = vmatpush.msra.mxu0 0.0
      %424 = vmatpush.msra.mxu0 0.0
      %425 = vmatpush.msra.mxu0 %v385
      %426 = vmatmul.f32.gmra.mxu0 %v388
      %v427 = vpop.f32.mrf.mxu0
      %v428 = vadd.f32 0.0, %v427
      %429 = vdwg.mxu0
      %v431 = vperm.slane %v334, 0
      %v432 = vperm.slane %v334, 1
      %v435 = vmul.f32 %v408, %v431
      %v436 = vmul.f32 %v428, %v432
      %v437 = vld [vmem:[%s3] sm:$0xf]
      %v439 = vsel %vm338, %v437, 0
      %441 = vmatpush.msra.mxu0 0.0
      %442 = vmatpush.msra.mxu0 0.0
      %443 = vmatpush.msra.mxu0 0.0
      %444 = vmatpush.msra.mxu0 0.0
      %445 = vmatpush.msra.mxu0 0.0
      %446 = vmatpush.msra.mxu0 0.0
      %447 = vmatpush.msra.mxu0 0.0
      %448 = vmatpush.msra.mxu0 0.0
      %449 = vmatpush.msra.mxu0 0.0
      %450 = vmatpush.msra.mxu0 0.0
      %451 = vmatpush.msra.mxu0 0.0
      %452 = vmatpush.msra.mxu0 0.0
      %453 = vmatpush.msra.mxu0 0.0
      %454 = vmatpush.msra.mxu0 0.0
      %455 = vmatpush.msra.mxu0 0.0
      %456 = vmatpush.msra.mxu0 %v384
      %457 = vmatmul.f32.gmra.mxu0 %v439
      %v458 = vpop.f32.mrf.mxu0
      %v459 = vadd.f32 0.0, %v458
      %460 = vdwg.mxu0
      %461 = vmatpush.msra.mxu0 0.0
      %462 = vmatpush.msra.mxu0 0.0
      %463 = vmatpush.msra.mxu0 0.0
      %464 = vmatpush.msra.mxu0 0.0
      %465 = vmatpush.msra.mxu0 0.0
      %466 = vmatpush.msra.mxu0 0.0
      %467 = vmatpush.msra.mxu0 0.0
      %468 = vmatpush.msra.mxu0 0.0
      %469 = vmatpush.msra.mxu0 0.0
      %470 = vmatpush.msra.mxu0 0.0
      %471 = vmatpush.msra.mxu0 0.0
      %472 = vmatpush.msra.mxu0 0.0
      %473 = vmatpush.msra.mxu0 0.0
      %474 = vmatpush.msra.mxu0 0.0
      %475 = vmatpush.msra.mxu0 0.0
      %476 = vmatpush.msra.mxu0 %v385
      %477 = vmatmul.f32.gmra.mxu0 %v439
      %v478 = vpop.f32.mrf.mxu0
      %v479 = vadd.f32 0.0, %v478
      %480 = vdwg.mxu0
      %v481 = vmul.f32 %v459, %v431
      %v482 = vmul.f32 %v479, %v432
      %v483 = vand.u32 2147483647, %v481
      %vm484 = vcmp.le.f32.partialorder %v483, 0.7853982
      %vm485 = vcmp.lt.s32.totalorder %v481, 0
      %v486 = vand.u32 %v481, 2139095040
      %v487 = vshrl.u32 %v486, 23
      %v488 = vsub.s32 %v487, 127
      %v489 = vand.u32 2147483647, %v481
      %v490 = vand.u32 %v489, 8388607
      %v491 = vor.u32 %v490, 8388608
      %v492 = vsub.s32 0, %v491
      %v493 = vadd.s32 %v488, 1
      %vm494 = vcmp.gt.s32.totalorder %v493, 0
      %v495 = vsel %vm494, %v493, 0
      %v496 = vshrl.u32 %v495, 5
      %v497 = vand.u32 %v495, 31
      %v498 = vsub.s32 32, %v497
      %v499 = vshrl.u32 683565275, %v498
      %v500 = vshll.u32 683565275, %v497
      %v501 = vshrl.u32 2475754826, %v498
      %v502 = vor.u32 %v500, %v501
      %v503 = vshll.u32 2475754826, %v497
      %v504 = vshrl.u32 2131351028, %v498
      %v505 = vor.u32 %v503, %v504
      %v506 = vshll.u32 2131351028, %v497
      %v507 = vshrl.u32 2102212464, %v498
      %v508 = vor.u32 %v506, %v507
      %v509 = vshll.u32 2102212464, %v497
      %v510 = vshrl.u32 920167782, %v498
      %v511 = vor.u32 %v509, %v510
      %v512 = vshll.u32 920167782, %v497
      %v513 = vshrl.u32 1326507024, %v498
      %v514 = vor.u32 %v512, %v513
      %vm515 = vcmp.lt.s32.totalorder %v496, 1
      %vm516 = vcmp.lt.s32.totalorder %v496, 2
      %vm517 = vcmp.lt.s32.totalorder %v496, 3
      %vm518 = vcmp.lt.s32.totalorder %v496, 4
      %v519 = vsel %vm515, %v499, %v502
      %v520 = vsel %vm518, %v508, 2102212464
      %v521 = vsel %vm517, %v505, %v520
      %v522 = vsel %vm516, %v519, %v521
      %v523 = vsel %vm515, %v502, %v505
      %v524 = vsel %vm518, %v511, 920167782
      %v525 = vsel %vm517, %v508, %v524
      %v526 = vsel %vm516, %v523, %v525
      %v527 = vsel %vm515, %v505, %v508
      %v528 = vsel %vm518, %v514, 1326507024
      %v529 = vsel %vm517, %v511, %v528
      %v530 = vsel %vm516, %v527, %v529
      %v531 = vshll.u32 %v491, 8
      %v532 = vand.u32 %v531, 65535
      %v533 = vshrl.u32 %v531, 16
      %v534 = vand.u32 %v530, 65535
      %v535 = vshrl.u32 %v530, 16
      %v536 = vmul.u32 %v532, %v534
      %v537 = vmul.u32 %v532, %v535
      %v538 = vmul.u32 %v533, %v534
      %v539 = vmul.u32 %v533, %v535
      %v540 = vshll.u32 %v537, 16
      %v541 = vshrl.u32 %v537, 16
      %v542 = vshll.u32 %v538, 16
      %v543 = vshrl.u32 %v538, 16
      %vm544 = vc.u32 %v536, %v540
      %v545 = vsel %vm544, 1, 0
      %v546 = vadd.s32 %v536, %v540
      %v547 = vadd.s32 %v539, %v545
      %vm548 = vc.u32 %v546, %v542
      %v549 = vsel %vm548, 1, 0
      %v550 = vadd.s32 %v546, %v542
      %v551 = vadd.s32 %v547, %v549
      %v552 = vadd.s32 %v551, %v541
      %v553 = vadd.s32 %v552, %v543
      %v554 = vand.u32 %v531, 65535
      %v555 = vshrl.u32 %v531, 16
      %v556 = vand.u32 %v526, 65535
      %v557 = vshrl.u32 %v526, 16
      %v558 = vmul.u32 %v554, %v556
      %v559 = vmul.u32 %v554, %v557
      %v560 = vmul.u32 %v555, %v556
      %v561 = vmul.u32 %v555, %v557
      %v562 = vshll.u32 %v559, 16
      %v563 = vshrl.u32 %v559, 16
      %v564 = vshll.u32 %v560, 16
      %v565 = vshrl.u32 %v560, 16
      %vm566 = vc.u32 %v558, %v562
      %v567 = vsel %vm566, 1, 0
      %v568 = vadd.s32 %v558, %v562
      %v569 = vadd.s32 %v561, %v567
      %vm570 = vc.u32 %v568, %v564
      %v571 = vsel %vm570, 1, 0
      %v572 = vadd.s32 %v568, %v564
      %v573 = vadd.s32 %v569, %v571
      %v574 = vadd.s32 %v573, %v563
      %v575 = vadd.s32 %v574, %v565
      %v576 = vmul.u32 %v531, %v522
      %v577 = vadd.s32 %v553, %v572
      %vm578 = vc.u32 %v553, %v572
      %v579 = vadd.s32 %v575, 1
      %v580 = vsel %vm578, %v579, %v575
      %v581 = vadd.s32 %v576, %v580
      %v582 = vadd.s32 %v581, 536870912
      %v583 = vshrl.u32 %v582, 30
      %v584 = vshll.u32 %v583, 30
      %v585 = vsub.s32 %v581, %v584
      %vm586 = vcmp.lt.s32.totalorder %v585, 0
      %v587 = vsub.s32 0, %v585
      %v588 = vsel %vm586, %v587, %v585
      %v589 = vclz %v588
      %v590 = vsub.s32 %v589, 2
      %vm591 = vcmp.gt.s32.totalorder 0, %v590
      %v592 = vsel %vm591, 0, %v590
      %v593 = vsub.s32 32, %v592
      %v594 = vshll.u32 %v585, %v592
      %v595 = vshrl.u32 %v577, %v593
      %v596 = vor.u32 %v594, %v595
      %v597 = vsub.s32 4294967266, %v592
      %v598 = vadd.s32 %v597, 127
      %v599 = vshll.u32 %v598, 23
      %v600 = vor.u32 4788187, %v599
      %v601 = vand.u32 2147483647, %v600
      %v603 = vcvt.s32.f32 %v596
      %v604 = vmul.f32 %v603, %v601
      %v605 = vxor.u32 %v604, 2147483648
      %v606 = vsel %vm485, %v605, %v604
      %v607 = vsub.s32 4, %v583
      %v608 = vsel %vm485, %v607, %v583
      %v609 = vsel %vm484, %v481, %v606
      %v610 = vsel %vm484, 0, %v608
      %v611 = vmul.f32 %v609, %v609
      %v612 = vmul.f32 %v611, -0.001358992
      %v613 = vadd.f32 %v612, 0.041655596
      %v614 = vmul.f32 %v611, %v613
      %v615 = vadd.f32 %v614, -0.4999988
      %v616 = vmul.f32 %v611, %v615
      %v617 = vadd.f32 1.0, %v616
      %v618 = vmul.f32 %v609, %v609
      %v619 = vmul.f32 %v618, -0.00019511016
      %v620 = vadd.f32 %v619, 0.008332121
      %v621 = vmul.f32 %v618, %v620
      %v622 = vadd.f32 %v621, -0.16666654
      %v623 = vmul.f32 %v618, %v622
      %v624 = vadd.f32 %v623, 1.0
      %v625 = vmul.f32 %v624, %v609
      %vm626 = vweird.f32 %v481
      %v627 = vand.u32 %v610, 3
      %vm628 = vcmp.lt.s32.totalorder %v627, 2
      %vm629 = vcmp.eq.s32.totalorder %v627, 0
      %v630 = vxor.u32 %v625, 2147483648
      %v631 = vsel %vm629, %v617, %v630
      %vm632 = vcmp.eq.s32.totalorder %v627, 2
      %v633 = vxor.u32 %v617, 2147483648
      %v634 = vsel %vm632, %v633, %v625
      %v635 = vsel %vm628, %v631, %v634
      %v636 = vsel %vm626, nan, %v635
      %v637 = vand.u32 2147483647, %v482
      %vm638 = vcmp.le.f32.partialorder %v637, 0.7853982
      %vm639 = vcmp.lt.s32.totalorder %v482, 0
      %v640 = vand.u32 %v482, 2139095040
      %v641 = vshrl.u32 %v640, 23
      %v642 = vsub.s32 %v641, 127
      %v643 = vand.u32 2147483647, %v482
      %v644 = vand.u32 %v643, 8388607
      %v645 = vor.u32 %v644, 8388608
      %v646 = vsub.s32 0, %v645
      %v647 = vadd.s32 %v642, 1
      %vm648 = vcmp.gt.s32.totalorder %v647, 0
      %v649 = vsel %vm648, %v647, 0
      %v650 = vshrl.u32 %v649, 5
      %v651 = vand.u32 %v649, 31
      %v652 = vsub.s32 32, %v651
      %v653 = vshrl.u32 683565275, %v652
      %v654 = vshll.u32 683565275, %v651
      %v655 = vshrl.u32 2475754826, %v652
      %v656 = vor.u32 %v654, %v655
      %v657 = vshll.u32 2475754826, %v651
      %v658 = vshrl.u32 2131351028, %v652
      %v659 = vor.u32 %v657, %v658
      %v660 = vshll.u32 2131351028, %v651
      %v661 = vshrl.u32 2102212464, %v652
      %v662 = vor.u32 %v660, %v661
      %v663 = vshll.u32 2102212464, %v651
      %v664 = vshrl.u32 920167782, %v652
      %v665 = vor.u32 %v663, %v664
      %v666 = vshll.u32 920167782, %v651
      %v667 = vshrl.u32 1326507024, %v652
      %v668 = vor.u32 %v666, %v667
      %vm669 = vcmp.lt.s32.totalorder %v650, 1
      %vm670 = vcmp.lt.s32.totalorder %v650, 2
      %vm671 = vcmp.lt.s32.totalorder %v650, 3
      %vm672 = vcmp.lt.s32.totalorder %v650, 4
      %v673 = vsel %vm669, %v653, %v656
      %v674 = vsel %vm672, %v662, 2102212464
      %v675 = vsel %vm671, %v659, %v674
      %v676 = vsel %vm670, %v673, %v675
      %v677 = vsel %vm669, %v656, %v659
      %v678 = vsel %vm672, %v665, 920167782
      %v679 = vsel %vm671, %v662, %v678
      %v680 = vsel %vm670, %v677, %v679
      %v681 = vsel %vm669, %v659, %v662
      %v682 = vsel %vm672, %v668, 1326507024
      %v683 = vsel %vm671, %v665, %v682
      %v684 = vsel %vm670, %v681, %v683
      %v685 = vshll.u32 %v645, 8
      %v686 = vand.u32 %v685, 65535
      %v687 = vshrl.u32 %v685, 16
      %v688 = vand.u32 %v684, 65535
      %v689 = vshrl.u32 %v684, 16
      %v690 = vmul.u32 %v686, %v688
      %v691 = vmul.u32 %v686, %v689
      %v692 = vmul.u32 %v687, %v688
      %v693 = vmul.u32 %v687, %v689
      %v694 = vshll.u32 %v691, 16
      %v695 = vshrl.u32 %v691, 16
      %v696 = vshll.u32 %v692, 16
      %v697 = vshrl.u32 %v692, 16
      %vm698 = vc.u32 %v690, %v694
      %v699 = vsel %vm698, 1, 0
      %v700 = vadd.s32 %v690, %v694
      %v701 = vadd.s32 %v693, %v699
      %vm702 = vc.u32 %v700, %v696
      %v703 = vsel %vm702, 1, 0
      %v704 = vadd.s32 %v700, %v696
      %v705 = vadd.s32 %v701, %v703
      %v706 = vadd.s32 %v705, %v695
      %v707 = vadd.s32 %v706, %v697
      %v708 = vand.u32 %v685, 65535
      %v709 = vshrl.u32 %v685, 16
      %v710 = vand.u32 %v680, 65535
      %v711 = vshrl.u32 %v680, 16
      %v712 = vmul.u32 %v708, %v710
      %v713 = vmul.u32 %v708, %v711
      %v714 = vmul.u32 %v709, %v710
      %v715 = vmul.u32 %v709, %v711
      %v716 = vshll.u32 %v713, 16
      %v717 = vshrl.u32 %v713, 16
      %v718 = vshll.u32 %v714, 16
      %v719 = vshrl.u32 %v714, 16
      %vm720 = vc.u32 %v712, %v716
      %v721 = vsel %vm720, 1, 0
      %v722 = vadd.s32 %v712, %v716
      %v723 = vadd.s32 %v715, %v721
      %vm724 = vc.u32 %v722, %v718
      %v725 = vsel %vm724, 1, 0
      %v726 = vadd.s32 %v722, %v718
      %v727 = vadd.s32 %v723, %v725
      %v728 = vadd.s32 %v727, %v717
      %v729 = vadd.s32 %v728, %v719
      %v730 = vmul.u32 %v685, %v676
      %v731 = vadd.s32 %v707, %v726
      %vm732 = vc.u32 %v707, %v726
      %v733 = vadd.s32 %v729, 1
      %v734 = vsel %vm732, %v733, %v729
      %v735 = vadd.s32 %v730, %v734
      %v736 = vadd.s32 %v735, 536870912
      %v737 = vshrl.u32 %v736, 30
      %v738 = vshll.u32 %v737, 30
      %v739 = vsub.s32 %v735, %v738
      %vm740 = vcmp.lt.s32.totalorder %v739, 0
      %v741 = vsub.s32 0, %v739
      %v742 = vsel %vm740, %v741, %v739
      %v743 = vclz %v742
      %v744 = vsub.s32 %v743, 2
      %vm745 = vcmp.gt.s32.totalorder 0, %v744
      %v746 = vsel %vm745, 0, %v744
      %v747 = vsub.s32 32, %v746
      %v748 = vshll.u32 %v739, %v746
      %v749 = vshrl.u32 %v731, %v747
      %v750 = vor.u32 %v748, %v749
      %v751 = vsub.s32 4294967266, %v746
      %v752 = vadd.s32 %v751, 127
      %v753 = vshll.u32 %v752, 23
      %v754 = vor.u32 4788187, %v753
      %v755 = vand.u32 2147483647, %v754
      %v757 = vcvt.s32.f32 %v750
      %v758 = vmul.f32 %v757, %v755
      %v759 = vxor.u32 %v758, 2147483648
      %v760 = vsel %vm639, %v759, %v758
      %v761 = vsub.s32 4, %v737
      %v762 = vsel %vm639, %v761, %v737
      %v763 = vsel %vm638, %v482, %v760
      %v764 = vsel %vm638, 0, %v762
      %v765 = vmul.f32 %v763, %v763
      %v766 = vmul.f32 %v765, -0.001358992
      %v767 = vadd.f32 %v766, 0.041655596
      %v768 = vmul.f32 %v765, %v767
      %v769 = vadd.f32 %v768, -0.4999988
      %v770 = vmul.f32 %v765, %v769
      %v771 = vadd.f32 1.0, %v770
      %v772 = vmul.f32 %v763, %v763
      %v773 = vmul.f32 %v772, -0.00019511016
      %v774 = vadd.f32 %v773, 0.008332121
      %v775 = vmul.f32 %v772, %v774
      %v776 = vadd.f32 %v775, -0.16666654
      %v777 = vmul.f32 %v772, %v776
      %v778 = vadd.f32 %v777, 1.0
      %v779 = vmul.f32 %v778, %v763
      %vm780 = vweird.f32 %v482
      %v781 = vand.u32 %v764, 3
      %vm782 = vcmp.lt.s32.totalorder %v781, 2
      %vm783 = vcmp.eq.s32.totalorder %v781, 0
      %v784 = vxor.u32 %v779, 2147483648
      %v785 = vsel %vm783, %v771, %v784
      %vm786 = vcmp.eq.s32.totalorder %v781, 2
      %v787 = vxor.u32 %v771, 2147483648
      %v788 = vsel %vm786, %v787, %v779
      %v789 = vsel %vm782, %v785, %v788
      %v790 = vsel %vm780, nan, %v789
      %v791 = vmul.f32 %v435, %v636
      %v792 = vmul.f32 %v436, %v790
      %v795 = vrot.slane %v792, 4
      %vm796 = vcmask 1043456
      %v797 = vsel %vm796, %v791, %v795
      %799 = vst [vmem:[%s322] sm:$0xff] %v797
      %v800 = vand.u32 2147483647, %v481
      %vm801 = vcmp.le.f32.partialorder %v800, 0.7853982
      %vm802 = vcmp.lt.s32.totalorder %v481, 0
      %v803 = vand.u32 %v481, 2139095040
      %v804 = vshrl.u32 %v803, 23
      %v805 = vsub.s32 %v804, 127
      %v806 = vand.u32 2147483647, %v481
      %v807 = vand.u32 %v806, 8388607
      %v808 = vor.u32 %v807, 8388608
      %v809 = vsub.s32 0, %v808
      %v810 = vadd.s32 %v805, 1
      %vm811 = vcmp.gt.s32.totalorder %v810, 0
      %v812 = vsel %vm811, %v810, 0
      %v813 = vshrl.u32 %v812, 5
      %v814 = vand.u32 %v812, 31
      %v815 = vsub.s32 32, %v814
      %v816 = vshrl.u32 683565275, %v815
      %v817 = vshll.u32 683565275, %v814
      %v818 = vshrl.u32 2475754826, %v815
      %v819 = vor.u32 %v817, %v818
      %v820 = vshll.u32 2475754826, %v814
      %v821 = vshrl.u32 2131351028, %v815
      %v822 = vor.u32 %v820, %v821
      %v823 = vshll.u32 2131351028, %v814
      %v824 = vshrl.u32 2102212464, %v815
      %v825 = vor.u32 %v823, %v824
      %v826 = vshll.u32 2102212464, %v814
      %v827 = vshrl.u32 920167782, %v815
      %v828 = vor.u32 %v826, %v827
      %v829 = vshll.u32 920167782, %v814
      %v830 = vshrl.u32 1326507024, %v815
      %v831 = vor.u32 %v829, %v830
      %vm832 = vcmp.lt.s32.totalorder %v813, 1
      %vm833 = vcmp.lt.s32.totalorder %v813, 2
      %vm834 = vcmp.lt.s32.totalorder %v813, 3
      %vm835 = vcmp.lt.s32.totalorder %v813, 4
      %v836 = vsel %vm832, %v816, %v819
      %v837 = vsel %vm835, %v825, 2102212464
      %v838 = vsel %vm834, %v822, %v837
      %v839 = vsel %vm833, %v836, %v838
      %v840 = vsel %vm832, %v819, %v822
      %v841 = vsel %vm835, %v828, 920167782
      %v842 = vsel %vm834, %v825, %v841
      %v843 = vsel %vm833, %v840, %v842
      %v844 = vsel %vm832, %v822, %v825
      %v845 = vsel %vm835, %v831, 1326507024
      %v846 = vsel %vm834, %v828, %v845
      %v847 = vsel %vm833, %v844, %v846
      %v848 = vshll.u32 %v808, 8
      %v849 = vand.u32 %v848, 65535
      %v850 = vshrl.u32 %v848, 16
      %v851 = vand.u32 %v847, 65535
      %v852 = vshrl.u32 %v847, 16
      %v853 = vmul.u32 %v849, %v851
      %v854 = vmul.u32 %v849, %v852
      %v855 = vmul.u32 %v850, %v851
      %v856 = vmul.u32 %v850, %v852
      %v857 = vshll.u32 %v854, 16
      %v858 = vshrl.u32 %v854, 16
      %v859 = vshll.u32 %v855, 16
      %v860 = vshrl.u32 %v855, 16
      %vm861 = vc.u32 %v853, %v857
      %v862 = vsel %vm861, 1, 0
      %v863 = vadd.s32 %v853, %v857
      %v864 = vadd.s32 %v856, %v862
      %vm865 = vc.u32 %v863, %v859
      %v866 = vsel %vm865, 1, 0
      %v867 = vadd.s32 %v863, %v859
      %v868 = vadd.s32 %v864, %v866
      %v869 = vadd.s32 %v868, %v858
      %v870 = vadd.s32 %v869, %v860
      %v871 = vand.u32 %v848, 65535
      %v872 = vshrl.u32 %v848, 16
      %v873 = vand.u32 %v843, 65535
      %v874 = vshrl.u32 %v843, 16
      %v875 = vmul.u32 %v871, %v873
      %v876 = vmul.u32 %v871, %v874
      %v877 = vmul.u32 %v872, %v873
      %v878 = vmul.u32 %v872, %v874
      %v879 = vshll.u32 %v876, 16
      %v880 = vshrl.u32 %v876, 16
      %v881 = vshll.u32 %v877, 16
      %v882 = vshrl.u32 %v877, 16
      %vm883 = vc.u32 %v875, %v879
      %v884 = vsel %vm883, 1, 0
      %v885 = vadd.s32 %v875, %v879
      %v886 = vadd.s32 %v878, %v884
      %vm887 = vc.u32 %v885, %v881
      %v888 = vsel %vm887, 1, 0
      %v889 = vadd.s32 %v885, %v881
      %v890 = vadd.s32 %v886, %v888
      %v891 = vadd.s32 %v890, %v880
      %v892 = vadd.s32 %v891, %v882
      %v893 = vmul.u32 %v848, %v839
      %v894 = vadd.s32 %v870, %v889
      %vm895 = vc.u32 %v870, %v889
      %v896 = vadd.s32 %v892, 1
      %v897 = vsel %vm895, %v896, %v892
      %v898 = vadd.s32 %v893, %v897
      %v899 = vadd.s32 %v898, 536870912
      %v900 = vshrl.u32 %v899, 30
      %v901 = vshll.u32 %v900, 30
      %v902 = vsub.s32 %v898, %v901
      %vm903 = vcmp.lt.s32.totalorder %v902, 0
      %v904 = vsub.s32 0, %v902
      %v905 = vsel %vm903, %v904, %v902
      %v906 = vclz %v905
      %v907 = vsub.s32 %v906, 2
      %vm908 = vcmp.gt.s32.totalorder 0, %v907
      %v909 = vsel %vm908, 0, %v907
      %v910 = vsub.s32 32, %v909
      %v911 = vshll.u32 %v902, %v909
      %v912 = vshrl.u32 %v894, %v910
      %v913 = vor.u32 %v911, %v912
      %v914 = vsub.s32 4294967266, %v909
      %v915 = vadd.s32 %v914, 127
      %v916 = vshll.u32 %v915, 23
      %v917 = vor.u32 4788187, %v916
      %v918 = vand.u32 2147483647, %v917
      %v920 = vcvt.s32.f32 %v913
      %v921 = vmul.f32 %v920, %v918
      %v922 = vxor.u32 %v921, 2147483648
      %v923 = vsel %vm802, %v922, %v921
      %v924 = vsub.s32 4, %v900
      %v925 = vsel %vm802, %v924, %v900
      %v926 = vsel %vm801, %v481, %v923
      %v927 = vsel %vm801, 0, %v925
      %v928 = vmul.f32 %v926, %v926
      %v929 = vmul.f32 %v928, -0.001358992
      %v930 = vadd.f32 %v929, 0.041655596
      %v931 = vmul.f32 %v928, %v930
      %v932 = vadd.f32 %v931, -0.4999988
      %v933 = vmul.f32 %v928, %v932
      %v934 = vadd.f32 1.0, %v933
      %v935 = vmul.f32 %v926, %v926
      %v936 = vmul.f32 %v935, -0.00019511016
      %v937 = vadd.f32 %v936, 0.008332121
      %v938 = vmul.f32 %v935, %v937
      %v939 = vadd.f32 %v938, -0.16666654
      %v940 = vmul.f32 %v935, %v939
      %v941 = vadd.f32 %v940, 1.0
      %v942 = vmul.f32 %v941, %v926
      %vm943 = vweird.f32 %v481
      %v944 = vadd.s32 %v927, 3
      %v945 = vand.u32 %v944, 3
      %vm946 = vcmp.lt.s32.totalorder %v945, 2
      %vm947 = vcmp.eq.s32.totalorder %v945, 0
      %v948 = vxor.u32 %v942, 2147483648
      %v949 = vsel %vm947, %v934, %v948
      %vm950 = vcmp.eq.s32.totalorder %v945, 2
      %v951 = vxor.u32 %v934, 2147483648
      %v952 = vsel %vm950, %v951, %v942
      %v953 = vsel %vm946, %v949, %v952
      %v954 = vsel %vm943, nan, %v953
      %v955 = vand.u32 2147483647, %v482
      %vm956 = vcmp.le.f32.partialorder %v955, 0.7853982
      %vm957 = vcmp.lt.s32.totalorder %v482, 0
      %v958 = vand.u32 %v482, 2139095040
      %v959 = vshrl.u32 %v958, 23
      %v960 = vsub.s32 %v959, 127
      %v961 = vand.u32 2147483647, %v482
      %v962 = vand.u32 %v961, 8388607
      %v963 = vor.u32 %v962, 8388608
      %v964 = vsub.s32 0, %v963
      %v965 = vadd.s32 %v960, 1
      %vm966 = vcmp.gt.s32.totalorder %v965, 0
      %v967 = vsel %vm966, %v965, 0
      %v968 = vshrl.u32 %v967, 5
      %v969 = vand.u32 %v967, 31
      %v970 = vsub.s32 32, %v969
      %v971 = vshrl.u32 683565275, %v970
      %v972 = vshll.u32 683565275, %v969
      %v973 = vshrl.u32 2475754826, %v970
      %v974 = vor.u32 %v972, %v973
      %v975 = vshll.u32 2475754826, %v969
      %v976 = vshrl.u32 2131351028, %v970
      %v977 = vor.u32 %v975, %v976
      %v978 = vshll.u32 2131351028, %v969
      %v979 = vshrl.u32 2102212464, %v970
      %v980 = vor.u32 %v978, %v979
      %v981 = vshll.u32 2102212464, %v969
      %v982 = vshrl.u32 920167782, %v970
      %v983 = vor.u32 %v981, %v982
      %v984 = vshll.u32 920167782, %v969
      %v985 = vshrl.u32 1326507024, %v970
      %v986 = vor.u32 %v984, %v985
      %vm987 = vcmp.lt.s32.totalorder %v968, 1
      %vm988 = vcmp.lt.s32.totalorder %v968, 2
      %vm989 = vcmp.lt.s32.totalorder %v968, 3
      %vm990 = vcmp.lt.s32.totalorder %v968, 4
      %v991 = vsel %vm987, %v971, %v974
      %v992 = vsel %vm990, %v980, 2102212464
      %v993 = vsel %vm989, %v977, %v992
      %v994 = vsel %vm988, %v991, %v993
      %v995 = vsel %vm987, %v974, %v977
      %v996 = vsel %vm990, %v983, 920167782
      %v997 = vsel %vm989, %v980, %v996
      %v998 = vsel %vm988, %v995, %v997
      %v999 = vsel %vm987, %v977, %v980
      %v1000 = vsel %vm990, %v986, 1326507024
      %v1001 = vsel %vm989, %v983, %v1000
      %v1002 = vsel %vm988, %v999, %v1001
      %v1003 = vshll.u32 %v963, 8
      %v1004 = vand.u32 %v1003, 65535
      %v1005 = vshrl.u32 %v1003, 16
      %v1006 = vand.u32 %v1002, 65535
      %v1007 = vshrl.u32 %v1002, 16
      %v1008 = vmul.u32 %v1004, %v1006
      %v1009 = vmul.u32 %v1004, %v1007
      %v1010 = vmul.u32 %v1005, %v1006
      %v1011 = vmul.u32 %v1005, %v1007
      %v1012 = vshll.u32 %v1009, 16
      %v1013 = vshrl.u32 %v1009, 16
      %v1014 = vshll.u32 %v1010, 16
      %v1015 = vshrl.u32 %v1010, 16
      %vm1016 = vc.u32 %v1008, %v1012
      %v1017 = vsel %vm1016, 1, 0
      %v1018 = vadd.s32 %v1008, %v1012
      %v1019 = vadd.s32 %v1011, %v1017
      %vm1020 = vc.u32 %v1018, %v1014
      %v1021 = vsel %vm1020, 1, 0
      %v1022 = vadd.s32 %v1018, %v1014
      %v1023 = vadd.s32 %v1019, %v1021
      %v1024 = vadd.s32 %v1023, %v1013
      %v1025 = vadd.s32 %v1024, %v1015
      %v1026 = vand.u32 %v1003, 65535
      %v1027 = vshrl.u32 %v1003, 16
      %v1028 = vand.u32 %v998, 65535
      %v1029 = vshrl.u32 %v998, 16
      %v1030 = vmul.u32 %v1026, %v1028
      %v1031 = vmul.u32 %v1026, %v1029
      %v1032 = vmul.u32 %v1027, %v1028
      %v1033 = vmul.u32 %v1027, %v1029
      %v1034 = vshll.u32 %v1031, 16
      %v1035 = vshrl.u32 %v1031, 16
      %v1036 = vshll.u32 %v1032, 16
      %v1037 = vshrl.u32 %v1032, 16
      %vm1038 = vc.u32 %v1030, %v1034
      %v1039 = vsel %vm1038, 1, 0
      %v1040 = vadd.s32 %v1030, %v1034
      %v1041 = vadd.s32 %v1033, %v1039
      %vm1042 = vc.u32 %v1040, %v1036
      %v1043 = vsel %vm1042, 1, 0
      %v1044 = vadd.s32 %v1040, %v1036
      %v1045 = vadd.s32 %v1041, %v1043
      %v1046 = vadd.s32 %v1045, %v1035
      %v1047 = vadd.s32 %v1046, %v1037
      %v1048 = vmul.u32 %v1003, %v994
      %v1049 = vadd.s32 %v1025, %v1044
      %vm1050 = vc.u32 %v1025, %v1044
      %v1051 = vadd.s32 %v1047, 1
      %v1052 = vsel %vm1050, %v1051, %v1047
      %v1053 = vadd.s32 %v1048, %v1052
      %v1054 = vadd.s32 %v1053, 536870912
      %v1055 = vshrl.u32 %v1054, 30
      %v1056 = vshll.u32 %v1055, 30
      %v1057 = vsub.s32 %v1053, %v1056
      %vm1058 = vcmp.lt.s32.totalorder %v1057, 0
      %v1059 = vsub.s32 0, %v1057
      %v1060 = vsel %vm1058, %v1059, %v1057
      %v1061 = vclz %v1060
      %v1062 = vsub.s32 %v1061, 2
      %vm1063 = vcmp.gt.s32.totalorder 0, %v1062
      %v1064 = vsel %vm1063, 0, %v1062
      %v1065 = vsub.s32 32, %v1064
      %v1066 = vshll.u32 %v1057, %v1064
      %v1067 = vshrl.u32 %v1049, %v1065
      %v1068 = vor.u32 %v1066, %v1067
      %v1069 = vsub.s32 4294967266, %v1064
      %v1070 = vadd.s32 %v1069, 127
      %v1071 = vshll.u32 %v1070, 23
      %v1072 = vor.u32 4788187, %v1071
      %v1073 = vand.u32 2147483647, %v1072
      %v1075 = vcvt.s32.f32 %v1068
      %v1076 = vmul.f32 %v1075, %v1073
      %v1077 = vxor.u32 %v1076, 2147483648
      %v1078 = vsel %vm957, %v1077, %v1076
      %v1079 = vsub.s32 4, %v1055
      %v1080 = vsel %vm957, %v1079, %v1055
      %v1081 = vsel %vm956, %v482, %v1078
      %v1082 = vsel %vm956, 0, %v1080
      %v1083 = vmul.f32 %v1081, %v1081
      %v1084 = vmul.f32 %v1083, -0.001358992
      %v1085 = vadd.f32 %v1084, 0.041655596
      %v1086 = vmul.f32 %v1083, %v1085
      %v1087 = vadd.f32 %v1086, -0.4999988
      %v1088 = vmul.f32 %v1083, %v1087
      %v1089 = vadd.f32 1.0, %v1088
      %v1090 = vmul.f32 %v1081, %v1081
      %v1091 = vmul.f32 %v1090, -0.00019511016
      %v1092 = vadd.f32 %v1091, 0.008332121
      %v1093 = vmul.f32 %v1090, %v1092
      %v1094 = vadd.f32 %v1093, -0.16666654
      %v1095 = vmul.f32 %v1090, %v1094
      %v1096 = vadd.f32 %v1095, 1.0
      %v1097 = vmul.f32 %v1096, %v1081
      %vm1098 = vweird.f32 %v482
      %v1099 = vadd.s32 %v1082, 3
      %v1100 = vand.u32 %v1099, 3
      %vm1101 = vcmp.lt.s32.totalorder %v1100, 2
      %vm1102 = vcmp.eq.s32.totalorder %v1100, 0
      %v1103 = vxor.u32 %v1097, 2147483648
      %v1104 = vsel %vm1102, %v1089, %v1103
      %vm1105 = vcmp.eq.s32.totalorder %v1100, 2
      %v1106 = vxor.u32 %v1089, 2147483648
      %v1107 = vsel %vm1105, %v1106, %v1097
      %v1108 = vsel %vm1101, %v1104, %v1107
      %v1109 = vsel %vm1098, nan, %v1108
      %v1110 = vmul.f32 %v435, %v954
      %v1111 = vmul.f32 %v436, %v1109
      %v1114 = vrot.slane %v1111, 4
      %v1115 = vsel %vm796, %v1110, %v1114
      %1117 = vst [vmem:[%s332] sm:$0xff] %v1115
      %s1118 = smul.u32 2, %s23
      %p1119 = scmp.lt.s32.totalorder %s22, 1
      %s1120 = scalar_select %p1119, %s22, 1
      %p1121 = scmp.lt.s32.totalorder %s1118, 1
      %s1122 = scalar_select %p1121, %s1118, 1
      %s1123 = smul.addr %s1120, 2
      %s1124 = sadd.s32 %s1122, %s1123
      %s1125 = smul.addr %s1124, 4
      %s1126 = scalar_lea.vmem %s5, %s1125
      %s1127 = smul.u32 2, %s23
      %p1128 = scmp.lt.s32.totalorder %s22, 1
      %s1129 = scalar_select %p1128, %s22, 1
      %p1130 = scmp.lt.s32.totalorder %s1127, 1
      %s1131 = scalar_select %p1130, %s1127, 1
      %s1132 = smul.addr %s1129, 2
      %s1133 = sadd.s32 %s1131, %s1132
      %s1134 = smul.addr %s1133, 4
      %s1135 = scalar_lea.vmem %s6, %s1134
      // Predicated region
      $region41: #{fresup_forward.4} parent=39 // pred_check
        %p1136 = pneg %p167
      $region42: #{fresup_forward.4} parent=39 // pred_check_branch
        %1138 = sbr.rel (%p1136) target = $region44
      $region43: #{fresup_forward.4} parent=39 // pred_region
        %s1139 = smul.u32 2, %s23
      $region44: #{fresup_forward.4} parent=39 // pred_fallthru
        _
      // Predicated region
      $region45: #{fresup_forward.4} parent=39 // pred_check
        %p1140 = pneg %p195
      $region46: #{fresup_forward.4} parent=39 // pred_check_branch
        %1142 = sbr.rel (%p1140) target = $region48
      $region47: #{fresup_forward.4} parent=39 // pred_region
        %s1143 = smul.u32 2, %s23
      $region48: #{fresup_forward.4} parent=39 // pred_fallthru
        _
    $region40: #{fresup_forward.4} parent=5 // pred_fallthru
      _
    %p1144 = scmp.le.s32.totalorder 2, %s13
    // Predicated region
    $region49: #{fresup_forward.4} parent=5 // pred_check
      %p1145 = pneg %p1144
    $region50: #{fresup_forward.4} parent=5 // pred_check_branch
      %1147 = sbr.rel (%p1145) target = $region52
    $region51: #{fresup_forward.4} parent=5 // pred_region
      %s1148 = ssub.s32 %s13, 2
      // Predicated region
      $region53: #{fresup_forward.4} parent=51 // pred_check
        %p1149 = pneg %p173
      $region54: #{fresup_forward.4} parent=51 // pred_check_branch
        %1151 = sbr.rel (%p1149) target = $region56
      $region55: #{fresup_forward.4} parent=51 // pred_region
        %s1152 = smul.u32 2, %s25
        %p1153 = scmp.lt.s32.totalorder %s24, 1
        %s1154 = scalar_select %p1153, %s24, 1
        %p1155 = scmp.lt.s32.totalorder %s1152, 1
        %s1156 = scalar_select %p1155, %s1152, 1
        %s1157 = smul.addr %s1154, 2
        %s1158 = sadd.s32 %s1156, %s1157
        %s1159 = smul.addr %s1158, 4
        %s1160 = scalar_lea.vmem %s5, %s1159
      $region56: #{fresup_forward.4} parent=51 // pred_fallthru
        _
      // Predicated region
      $region57: #{fresup_forward.4} parent=51 // pred_check
        %p1161 = pneg %p201
      $region58: #{fresup_forward.4} parent=51 // pred_check_branch
        %1163 = sbr.rel (%p1161) target = $region60
      $region59: #{fresup_forward.4} parent=51 // pred_region
        %s1164 = smul.u32 2, %s25
        %p1165 = scmp.lt.s32.totalorder %s24, 1
        %s1166 = scalar_select %p1165, %s24, 1
        %p1167 = scmp.lt.s32.totalorder %s1164, 1
        %s1168 = scalar_select %p1167, %s1164, 1
        %s1169 = smul.addr %s1166, 2
        %s1170 = sadd.s32 %s1168, %s1169
        %s1171 = smul.addr %s1170, 4
        %s1172 = scalar_lea.vmem %s6, %s1171
      $region60: #{fresup_forward.4} parent=51 // pred_fallthru
        _
    $region52: #{fresup_forward.4} parent=5 // pred_fallthru
      _
  $region6: #{fresup_forward.4} parent=0 // loop_footer
    %s17 = sadd.s32 1, %s13
  $region7: #{fresup_forward.4} parent=0 // loop_footer_branch
    %12 = sbr.rel target = $region3
  $region8: #{fresup_forward.4} parent=0 // loop_exit
    _

// kernel: fresup_forward.5
$region0: #{fresup_forward.5}
  #allocation0 [shape = 'u32[]', space=smem, size = 0x4, offset = 0x4, fixed_abs, tag = 'smem constant byte address 0x4 - core index']
  #allocation1 [shape = 'u32[72,128]{1,0:T(1,128)}', space=vmem, size = 0x9000, scoped, tag = 'internal scratch']
  %s0 = inlined_call_operand.vmem [shape: f32[2,40,256], index: 0, kind: input, shape index: {}]
  %s1 = inlined_call_operand.vmem [shape: f32[32,40], index: 1, kind: input, shape index: {}]
  %s2 = inlined_call_operand.vmem [shape: f32[32,1], index: 2, kind: input, shape index: {}]
  %s3 = inlined_call_operand.vmem [shape: f32[2,32,256], index: 3, kind: output, shape index: {}]
  %s4 = sld [smem:[#allocation0]]
  $region45: #{fresup_forward.5} parent=0
    _
  %s6 = ssub.s32 1, %s4
  %s7 = scalar_select 0, %s6, %s4
  loop: start=0, step=1, limit=4
  $region2: #{fresup_forward.5} parent=0 // loop_pre_header
    _
  $region3: #{fresup_forward.5} parent=0 // loop_header
    %s9 = sphi 0, %s13
    %p10 = scmp.ge.s32.totalorder %s9, 4
    %s16 = sphi 0, %s28
    %s17 = sphi 0, %s24
    %s18 = sphi 0, %s16
    %s19 = sphi 0, %s17
    %s20 = sphi 0, %s18
    %s21 = sphi 0, %s19
    %s33 = sphi 0, %s35
    %s36 = sphi 0, %s33
    %s37 = sphi 0, %s36
    %s53 = sphi 0, %s37
    %s57 = sphi 0, %s57
    %s59 = sphi 0, %s57
    %s60 = sphi 0, %s59
    %s74 = sphi 0, %s60
    %s78 = sphi 0, %s78
    %s80 = sphi 0, %s78
    %s81 = sphi 0, %s80
    %s95 = sphi 0, %s81
    %s103 = sphi 0, %s105
    %s106 = sphi 0, %s103
    %s107 = sphi 0, %s106
    %s123 = sphi 0, %s107
  $region4: #{fresup_forward.5} parent=0 // loop_header_branch
    %12 = sbr.rel (%p10) target = $region8
  $region5: #{fresup_forward.5} parent=0 // loop_body
    %s14 = ssub.s32 %s9, 1
    %s15 = ssub.s32 %s9, 2
    %s22 = sadd.s32 1, %s17
    %p23 = scmp.ge.s32.totalorder %s22, 1
    %s24 = scalar_select %p23, 0, %s22
    %s25 = sadd.s32 1, %s16
    %s26 = scalar_select %p23, %s25, %s16
    %p27 = scmp.ge.s32.totalorder %s26, 2
    %s28 = scalar_select %p27, 0, %s26
    %s29 = ssub.s32 %s16, %s28
    %s30 = ssub.s32 %s17, %s24
    %s31 = sor.u32 %s29, %s30
    %p32 = scmp.eq.s32.totalorder %s31, 0
    %s34 = sadd.s32 %s33, 1
    %s35 = scalar_select %p32, %s33, %s34
    %p38 = pneg %p32
    %p39 = scmp.eq.s32.totalorder %s9, 1
    %p40 = por %p38, %p39
    %p41 = scmp.ne.s32.totalorder %s33, %s36
    %p42 = scmp.eq.s32.totalorder %s9, 0
    %p43 = por %p41, %p42
    %p44 = scmp.ne.s32.totalorder %s33, %s36
    %p45 = scmp.eq.s32.totalorder %s14, 1
    %p46 = por %p44, %p45
    %p47 = scmp.ne.s32.totalorder %s36, %s37
    %p48 = scmp.eq.s32.totalorder %s14, 0
    %p49 = por %p47, %p48
    %p50 = scmp.ne.s32.totalorder %s36, %s37
    %p51 = scmp.eq.s32.totalorder %s15, 1
    %p52 = por %p50, %p51
    %p54 = scmp.ne.s32.totalorder %s37, %s53
    %p55 = scmp.eq.s32.totalorder %s15, 0
    %p56 = por %p54, %p55
    %s58 = sadd.s32 %s57, 1
    %p61 = scmp.eq.s32.totalorder %s9, 1
    %p62 = scmp.ne.s32.totalorder %s57, %s59
    %p63 = scmp.eq.s32.totalorder %s9, 0
    %p64 = por %p62, %p63
    %p65 = scmp.ne.s32.totalorder %s57, %s59
    %p66 = scmp.eq.s32.totalorder %s14, 1
    %p67 = por %p65, %p66
    %p68 = scmp.ne.s32.totalorder %s59, %s60
    %p69 = scmp.eq.s32.totalorder %s14, 0
    %p70 = por %p68, %p69
    %p71 = scmp.ne.s32.totalorder %s59, %s60
    %p72 = scmp.eq.s32.totalorder %s15, 1
    %p73 = por %p71, %p72
    %p75 = scmp.ne.s32.totalorder %s60, %s74
    %p76 = scmp.eq.s32.totalorder %s15, 0
    %p77 = por %p75, %p76
    %s79 = sadd.s32 %s78, 1
    %p82 = scmp.eq.s32.totalorder %s9, 1
    %p83 = scmp.ne.s32.totalorder %s78, %s80
    %p84 = scmp.eq.s32.totalorder %s9, 0
    %p85 = por %p83, %p84
    %p86 = scmp.ne.s32.totalorder %s78, %s80
    %p87 = scmp.eq.s32.totalorder %s14, 1
    %p88 = por %p86, %p87
    %p89 = scmp.ne.s32.totalorder %s80, %s81
    %p90 = scmp.eq.s32.totalorder %s14, 0
    %p91 = por %p89, %p90
    %p92 = scmp.ne.s32.totalorder %s80, %s81
    %p93 = scmp.eq.s32.totalorder %s15, 1
    %p94 = por %p92, %p93
    %p96 = scmp.ne.s32.totalorder %s81, %s95
    %p97 = scmp.eq.s32.totalorder %s15, 0
    %p98 = por %p96, %p97
    %s99 = ssub.s32 %s16, %s28
    %s100 = ssub.s32 %s17, %s24
    %s101 = sor.u32 %s99, %s100
    %p102 = scmp.eq.s32.totalorder %s101, 0
    %s104 = sadd.s32 %s103, 1
    %s105 = scalar_select %p102, %s103, %s104
    %p108 = pneg %p102
    %p109 = scmp.eq.s32.totalorder %s9, 1
    %p110 = por %p108, %p109
    %p111 = scmp.ne.s32.totalorder %s103, %s106
    %p112 = scmp.eq.s32.totalorder %s9, 0
    %p113 = por %p111, %p112
    %p114 = scmp.ne.s32.totalorder %s103, %s106
    %p115 = scmp.eq.s32.totalorder %s14, 1
    %p116 = por %p114, %p115
    %p117 = scmp.ne.s32.totalorder %s106, %s107
    %p118 = scmp.eq.s32.totalorder %s14, 0
    %p119 = por %p117, %p118
    %p120 = scmp.ne.s32.totalorder %s106, %s107
    %p121 = scmp.eq.s32.totalorder %s15, 1
    %p122 = por %p120, %p121
    %p124 = scmp.ne.s32.totalorder %s107, %s123
    %p125 = scmp.eq.s32.totalorder %s15, 0
    %p126 = por %p124, %p125
    %p127 = scmp.le.s32.totalorder 1, %s9
    %p128 = scmp.lt.s32.totalorder %s9, 3
    %p129 = pnand %p127, %p128
    %p130 = pneg %p129
    // Predicated region
    $region9: #{fresup_forward.5} parent=5 // pred_check
      _
    $region10: #{fresup_forward.5} parent=5 // pred_check_branch
      %132 = sbr.rel (%p129) target = $region12
    $region11: #{fresup_forward.5} parent=5 // pred_region
      %s133 = ssub.s32 %s9, 1
      // Predicated region
      $region13: #{fresup_forward.5} parent=11 // pred_check
        %p134 = pneg %p70
      $region14: #{fresup_forward.5} parent=11 // pred_check_branch
        %136 = sbr.rel (%p134) target = $region16
      $region15: #{fresup_forward.5} parent=11 // pred_region
        _
      $region16: #{fresup_forward.5} parent=11 // pred_fallthru
        _
      // Predicated region
      $region17: #{fresup_forward.5} parent=11 // pred_check
        %p137 = pneg %p91
      $region18: #{fresup_forward.5} parent=11 // pred_check_branch
        %139 = sbr.rel (%p137) target = $region20
      $region19: #{fresup_forward.5} parent=11 // pred_region
        _
      $region20: #{fresup_forward.5} parent=11 // pred_fallthru
        _
    $region12: #{fresup_forward.5} parent=5 // pred_fallthru
      _
    %p140 = scmp.lt.s32.totalorder %s9, 2
    // Predicated region
    $region21: #{fresup_forward.5} parent=5 // pred_check
      %p141 = pneg %p140
    $region22: #{fresup_forward.5} parent=5 // pred_check_branch
      %143 = sbr.rel (%p141) target = $region24
    $region23: #{fresup_forward.5} parent=5 // pred_region
      // Predicated region
      $region25: #{fresup_forward.5} parent=23 // pred_check
        %p144 = pneg %p43
      $region26: #{fresup_forward.5} parent=23 // pred_check_branch
        %146 = sbr.rel (%p144) target = $region28
      $region27: #{fresup_forward.5} parent=23 // pred_region
        %s147 = smul.u32 2, %s17
        %p148 = scmp.lt.s32.totalorder %s16, 1
        %s149 = scalar_select %p148, %s16, 1
        %p150 = scmp.lt.s32.totalorder %s147, 1
        %s151 = scalar_select %p150, %s147, 1
        %s152 = smul.addr %s149, 10
        %s153 = sadd.s32 %s151, %s152
        %s154 = smul.addr %s153, 8
        %s155 = scalar_lea.vmem %s0, %s154
        %s156 = smul.u32 2, %s17
      $region28: #{fresup_forward.5} parent=23 // pred_fallthru
        _
    $region24: #{fresup_forward.5} parent=5 // pred_fallthru
      _
    %p157 = scmp.le.s32.totalorder 1, %s9
    %p158 = scmp.lt.s32.totalorder %s9, 3
    %p159 = pnand %p157, %p158
    %p160 = pneg %p159
    // Predicated region
    $region29: #{fresup_forward.5} parent=5 // pred_check
      _
    $region30: #{fresup_forward.5} parent=5 // pred_check_branch
      %162 = sbr.rel (%p159) target = $region32
    $region31: #{fresup_forward.5} parent=5 // pred_region
      %s163 = ssub.s32 %s9, 1
      %s164 = smul.u32 2, %s19
      %p165 = scmp.lt.s32.totalorder %s18, 1
      %s166 = scalar_select %p165, %s18, 1
      %p167 = scmp.lt.s32.totalorder %s164, 1
      %s168 = scalar_select %p167, %s164, 1
      %s169 = smul.addr %s166, 10
      %s170 = sadd.s32 %s168, %s169
      %s171 = smul.addr %s170, 8
      %s172 = scalar_lea.vmem %s0, %s171
      %p173 = pneg %p49
      %p174 = pneg %p46
      %p175 = pneg %p70
      %p176 = pneg %p67
      %p177 = pneg %p91
      %p178 = pneg %p88
      %p179 = pneg %p119
      %p180 = pneg %p116
      %s181 = smul.u32 2, %s19
      %p182 = scmp.lt.s32.totalorder %s18, 1
      %s183 = scalar_select %p182, %s18, 1
      %p184 = scmp.lt.s32.totalorder %s181, 1
      %s185 = scalar_select %p184, %s181, 1
      %s186 = smul.addr %s183, 8
      %s187 = sadd.s32 %s185, %s186
      %s188 = smul.addr %s187, 8
      %s189 = scalar_lea.vmem %s3, %s188
      %s190 = smul.u32 2, %s19
      %p191 = scmp.lt.s32.totalorder %s18, 1
      %s192 = scalar_select %p191, %s18, 1
      %p193 = scmp.lt.s32.totalorder %s190, 1
      %s194 = scalar_select %p193, %s190, 1
      %s195 = smul.addr %s192, 10
      %s196 = sadd.s32 %s194, %s195
      %s197 = smul.addr %s196, 8
      %s198 = scalar_lea.vmem %s0, %s197
      %s199 = smul.u32 2, %s19
      %s200 = smul.u32 2, %s19
      %p201 = scmp.lt.s32.totalorder %s18, 1
      %s202 = scalar_select %p201, %s18, 1
      %p203 = scmp.lt.s32.totalorder %s200, 1
      %s204 = scalar_select %p203, %s200, 1
      %s205 = smul.addr %s202, 8
      %s206 = sadd.s32 %s204, %s205
      %s207 = smul.addr %s206, 8
      %s208 = scalar_lea.vmem %s3, %s207
      %s209 = smul.u32 2, %s19
      %v210 = vld [vmem:[%s1] sm:$0xff]
      %v211 = vld [vmem:[%s1 + $0x8] sm:$0xff]
      %v212 = vld [vmem:[%s1 + $0x10] sm:$0xff]
      %v213 = vld [vmem:[%s1 + $0x18] sm:$0xff]
      %v214 = vld [vmem:[%s198] sm:$0xff]
      %v215 = vld [vmem:[%s198 + $0x8] sm:$0xff]
      %v216 = vld [vmem:[%s198 + $0x10] sm:$0xff]
      %v217 = vld [vmem:[%s198 + $0x18] sm:$0xff]
      %v218 = vld [vmem:[%s198 + $0x20] sm:$0xff]
      %v219 = vld [vmem:[%s198 + $0x28] sm:$0xff]
      %v220 = vld [vmem:[%s198 + $0x30] sm:$0xff]
      %v221 = vld [vmem:[%s198 + $0x38] sm:$0xff]
      %v222 = vld [vmem:[%s198 + $0x40] sm:$0xff]
      %v223 = vld [vmem:[%s198 + $0x48] sm:$0xff]
      %v224 = vld [vmem:[%s2] sm:$0xff]
      %v225 = vld [vmem:[%s2 + $0x8] sm:$0xff]
      %v226 = vld [vmem:[%s2 + $0x10] sm:$0xff]
      %v227 = vld [vmem:[%s2 + $0x18] sm:$0xff]
      %229 = vset.pattern.permute.xlu0 0
      %230 = vperm.xlu0 %229, %v224
      %v231 = vpop.permute.xlu0 %230
      %234 = vset.pattern.permute.xlu0 0
      %235 = vperm.xlu0 %234, %v225
      %v236 = vpop.permute.xlu0 %235
      %239 = vset.pattern.permute.xlu0 0
      %240 = vperm.xlu0 %239, %v226
      %v241 = vpop.permute.xlu0 %240
      %244 = vset.pattern.permute.xlu0 0
      %245 = vperm.xlu0 %244, %v227
      %v246 = vpop.permute.xlu0 %245
      %vm248 = vcmask 326656
      %v250 = vsel %vm248, %v210, 0
      %v253 = vsel %vm248, %v211, 0
      %v256 = vsel %vm248, %v212, 0
      %v259 = vsel %vm248, %v213, 0
      %261 = vmatpush.msra.mxu0 0.0
      %262 = vmatpush.msra.mxu0 0.0
      %263 = vmatpush.msra.mxu0 0.0
      %264 = vmatpush.msra.mxu0 0.0
      %265 = vmatpush.msra.mxu0 0.0
      %266 = vmatpush.msra.mxu0 0.0
      %267 = vmatpush.msra.mxu0 0.0
      %268 = vmatpush.msra.mxu0 0.0
      %269 = vmatpush.msra.mxu0 0.0
      %270 = vmatpush.msra.mxu0 0.0
      %271 = vmatpush.msra.mxu0 0.0
      %272 = vmatpush.msra.mxu0 %v222
      %273 = vmatpush.msra.mxu0 %v220
      %274 = vmatpush.msra.mxu0 %v218
      %275 = vmatpush.msra.mxu0 %v216
      %276 = vmatpush.msra.mxu0 %v214
      %277 = vmatmul.f32.gmra.mxu0 %v250
      %v278 = vpop.f32.mrf.mxu0
      %v279 = vadd.f32 %v231, %v278
      %280 = vmatmul.f32.gmra.mxu0 %v253
      %v281 = vpop.f32.mrf.mxu0
      %v282 = vadd.f32 %v236, %v281
      %283 = vmatmul.f32.gmra.mxu0 %v256
      %v284 = vpop.f32.mrf.mxu0
      %v285 = vadd.f32 %v241, %v284
      %286 = vmatmul.f32.gmra.mxu0 %v259
      %v287 = vpop.f32.mrf.mxu0
      %v288 = vadd.f32 %v246, %v287
      %289 = vdwg.mxu0
      %290 = vmatpush.msra.mxu0 0.0
      %291 = vmatpush.msra.mxu0 0.0
      %292 = vmatpush.msra.mxu0 0.0
      %293 = vmatpush.msra.mxu0 0.0
      %294 = vmatpush.msra.mxu0 0.0
      %295 = vmatpush.msra.mxu0 0.0
      %296 = vmatpush.msra.mxu0 0.0
      %297 = vmatpush.msra.mxu0 0.0
      %298 = vmatpush.msra.mxu0 0.0
      %299 = vmatpush.msra.mxu0 0.0
      %300 = vmatpush.msra.mxu0 0.0
      %301 = vmatpush.msra.mxu0 %v223
      %302 = vmatpush.msra.mxu0 %v221
      %303 = vmatpush.msra.mxu0 %v219
      %304 = vmatpush.msra.mxu0 %v217
      %305 = vmatpush.msra.mxu0 %v215
      %306 = vmatmul.f32.gmra.mxu0 %v250
      %v307 = vpop.f32.mrf.mxu0
      %v308 = vadd.f32 %v231, %v307
      %309 = vmatmul.f32.gmra.mxu0 %v253
      %v310 = vpop.f32.mrf.mxu0
      %v311 = vadd.f32 %v236, %v310
      %312 = vmatmul.f32.gmra.mxu0 %v256
      %v313 = vpop.f32.mrf.mxu0
      %v314 = vadd.f32 %v241, %v313
      %315 = vmatmul.f32.gmra.mxu0 %v259
      %v316 = vpop.f32.mrf.mxu0
      %v317 = vadd.f32 %v246, %v316
      %318 = vdwg.mxu0
      %v319 = vmax.f32 %v279, 0.0
      %v320 = vmax.f32 %v308, 0.0
      %v321 = vmax.f32 %v282, 0.0
      %v322 = vmax.f32 %v311, 0.0
      %v323 = vmax.f32 %v285, 0.0
      %v324 = vmax.f32 %v314, 0.0
      %v325 = vmax.f32 %v288, 0.0
      %v326 = vmax.f32 %v317, 0.0
      %327 = vst [vmem:[%s208] sm:$0xff] %v319
      %328 = vst [vmem:[%s208 + $0x8] sm:$0xff] %v320
      %329 = vst [vmem:[%s208 + $0x10] sm:$0xff] %v321
      %330 = vst [vmem:[%s208 + $0x18] sm:$0xff] %v322
      %331 = vst [vmem:[%s208 + $0x20] sm:$0xff] %v323
      %332 = vst [vmem:[%s208 + $0x28] sm:$0xff] %v324
      %333 = vst [vmem:[%s208 + $0x30] sm:$0xff] %v325
      %334 = vst [vmem:[%s208 + $0x38] sm:$0xff] %v326
      %s335 = smul.u32 2, %s19
      %p336 = scmp.lt.s32.totalorder %s18, 1
      %s337 = scalar_select %p336, %s18, 1
      %p338 = scmp.lt.s32.totalorder %s335, 1
      %s339 = scalar_select %p338, %s335, 1
      %s340 = smul.addr %s337, 8
      %s341 = sadd.s32 %s339, %s340
      %s342 = smul.addr %s341, 8
      %s343 = scalar_lea.vmem %s3, %s342
      // Predicated region
      $region33: #{fresup_forward.5} parent=31 // pred_check
        %p344 = pneg %p116
      $region34: #{fresup_forward.5} parent=31 // pred_check_branch
        %346 = sbr.rel (%p344) target = $region36
      $region35: #{fresup_forward.5} parent=31 // pred_region
        %s347 = smul.u32 2, %s19
      $region36: #{fresup_forward.5} parent=31 // pred_fallthru
        _
    $region32: #{fresup_forward.5} parent=5 // pred_fallthru
      _
    %p348 = scmp.le.s32.totalorder 2, %s9
    // Predicated region
    $region37: #{fresup_forward.5} parent=5 // pred_check
      %p349 = pneg %p348
    $region38: #{fresup_forward.5} parent=5 // pred_check_branch
      %351 = sbr.rel (%p349) target = $region40
    $region39: #{fresup_forward.5} parent=5 // pred_region
      %s352 = ssub.s32 %s9, 2
      // Predicated region
      $region41: #{fresup_forward.5} parent=39 // pred_check
        %p353 = pneg %p122
      $region42: #{fresup_forward.5} parent=39 // pred_check_branch
        %355 = sbr.rel (%p353) target = $region44
      $region43: #{fresup_forward.5} parent=39 // pred_region
        %s356 = smul.u32 2, %s21
        %p357 = scmp.lt.s32.totalorder %s20, 1
        %s358 = scalar_select %p357, %s20, 1
        %p359 = scmp.lt.s32.totalorder %s356, 1
        %s360 = scalar_select %p359, %s356, 1
        %s361 = smul.addr %s358, 8
        %s362 = sadd.s32 %s360, %s361
        %s363 = smul.addr %s362, 8
        %s364 = scalar_lea.vmem %s3, %s363
      $region44: #{fresup_forward.5} parent=39 // pred_fallthru
        _
    $region40: #{fresup_forward.5} parent=5 // pred_fallthru
      _
  $region6: #{fresup_forward.5} parent=0 // loop_footer
    %s13 = sadd.s32 1, %s9
  $region7: #{fresup_forward.5} parent=0 // loop_footer_branch
    %8 = sbr.rel target = $region3
  $region8: #{fresup_forward.5} parent=0 // loop_exit
    _

// kernel: reverse.1
$region0: #{reverse.1}
  #allocation0 [shape = 's32[1]{0}', space=sflag, size = 0x4, scoped, tag = 'scoped memory for reverse.1']
  %s0 = inlined_call_operand.vmem [shape: f32[2,16,16,7], index: 0, kind: input, shape index: {}]
  %s1 = inlined_call_operand.vmem [shape: f32[2,16,16,7], index: 1, kind: output, shape index: {}]
  %s2 = scalar_lea.vmem %s0, 96
  %v3 = vld [vmem:[%s2] sm:$0xff]
  %4 = vst [vmem:[%s1] sm:$0xff] %v3
  %s5 = scalar_lea.vmem %s0, 208
  %v6 = vld [vmem:[%s5] sm:$0xff]
  %s7 = scalar_lea.vmem %s1, 112
  %8 = vst [vmem:[%s7] sm:$0xff] %v6
  %s9 = scalar_lea.vmem %s0, 80
  %v10 = vld [vmem:[%s9] sm:$0xff]
  %s11 = scalar_lea.vmem %s1, 16
  %12 = vst [vmem:[%s11] sm:$0xff] %v10
  %s13 = scalar_lea.vmem %s0, 192
  %v14 = vld [vmem:[%s13] sm:$0xff]
  %s15 = scalar_lea.vmem %s1, 128
  %16 = vst [vmem:[%s15] sm:$0xff] %v14
  %s17 = scalar_lea.vmem %s0, 64
  %v18 = vld [vmem:[%s17] sm:$0xff]
  %s19 = scalar_lea.vmem %s1, 32
  %20 = vst [vmem:[%s19] sm:$0xff] %v18
  %s21 = scalar_lea.vmem %s0, 176
  %v22 = vld [vmem:[%s21] sm:$0xff]
  %s23 = scalar_lea.vmem %s1, 144
  %24 = vst [vmem:[%s23] sm:$0xff] %v22
  %s25 = scalar_lea.vmem %s0, 48
  %v26 = vld [vmem:[%s25] sm:$0xff]
  %s27 = scalar_lea.vmem %s1, 48
  %28 = vst [vmem:[%s27] sm:$0xff] %v26
  %s29 = scalar_lea.vmem %s0, 160
  %v30 = vld [vmem:[%s29] sm:$0xff]
  %s31 = scalar_lea.vmem %s1, 160
  %32 = vst [vmem:[%s31] sm:$0xff] %v30
  %s33 = scalar_lea.vmem %s0, 32
  %v34 = vld [vmem:[%s33] sm:$0xff]
  %s35 = scalar_lea.vmem %s1, 64
  %36 = vst [vmem:[%s35] sm:$0xff] %v34
  %s37 = scalar_lea.vmem %s0, 144
  %v38 = vld [vmem:[%s37] sm:$0xff]
  %s39 = scalar_lea.vmem %s1, 176
  %40 = vst [vmem:[%s39] sm:$0xff] %v38
  %s41 = scalar_lea.vmem %s0, 16
  %v42 = vld [vmem:[%s41] sm:$0xff]
  %s43 = scalar_lea.vmem %s1, 80
  %44 = vst [vmem:[%s43] sm:$0xff] %v42
  %s45 = scalar_lea.vmem %s0, 128
  %v46 = vld [vmem:[%s45] sm:$0xff]
  %s47 = scalar_lea.vmem %s1, 192
  %48 = vst [vmem:[%s47] sm:$0xff] %v46
  %v49 = vld [vmem:[%s0] sm:$0xff]
  %s50 = scalar_lea.vmem %s1, 96
  %51 = vst [vmem:[%s50] sm:$0xff] %v49
  %s52 = scalar_lea.vmem %s0, 112
  %v53 = vld [vmem:[%s52] sm:$0xff]
  %s54 = scalar_lea.vmem %s1, 208
  %55 = vst [vmem:[%s54] sm:$0xff] %v53
  %s56 = scalar_lea.vmem %s0, 104
  %v57 = vld [vmem:[%s56] sm:$0xff]
  %s58 = scalar_lea.vmem %s1, 8
  %59 = vst [vmem:[%s58] sm:$0xff] %v57
  %s60 = scalar_lea.vmem %s0, 216
  %v61 = vld [vmem:[%s60] sm:$0xff]
  %s62 = scalar_lea.vmem %s1, 120
  %63 = vst [vmem:[%s62] sm:$0xff] %v61
  %s64 = scalar_lea.vmem %s0, 88
  %v65 = vld [vmem:[%s64] sm:$0xff]
  %s66 = scalar_lea.vmem %s1, 24
  %67 = vst [vmem:[%s66] sm:$0xff] %v65
  %s68 = scalar_lea.vmem %s0, 200
  %v69 = vld [vmem:[%s68] sm:$0xff]
  %s70 = scalar_lea.vmem %s1, 136
  %71 = vst [vmem:[%s70] sm:$0xff] %v69
  %s72 = scalar_lea.vmem %s0, 72
  %v73 = vld [vmem:[%s72] sm:$0xff]
  %s74 = scalar_lea.vmem %s1, 40
  %75 = vst [vmem:[%s74] sm:$0xff] %v73
  %s76 = scalar_lea.vmem %s0, 184
  %v77 = vld [vmem:[%s76] sm:$0xff]
  %s78 = scalar_lea.vmem %s1, 152
  %79 = vst [vmem:[%s78] sm:$0xff] %v77
  %s80 = scalar_lea.vmem %s0, 56
  %v81 = vld [vmem:[%s80] sm:$0xff]
  %s82 = scalar_lea.vmem %s1, 56
  %83 = vst [vmem:[%s82] sm:$0xff] %v81
  %s84 = scalar_lea.vmem %s0, 168
  %v85 = vld [vmem:[%s84] sm:$0xff]
  %s86 = scalar_lea.vmem %s1, 168
  %87 = vst [vmem:[%s86] sm:$0xff] %v85
  %s88 = scalar_lea.vmem %s0, 40
  %v89 = vld [vmem:[%s88] sm:$0xff]
  %s90 = scalar_lea.vmem %s1, 72
  %91 = vst [vmem:[%s90] sm:$0xff] %v89
  %s92 = scalar_lea.vmem %s0, 152
  %v93 = vld [vmem:[%s92] sm:$0xff]
  %s94 = scalar_lea.vmem %s1, 184
  %95 = vst [vmem:[%s94] sm:$0xff] %v93
  %s96 = scalar_lea.vmem %s0, 24
  %v97 = vld [vmem:[%s96] sm:$0xff]
  %s98 = scalar_lea.vmem %s1, 88
  %99 = vst [vmem:[%s98] sm:$0xff] %v97
  %s100 = scalar_lea.vmem %s0, 136
  %v101 = vld [vmem:[%s100] sm:$0xff]
  %s102 = scalar_lea.vmem %s1, 200
  %103 = vst [vmem:[%s102] sm:$0xff] %v101
  %s104 = scalar_lea.vmem %s0, 8
  %v105 = vld [vmem:[%s104] sm:$0xff]
  %s106 = scalar_lea.vmem %s1, 104
  %107 = vst [vmem:[%s106] sm:$0xff] %v105
  %s108 = scalar_lea.vmem %s0, 120
  %v109 = vld [vmem:[%s108] sm:$0xff]
  %s110 = scalar_lea.vmem %s1, 216
  %111 = vst [vmem:[%s110] sm:$0xff] %v109

// kernel: fresup_forward.6
$region0: #{fresup_forward.6}
  #allocation0 [shape = 'u32[]', space=smem, size = 0x4, offset = 0x4, fixed_abs, tag = 'smem constant byte address 0x4 - core index']
  #allocation1 [shape = 'u32[72,128]{1,0:T(1,128)}', space=vmem, size = 0x9000, scoped, tag = 'internal scratch']
  #allocation2 [shape = 'f32[216,256]{1,0:T(8,128)}', space=vmem, size = 0x36000, scoped, tag = 'scratch operand']
  %s0 = inlined_call_operand.vmem [shape: f32[2,24,290], index: 0, kind: input, shape index: {}]
  %s1 = inlined_call_operand.vmem [shape: f32[16,216], index: 1, kind: input, shape index: {}]
  %s2 = inlined_call_operand.vmem [shape: f32[16,1], index: 2, kind: input, shape index: {}]
  %s3 = inlined_call_operand.vmem [shape: f32[2,16,256], index: 3, kind: output, shape index: {}]
  %s4 = sld [smem:[#allocation0]]
  $region45: #{fresup_forward.6} parent=0
    _
  %s6 = ssub.s32 1, %s4
  %s7 = scalar_select 0, %s6, %s4
  loop: start=0, step=1, limit=4
  $region2: #{fresup_forward.6} parent=0 // loop_pre_header
    _
  $region3: #{fresup_forward.6} parent=0 // loop_header
    %s9 = sphi 0, %s13
    %p10 = scmp.ge.s32.totalorder %s9, 4
    %s19 = sphi 0, %s21
    %s22 = sphi 0, %s19
    %s23 = sphi 0, %s22
    %s39 = sphi 0, %s23
    %s43 = sphi 0, %s43
    %s45 = sphi 0, %s43
    %s46 = sphi 0, %s45
    %s60 = sphi 0, %s46
    %s64 = sphi 0, %s64
    %s66 = sphi 0, %s64
    %s67 = sphi 0, %s66
    %s81 = sphi 0, %s67
    %s87 = sphi 0, %s89
    %s90 = sphi 0, %s87
    %s91 = sphi 0, %s90
    %s107 = sphi 0, %s91
  $region4: #{fresup_forward.6} parent=0 // loop_header_branch
    %12 = sbr.rel (%p10) target = $region8
  $region5: #{fresup_forward.6} parent=0 // loop_body
    %s14 = ssub.s32 %s9, 1
    %s15 = ssub.s32 %s9, 2
    %s16 = sadd.s32 %s9, 1
    %s17 = ssub.s32 %s9, %s16
    %p18 = scmp.eq.s32.totalorder %s17, 0
    %s20 = sadd.s32 %s19, 1
    %s21 = scalar_select %p18, %s19, %s20
    %p24 = pneg %p18
    %p25 = scmp.eq.s32.totalorder %s9, 1
    %p26 = por %p24, %p25
    %p27 = scmp.ne.s32.totalorder %s19, %s22
    %p28 = scmp.eq.s32.totalorder %s9, 0
    %p29 = por %p27, %p28
    %p30 = scmp.ne.s32.totalorder %s19, %s22
    %p31 = scmp.eq.s32.totalorder %s14, 1
    %p32 = por %p30, %p31
    %p33 = scmp.ne.s32.totalorder %s22, %s23
    %p34 = scmp.eq.s32.totalorder %s14, 0
    %p35 = por %p33, %p34
    %p36 = scmp.ne.s32.totalorder %s22, %s23
    %p37 = scmp.eq.s32.totalorder %s15, 1
    %p38 = por %p36, %p37
    %p40 = scmp.ne.s32.totalorder %s23, %s39
    %p41 = scmp.eq.s32.totalorder %s15, 0
    %p42 = por %p40, %p41
    %s44 = sadd.s32 %s43, 1
    %p47 = scmp.eq.s32.totalorder %s9, 1
    %p48 = scmp.ne.s32.totalorder %s43, %s45
    %p49 = scmp.eq.s32.totalorder %s9, 0
    %p50 = por %p48, %p49
    %p51 = scmp.ne.s32.totalorder %s43, %s45
    %p52 = scmp.eq.s32.totalorder %s14, 1
    %p53 = por %p51, %p52
    %p54 = scmp.ne.s32.totalorder %s45, %s46
    %p55 = scmp.eq.s32.totalorder %s14, 0
    %p56 = por %p54, %p55
    %p57 = scmp.ne.s32.totalorder %s45, %s46
    %p58 = scmp.eq.s32.totalorder %s15, 1
    %p59 = por %p57, %p58
    %p61 = scmp.ne.s32.totalorder %s46, %s60
    %p62 = scmp.eq.s32.totalorder %s15, 0
    %p63 = por %p61, %p62
    %s65 = sadd.s32 %s64, 1
    %p68 = scmp.eq.s32.totalorder %s9, 1
    %p69 = scmp.ne.s32.totalorder %s64, %s66
    %p70 = scmp.eq.s32.totalorder %s9, 0
    %p71 = por %p69, %p70
    %p72 = scmp.ne.s32.totalorder %s64, %s66
    %p73 = scmp.eq.s32.totalorder %s14, 1
    %p74 = por %p72, %p73
    %p75 = scmp.ne.s32.totalorder %s66, %s67
    %p76 = scmp.eq.s32.totalorder %s14, 0
    %p77 = por %p75, %p76
    %p78 = scmp.ne.s32.totalorder %s66, %s67
    %p79 = scmp.eq.s32.totalorder %s15, 1
    %p80 = por %p78, %p79
    %p82 = scmp.ne.s32.totalorder %s67, %s81
    %p83 = scmp.eq.s32.totalorder %s15, 0
    %p84 = por %p82, %p83
    %s85 = ssub.s32 %s9, %s16
    %p86 = scmp.eq.s32.totalorder %s85, 0
    %s88 = sadd.s32 %s87, 1
    %s89 = scalar_select %p86, %s87, %s88
    %p92 = pneg %p86
    %p93 = scmp.eq.s32.totalorder %s9, 1
    %p94 = por %p92, %p93
    %p95 = scmp.ne.s32.totalorder %s87, %s90
    %p96 = scmp.eq.s32.totalorder %s9, 0
    %p97 = por %p95, %p96
    %p98 = scmp.ne.s32.totalorder %s87, %s90
    %p99 = scmp.eq.s32.totalorder %s14, 1
    %p100 = por %p98, %p99
    %p101 = scmp.ne.s32.totalorder %s90, %s91
    %p102 = scmp.eq.s32.totalorder %s14, 0
    %p103 = por %p101, %p102
    %p104 = scmp.ne.s32.totalorder %s90, %s91
    %p105 = scmp.eq.s32.totalorder %s15, 1
    %p106 = por %p104, %p105
    %p108 = scmp.ne.s32.totalorder %s91, %s107
    %p109 = scmp.eq.s32.totalorder %s15, 0
    %p110 = por %p108, %p109
    %p111 = scmp.le.s32.totalorder 1, %s9
    %p112 = scmp.lt.s32.totalorder %s9, 3
    %p113 = pnand %p111, %p112
    %p114 = pneg %p113
    // Predicated region
    $region9: #{fresup_forward.6} parent=5 // pred_check
      _
    $region10: #{fresup_forward.6} parent=5 // pred_check_branch
      %116 = sbr.rel (%p113) target = $region12
    $region11: #{fresup_forward.6} parent=5 // pred_region
      %s117 = ssub.s32 %s9, 1
      // Predicated region
      $region13: #{fresup_forward.6} parent=11 // pred_check
        %p118 = pneg %p56
      $region14: #{fresup_forward.6} parent=11 // pred_check_branch
        %120 = sbr.rel (%p118) target = $region16
      $region15: #{fresup_forward.6} parent=11 // pred_region
        _
      $region16: #{fresup_forward.6} parent=11 // pred_fallthru
        _
      // Predicated region
      $region17: #{fresup_forward.6} parent=11 // pred_check
        %p121 = pneg %p77
      $region18: #{fresup_forward.6} parent=11 // pred_check_branch
        %123 = sbr.rel (%p121) target = $region20
      $region19: #{fresup_forward.6} parent=11 // pred_region
        _
      $region20: #{fresup_forward.6} parent=11 // pred_fallthru
        _
    $region12: #{fresup_forward.6} parent=5 // pred_fallthru
      _
    %p124 = scmp.lt.s32.totalorder %s9, 2
    // Predicated region
    $region21: #{fresup_forward.6} parent=5 // pred_check
      %p125 = pneg %p124
    $region22: #{fresup_forward.6} parent=5 // pred_check_branch
      %127 = sbr.rel (%p125) target = $region24
    $region23: #{fresup_forward.6} parent=5 // pred_region
      // Predicated region
      $region25: #{fresup_forward.6} parent=23 // pred_check
        %p128 = pneg %p29
      $region26: #{fresup_forward.6} parent=23 // pred_check_branch
        %130 = sbr.rel (%p128) target = $region28
      $region27: #{fresup_forward.6} parent=23 // pred_region
        %p131 = scmp.lt.s32.totalorder %s9, 1
        %s132 = scalar_select %p131, %s9, 1
        %s133 = smul.addr %s132, 9
        %s134 = smul.addr %s133, 8
        %s135 = scalar_lea.vmem %s0, %s134
      $region28: #{fresup_forward.6} parent=23 // pred_fallthru
        _
    $region24: #{fresup_forward.6} parent=5 // pred_fallthru
      _
    %p136 = scmp.le.s32.totalorder 1, %s9
    %p137 = scmp.lt.s32.totalorder %s9, 3
    %p138 = pnand %p136, %p137
    %p139 = pneg %p138
    // Predicated region
    $region29: #{fresup_forward.6} parent=5 // pred_check
      _
    $region30: #{fresup_forward.6} parent=5 // pred_check_branch
      %141 = sbr.rel (%p138) target = $region32
    $region31: #{fresup_forward.6} parent=5 // pred_region
      %s142 = ssub.s32 %s9, 1
      %p143 = scmp.lt.s32.totalorder %s14, 1
      %s144 = scalar_select %p143, %s14, 1
      %s145 = smul.addr %s144, 9
      %s146 = smul.addr %s145, 8
      %s147 = scalar_lea.vmem %s0, %s146
      %p148 = pneg %p35
      %p149 = pneg %p32
      %p150 = pneg %p56
      %p151 = pneg %p53
      %p152 = pneg %p77
      %p153 = pneg %p74
      %p154 = pneg %p103
      %p155 = pneg %p100
      %p156 = scmp.lt.s32.totalorder %s14, 1
      %s157 = scalar_select %p156, %s14, 1
      %s158 = smul.addr %s157, 4
      %s159 = smul.addr %s158, 8
      %s160 = scalar_lea.vmem %s3, %s159
      %p161 = scmp.lt.s32.totalorder %s14, 1
      %s162 = scalar_select %p161, %s14, 1
      %s163 = smul.addr %s162, 9
      %s164 = smul.addr %s163, 8
      %s165 = scalar_lea.vmem %s0, %s164
      %p166 = scmp.lt.s32.totalorder %s14, 1
      %s167 = scalar_select %p166, %s14, 1
      %s168 = smul.addr %s167, 4
      %s169 = smul.addr %s168, 8
      %s170 = scalar_lea.vmem %s3, %s169
      %v171 = vlaneseq
      %v172 = vand.u32 %v171, 127
      %v173 = vadd.s32 %v172, 128
      %vm174 = vcmp.lt.s32.totalorder %v172, 0
      %v175 = vsub.s32 0, %v172
      %v176 = vsel %vm174, %v175, %v172
      %v177 = vshrl.u32 %v176, 4
      %v178 = vand.u32 %v176, 15
      %v179 = vsub.s32 0, %v178
      %v180 = vsel %vm174, %v179, %v178
      %vm181 = vcmp.lt.s32.totalorder %v173, 0
      %v182 = vsub.s32 0, %v173
      %v183 = vsel %vm181, %v182, %v173
      %v184 = vshrl.u32 %v183, 4
      %v185 = vand.u32 %v183, 15
      %v186 = vsub.s32 0, %v185
      %v187 = vsel %vm181, %v186, %v185
      %vm188 = vcmp.ne.s32.totalorder %v180, 0
      %vm189 = vcmp.ne.s32.totalorder %v187, 0
      %vm190 = vcmp.lt.s32.totalorder %v180, 0
      %vm191 = vcmp.lt.s32.totalorder %v187, 0
      %vm192 = vmand %vm190, %vm188
      %vm193 = vmand %vm191, %vm189
      %v194 = vadd.s32 %v180, 16
      %v195 = vadd.s32 %v187, 16
      %v196 = vsel %vm192, %v194, %v180
      %v197 = vsel %vm193, %v195, %v187
      %v198 = vld [vmem:[%s165] sm:$0xff]
      %v199 = vld [vmem:[%s165 + $0x8] sm:$0xff]
      %v200 = vld [vmem:[%s165 + $0x18] sm:$0xff]
      %v201 = vld [vmem:[%s165 + $0x20] sm:$0xff]
      %v202 = vld [vmem:[%s165 + $0x30] sm:$0xff]
      %v203 = vld [vmem:[%s165 + $0x38] sm:$0xff]
      %vm204 = vcmp.ge.s32.totalorder %v196, 1
      %vm205 = vcmp.ge.s32.totalorder %v197, 1
      %v206 = vsel %vm204, 1, 0
      %v207 = vsel %vm205, 1, 0
      %vm208 = vcmp.eq.s32.totalorder %v206, 1
      %vm209 = vcmp.eq.s32.totalorder %v207, 1
      %v210 = vsel %vm208, %v198, 0.0
      %v211 = vsel %vm209, %v199, 0.0
      %v212 = vsel %vm208, %v200, 0.0
      %v213 = vsel %vm209, %v201, 0.0
      %v214 = vsel %vm208, %v202, 0.0
      %v215 = vsel %vm209, %v203, 0.0
      %216 = vst [vmem:[#allocation2] sm:$0xff] %v210
      %217 = vst [vmem:[#allocation2 + $0x8] sm:$0xff] %v211
      %218 = vst [vmem:[#allocation2 + $0x10] sm:$0xff] %v212
      %219 = vst [vmem:[#allocation2 + $0x18] sm:$0xff] %v213
      %220 = vst [vmem:[#allocation2 + $0x20] sm:$0xff] %v214
      %221 = vst [vmem:[#allocation2 + $0x28] sm:$0xff] %v215
      %v222 = vld [vmem:[%s165] sm:$0xff]
      %v223 = vld [vmem:[%s165 + $0x8] sm:$0xff]
      %v224 = vld [vmem:[%s165 + $0x10] sm:$0xff]
      %v225 = vld [vmem:[%s165 + $0x18] sm:$0xff]
      %v226 = vld [vmem:[%s165 + $0x20] sm:$0xff]
      %v227 = vld [vmem:[%s165 + $0x28] sm:$0xff]
      %v228 = vld [vmem:[%s165 + $0x30] sm:$0xff]
      %v229 = vld [vmem:[%s165 + $0x38] sm:$0xff]
      %v230 = vld [vmem:[%s165 + $0x40] sm:$0xff]
      %240 = vrot.lane.b32.xlu0 %v222, 127
      %v241 = vpop.permute.xlu0 %240
      %242 = vrot.lane.b32.xlu0 %v223, 127
      %v243 = vpop.permute.xlu0 %242
      %244 = vrot.lane.b32.xlu0 %v224, 127
      %v245 = vpop.permute.xlu0 %244
      %246 = vrot.lane.b32.xlu0 %v225, 127
      %v247 = vpop.permute.xlu0 %246
      %248 = vrot.lane.b32.xlu0 %v226, 127
      %v249 = vpop.permute.xlu0 %248
      %250 = vrot.lane.b32.xlu0 %v227, 127
      %v251 = vpop.permute.xlu0 %250
      %252 = vrot.lane.b32.xlu0 %v228, 127
      %v253 = vpop.permute.xlu0 %252
      %254 = vrot.lane.b32.xlu0 %v229, 127
      %v255 = vpop.permute.xlu0 %254
      %256 = vrot.lane.b32.xlu0 %v230, 127
      %v257 = vpop.permute.xlu0 %256
      %vm258 = vcmask 1039360
      %v259 = vsel %vm258, %v241, %v243
      %v260 = vsel %vm258, %v243, %v245
      %v261 = vsel %vm258, %v247, %v249
      %v262 = vsel %vm258, %v249, %v251
      %v263 = vsel %vm258, %v253, %v255
      %v264 = vsel %vm258, %v255, %v257
      %271 = vst [vmem:[#allocation2 + $0x30] sm:$0xff] %v259
      %272 = vst [vmem:[#allocation2 + $0x38] sm:$0xff] %v260
      %273 = vst [vmem:[#allocation2 + $0x40] sm:$0xff] %v261
      %274 = vst [vmem:[#allocation2 + $0x48] sm:$0xff] %v262
      %275 = vst [vmem:[#allocation2 + $0x50] sm:$0xff] %v263
      %276 = vst [vmem:[#allocation2 + $0x58] sm:$0xff] %v264
      %v277 = vld [vmem:[%s165] sm:$0xff]
      %v278 = vld [vmem:[%s165 + $0x8] sm:$0xff]
      %v279 = vld [vmem:[%s165 + $0x10] sm:$0xff]
      %v280 = vld [vmem:[%s165 + $0x18] sm:$0xff]
      %v281 = vld [vmem:[%s165 + $0x20] sm:$0xff]
      %v282 = vld [vmem:[%s165 + $0x28] sm:$0xff]
      %v283 = vld [vmem:[%s165 + $0x30] sm:$0xff]
      %v284 = vld [vmem:[%s165 + $0x38] sm:$0xff]
      %v285 = vld [vmem:[%s165 + $0x40] sm:$0xff]
      %vm286 = vcmp.lt.s32.totalorder %v196, 15
      %vm287 = vcmp.lt.s32.totalorder %v197, 15
      %v288 = vsel %vm286, 1, 0
      %v289 = vsel %vm287, 1, 0
      %vm290 = vcmp.eq.s32.totalorder %v288, 1
      %vm291 = vcmp.eq.s32.totalorder %v289, 1
      %301 = vrot.lane.b32.xlu0 %v277, 126
      %v302 = vpop.permute.xlu0 %301
      %303 = vrot.lane.b32.xlu0 %v278, 126
      %v304 = vpop.permute.xlu0 %303
      %305 = vrot.lane.b32.xlu0 %v279, 126
      %v306 = vpop.permute.xlu0 %305
      %307 = vrot.lane.b32.xlu0 %v280, 126
      %v308 = vpop.permute.xlu0 %307
      %309 = vrot.lane.b32.xlu0 %v281, 126
      %v310 = vpop.permute.xlu0 %309
      %311 = vrot.lane.b32.xlu0 %v282, 126
      %v312 = vpop.permute.xlu0 %311
      %313 = vrot.lane.b32.xlu0 %v283, 126
      %v314 = vpop.permute.xlu0 %313
      %315 = vrot.lane.b32.xlu0 %v284, 126
      %v316 = vpop.permute.xlu0 %315
      %317 = vrot.lane.b32.xlu0 %v285, 126
      %v318 = vpop.permute.xlu0 %317
      %vm319 = vcmask 1031168
      %v320 = vsel %vm319, %v302, %v304
      %v321 = vsel %vm319, %v304, %v306
      %v322 = vsel %vm319, %v308, %v310
      %v323 = vsel %vm319, %v310, %v312
      %v324 = vsel %vm319, %v314, %v316
      %v325 = vsel %vm319, %v316, %v318
      %v332 = vsel %vm290, %v320, 0.0
      %v333 = vsel %vm291, %v321, 0.0
      %v334 = vsel %vm290, %v322, 0.0
      %v335 = vsel %vm291, %v323, 0.0
      %v336 = vsel %vm290, %v324, 0.0
      %v337 = vsel %vm291, %v325, 0.0
      %338 = vst [vmem:[#allocation2 + $0x60] sm:$0xff] %v332
      %339 = vst [vmem:[#allocation2 + $0x68] sm:$0xff] %v333
      %340 = vst [vmem:[#allocation2 + $0x70] sm:$0xff] %v334
      %341 = vst [vmem:[#allocation2 + $0x78] sm:$0xff] %v335
      %342 = vst [vmem:[#allocation2 + $0x80] sm:$0xff] %v336
      %343 = vst [vmem:[#allocation2 + $0x88] sm:$0xff] %v337
      %v344 = vld [vmem:[%s165] sm:$0xff]
      %v345 = vld [vmem:[%s165 + $0x8] sm:$0xff]
      %v346 = vld [vmem:[%s165 + $0x10] sm:$0xff]
      %v347 = vld [vmem:[%s165 + $0x18] sm:$0xff]
      %v348 = vld [vmem:[%s165 + $0x20] sm:$0xff]
      %v349 = vld [vmem:[%s165 + $0x28] sm:$0xff]
      %v350 = vld [vmem:[%s165 + $0x30] sm:$0xff]
      %v351 = vld [vmem:[%s165 + $0x38] sm:$0xff]
      %v352 = vld [vmem:[%s165 + $0x40] sm:$0xff]
      %362 = vrot.lane.b32.xlu0 %v344, 112
      %v363 = vpop.permute.xlu0 %362
      %364 = vrot.lane.b32.xlu0 %v345, 112
      %v365 = vpop.permute.xlu0 %364
      %366 = vrot.lane.b32.xlu0 %v346, 112
      %v367 = vpop.permute.xlu0 %366
      %368 = vrot.lane.b32.xlu0 %v347, 112
      %v369 = vpop.permute.xlu0 %368
      %370 = vrot.lane.b32.xlu0 %v348, 112
      %v371 = vpop.permute.xlu0 %370
      %372 = vrot.lane.b32.xlu0 %v349, 112
      %v373 = vpop.permute.xlu0 %372
      %374 = vrot.lane.b32.xlu0 %v350, 112
      %v375 = vpop.permute.xlu0 %374
      %376 = vrot.lane.b32.xlu0 %v351, 112
      %v377 = vpop.permute.xlu0 %376
      %378 = vrot.lane.b32.xlu0 %v352, 112
      %v379 = vpop.permute.xlu0 %378
      %vm380 = vcmask 916480
      %v381 = vsel %vm380, %v363, %v365
      %v382 = vsel %vm380, %v365, %v367
      %v383 = vsel %vm380, %v369, %v371
      %v384 = vsel %vm380, %v371, %v373
      %v385 = vsel %vm380, %v375, %v377
      %v386 = vsel %vm380, %v377, %v379
      %v393 = vsel %vm208, %v381, 0.0
      %v394 = vsel %vm209, %v382, 0.0
      %v395 = vsel %vm208, %v383, 0.0
      %v396 = vsel %vm209, %v384, 0.0
      %v397 = vsel %vm208, %v385, 0.0
      %v398 = vsel %vm209, %v386, 0.0
      %399 = vst [vmem:[#allocation2 + $0x90] sm:$0xff] %v393
      %400 = vst [vmem:[#allocation2 + $0x98] sm:$0xff] %v394
      %401 = vst [vmem:[#allocation2 + $0xa0] sm:$0xff] %v395
      %402 = vst [vmem:[#allocation2 + $0xa8] sm:$0xff] %v396
      %403 = vst [vmem:[#allocation2 + $0xb0] sm:$0xff] %v397
      %404 = vst [vmem:[#allocation2 + $0xb8] sm:$0xff] %v398
      %v405 = vld [vmem:[%s165] sm:$0xff]
      %v406 = vld [vmem:[%s165 + $0x8] sm:$0xff]
      %v407 = vld [vmem:[%s165 + $0x10] sm:$0xff]
      %v408 = vld [vmem:[%s165 + $0x18] sm:$0xff]
      %v409 = vld [vmem:[%s165 + $0x20] sm:$0xff]
      %v410 = vld [vmem:[%s165 + $0x28] sm:$0xff]
      %v411 = vld [vmem:[%s165 + $0x30] sm:$0xff]
      %v412 = vld [vmem:[%s165 + $0x38] sm:$0xff]
      %v413 = vld [vmem:[%s165 + $0x40] sm:$0xff]
      %423 = vrot.lane.b32.xlu0 %v405, 111
      %v424 = vpop.permute.xlu0 %423
      %425 = vrot.lane.b32.xlu0 %v406, 111
      %v426 = vpop.permute.xlu0 %425
      %427 = vrot.lane.b32.xlu0 %v407, 111
      %v428 = vpop.permute.xlu0 %427
      %429 = vrot.lane.b32.xlu0 %v408, 111
      %v430 = vpop.permute.xlu0 %429
      %431 = vrot.lane.b32.xlu0 %v409, 111
      %v432 = vpop.permute.xlu0 %431
      %433 = vrot.lane.b32.xlu0 %v410, 111
      %v434 = vpop.permute.xlu0 %433
      %435 = vrot.lane.b32.xlu0 %v411, 111
      %v436 = vpop.permute.xlu0 %435
      %437 = vrot.lane.b32.xlu0 %v412, 111
      %v438 = vpop.permute.xlu0 %437
      %439 = vrot.lane.b32.xlu0 %v413, 111
      %v440 = vpop.permute.xlu0 %439
      %vm441 = vcmask 908288
      %v442 = vsel %vm441, %v424, %v426
      %v443 = vsel %vm441, %v426, %v428
      %v444 = vsel %vm441, %v430, %v432
      %v445 = vsel %vm441, %v432, %v434
      %v446 = vsel %vm441, %v436, %v438
      %v447 = vsel %vm441, %v438, %v440
      %454 = vst [vmem:[#allocation2 + $0xc0] sm:$0xff] %v442
      %455 = vst [vmem:[#allocation2 + $0xc8] sm:$0xff] %v443
      %456 = vst [vmem:[#allocation2 + $0xd0] sm:$0xff] %v444
      %457 = vst [vmem:[#allocation2 + $0xd8] sm:$0xff] %v445
      %458 = vst [vmem:[#allocation2 + $0xe0] sm:$0xff] %v446
      %459 = vst [vmem:[#allocation2 + $0xe8] sm:$0xff] %v447
      %v460 = vld [vmem:[%s165] sm:$0xff]
      %v461 = vld [vmem:[%s165 + $0x8] sm:$0xff]
      %v462 = vld [vmem:[%s165 + $0x10] sm:$0xff]
      %v463 = vld [vmem:[%s165 + $0x18] sm:$0xff]
      %v464 = vld [vmem:[%s165 + $0x20] sm:$0xff]
      %v465 = vld [vmem:[%s165 + $0x28] sm:$0xff]
      %v466 = vld [vmem:[%s165 + $0x30] sm:$0xff]
      %v467 = vld [vmem:[%s165 + $0x38] sm:$0xff]
      %v468 = vld [vmem:[%s165 + $0x40] sm:$0xff]
      %478 = vrot.lane.b32.xlu0 %v460, 110
      %v479 = vpop.permute.xlu0 %478
      %480 = vrot.lane.b32.xlu0 %v461, 110
      %v481 = vpop.permute.xlu0 %480
      %482 = vrot.lane.b32.xlu0 %v462, 110
      %v483 = vpop.permute.xlu0 %482
      %484 = vrot.lane.b32.xlu0 %v463, 110
      %v485 = vpop.permute.xlu0 %484
      %486 = vrot.lane.b32.xlu0 %v464, 110
      %v487 = vpop.permute.xlu0 %486
      %488 = vrot.lane.b32.xlu0 %v465, 110
      %v489 = vpop.permute.xlu0 %488
      %490 = vrot.lane.b32.xlu0 %v466, 110
      %v491 = vpop.permute.xlu0 %490
      %492 = vrot.lane.b32.xlu0 %v467, 110
      %v493 = vpop.permute.xlu0 %492
      %494 = vrot.lane.b32.xlu0 %v468, 110
      %v495 = vpop.permute.xlu0 %494
      %vm496 = vcmask 900096
      %v497 = vsel %vm496, %v479, %v481
      %v498 = vsel %vm496, %v481, %v483
      %v499 = vsel %vm496, %v485, %v487
      %v500 = vsel %vm496, %v487, %v489
      %v501 = vsel %vm496, %v491, %v493
      %v502 = vsel %vm496, %v493, %v495
      %v509 = vsel %vm290, %v497, 0.0
      %v510 = vsel %vm291, %v498, 0.0
      %v511 = vsel %vm290, %v499, 0.0
      %v512 = vsel %vm291, %v500, 0.0
      %v513 = vsel %vm290, %v501, 0.0
      %v514 = vsel %vm291, %v502, 0.0
      %515 = vst [vmem:[#allocation2 + $0xf0] sm:$0xff] %v509
      %516 = vst [vmem:[#allocation2 + $0xf8] sm:$0xff] %v510
      %517 = vst [vmem:[#allocation2 + $0x100] sm:$0xff] %v511
      %518 = vst [vmem:[#allocation2 + $0x108] sm:$0xff] %v512
      %519 = vst [vmem:[#allocation2 + $0x110] sm:$0xff] %v513
      %520 = vst [vmem:[#allocation2 + $0x118] sm:$0xff] %v514
      %v521 = vld [vmem:[%s165] sm:$0xff]
      %v522 = vld [vmem:[%s165 + $0x8] sm:$0xff]
      %v523 = vld [vmem:[%s165 + $0x10] sm:$0xff]
      %v524 = vld [vmem:[%s165 + $0x18] sm:$0xff]
      %v525 = vld [vmem:[%s165 + $0x20] sm:$0xff]
      %v526 = vld [vmem:[%s165 + $0x28] sm:$0xff]
      %v527 = vld [vmem:[%s165 + $0x30] sm:$0xff]
      %v528 = vld [vmem:[%s165 + $0x38] sm:$0xff]
      %v529 = vld [vmem:[%s165 + $0x40] sm:$0xff]
      %539 = vrot.lane.b32.xlu0 %v521, 96
      %v540 = vpop.permute.xlu0 %539
      %541 = vrot.lane.b32.xlu0 %v522, 96
      %v542 = vpop.permute.xlu0 %541
      %543 = vrot.lane.b32.xlu0 %v523, 96
      %v544 = vpop.permute.xlu0 %543
      %545 = vrot.lane.b32.xlu0 %v524, 96
      %v546 = vpop.permute.xlu0 %545
      %547 = vrot.lane.b32.xlu0 %v525, 96
      %v548 = vpop.permute.xlu0 %547
      %549 = vrot.lane.b32.xlu0 %v526, 96
      %v550 = vpop.permute.xlu0 %549
      %551 = vrot.lane.b32.xlu0 %v527, 96
      %v552 = vpop.permute.xlu0 %551
      %553 = vrot.lane.b32.xlu0 %v528, 96
      %v554 = vpop.permute.xlu0 %553
      %555 = vrot.lane.b32.xlu0 %v529, 96
      %v556 = vpop.permute.xlu0 %555
      %vm557 = vcmask 785408
      %v558 = vsel %vm557, %v540, %v542
      %v559 = vsel %vm557, %v542, %v544
      %v560 = vsel %vm557, %v546, %v548
      %v561 = vsel %vm557, %v548, %v550
      %v562 = vsel %vm557, %v552, %v554
      %v563 = vsel %vm557, %v554, %v556
      %v570 = vsel %vm208, %v558, 0.0
      %v571 = vsel %vm209, %v559, 0.0
      %v572 = vsel %vm208, %v560, 0.0
      %v573 = vsel %vm209, %v561, 0.0
      %v574 = vsel %vm208, %v562, 0.0
      %v575 = vsel %vm209, %v563, 0.0
      %576 = vst [vmem:[#allocation2 + $0x120] sm:$0xff] %v570
      %577 = vst [vmem:[#allocation2 + $0x128] sm:$0xff] %v571
      %578 = vst [vmem:[#allocation2 + $0x130] sm:$0xff] %v572
      %579 = vst [vmem:[#allocation2 + $0x138] sm:$0xff] %v573
      %580 = vst [vmem:[#allocation2 + $0x140] sm:$0xff] %v574
      %581 = vst [vmem:[#allocation2 + $0x148] sm:$0xff] %v575
      %v582 = vld [vmem:[%s165] sm:$0xff]
      %v583 = vld [vmem:[%s165 + $0x8] sm:$0xff]
      %v584 = vld [vmem:[%s165 + $0x10] sm:$0xff]
      %v585 = vld [vmem:[%s165 + $0x18] sm:$0xff]
      %v586 = vld [vmem:[%s165 + $0x20] sm:$0xff]
      %v587 = vld [vmem:[%s165 + $0x28] sm:$0xff]
      %v588 = vld [vmem:[%s165 + $0x30] sm:$0xff]
      %v589 = vld [vmem:[%s165 + $0x38] sm:$0xff]
      %v590 = vld [vmem:[%s165 + $0x40] sm:$0xff]
      %600 = vrot.lane.b32.xlu0 %v582, 95
      %v601 = vpop.permute.xlu0 %600
      %602 = vrot.lane.b32.xlu0 %v583, 95
      %v603 = vpop.permute.xlu0 %602
      %604 = vrot.lane.b32.xlu0 %v584, 95
      %v605 = vpop.permute.xlu0 %604
      %606 = vrot.lane.b32.xlu0 %v585, 95
      %v607 = vpop.permute.xlu0 %606
      %608 = vrot.lane.b32.xlu0 %v586, 95
      %v609 = vpop.permute.xlu0 %608
      %610 = vrot.lane.b32.xlu0 %v587, 95
      %v611 = vpop.permute.xlu0 %610
      %612 = vrot.lane.b32.xlu0 %v588, 95
      %v613 = vpop.permute.xlu0 %612
      %614 = vrot.lane.b32.xlu0 %v589, 95
      %v615 = vpop.permute.xlu0 %614
      %616 = vrot.lane.b32.xlu0 %v590, 95
      %v617 = vpop.permute.xlu0 %616
      %vm618 = vcmask 777216
      %v619 = vsel %vm618, %v601, %v603
      %v620 = vsel %vm618, %v603, %v605
      %v621 = vsel %vm618, %v607, %v609
      %v622 = vsel %vm618, %v609, %v611
      %v623 = vsel %vm618, %v613, %v615
      %v624 = vsel %vm618, %v615, %v617
      %631 = vst [vmem:[#allocation2 + $0x150] sm:$0xff] %v619
      %632 = vst [vmem:[#allocation2 + $0x158] sm:$0xff] %v620
      %633 = vst [vmem:[#allocation2 + $0x160] sm:$0xff] %v621
      %634 = vst [vmem:[#allocation2 + $0x168] sm:$0xff] %v622
      %635 = vst [vmem:[#allocation2 + $0x170] sm:$0xff] %v623
      %636 = vst [vmem:[#allocation2 + $0x178] sm:$0xff] %v624
      %v637 = vld [vmem:[%s165] sm:$0xff]
      %v638 = vld [vmem:[%s165 + $0x8] sm:$0xff]
      %v639 = vld [vmem:[%s165 + $0x10] sm:$0xff]
      %v640 = vld [vmem:[%s165 + $0x18] sm:$0xff]
      %v641 = vld [vmem:[%s165 + $0x20] sm:$0xff]
      %v642 = vld [vmem:[%s165 + $0x28] sm:$0xff]
      %v643 = vld [vmem:[%s165 + $0x30] sm:$0xff]
      %v644 = vld [vmem:[%s165 + $0x38] sm:$0xff]
      %v645 = vld [vmem:[%s165 + $0x40] sm:$0xff]
      %655 = vrot.lane.b32.xlu0 %v637, 94
      %v656 = vpop.permute.xlu0 %655
      %657 = vrot.lane.b32.xlu0 %v638, 94
      %v658 = vpop.permute.xlu0 %657
      %659 = vrot.lane.b32.xlu0 %v639, 94
      %v660 = vpop.permute.xlu0 %659
      %661 = vrot.lane.b32.xlu0 %v640, 94
      %v662 = vpop.permute.xlu0 %661
      %663 = vrot.lane.b32.xlu0 %v641, 94
      %v664 = vpop.permute.xlu0 %663
      %665 = vrot.lane.b32.xlu0 %v642, 94
      %v666 = vpop.permute.xlu0 %665
      %667 = vrot.lane.b32.xlu0 %v643, 94
      %v668 = vpop.permute.xlu0 %667
      %669 = vrot.lane.b32.xlu0 %v644, 94
      %v670 = vpop.permute.xlu0 %669
      %671 = vrot.lane.b32.xlu0 %v645, 94
      %v672 = vpop.permute.xlu0 %671
      %vm673 = vcmask 769024
      %v674 = vsel %vm673, %v656, %v658
      %v675 = vsel %vm673, %v658, %v660
      %v676 = vsel %vm673, %v662, %v664
      %v677 = vsel %vm673, %v664, %v666
      %v678 = vsel %vm673, %v668, %v670
      %v679 = vsel %vm673, %v670, %v672
      %v686 = vsel %vm290, %v674, 0.0
      %v687 = vsel %vm291, %v675, 0.0
      %v688 = vsel %vm290, %v676, 0.0
      %v689 = vsel %vm291, %v677, 0.0
      %v690 = vsel %vm290, %v678, 0.0
      %v691 = vsel %vm291, %v679, 0.0
      %692 = vst [vmem:[#allocation2 + $0x180] sm:$0xff] %v686
      %693 = vst [vmem:[#allocation2 + $0x188] sm:$0xff] %v687
      %694 = vst [vmem:[#allocation2 + $0x190] sm:$0xff] %v688
      %695 = vst [vmem:[#allocation2 + $0x198] sm:$0xff] %v689
      %696 = vst [vmem:[#allocation2 + $0x1a0] sm:$0xff] %v690
      %697 = vst [vmem:[#allocation2 + $0x1a8] sm:$0xff] %v691
      %v698 = vld [vmem:[%s1] sm:$0xff]
      %v699 = vld [vmem:[%s1 + $0x8] sm:$0xff]
      %v700 = vld [vmem:[%s1 + $0x10] sm:$0xff]
      %v701 = vld [vmem:[%s1 + $0x18] sm:$0xff]
      %v702 = vld [vmem:[#allocation2] sm:$0xff]
      %v703 = vld [vmem:[#allocation2 + $0x8] sm:$0xff]
      %v704 = vld [vmem:[#allocation2 + $0x10] sm:$0xff]
      %v705 = vld [vmem:[#allocation2 + $0x18] sm:$0xff]
      %v706 = vld [vmem:[#allocation2 + $0x20] sm:$0xff]
      %v707 = vld [vmem:[#allocation2 + $0x28] sm:$0xff]
      %v708 = vld [vmem:[#allocation2 + $0x30] sm:$0xff]
      %v709 = vld [vmem:[#allocation2 + $0x38] sm:$0xff]
      %v710 = vld [vmem:[#allocation2 + $0x40] sm:$0xff]
      %v711 = vld [vmem:[#allocation2 + $0x48] sm:$0xff]
      %v712 = vld [vmem:[#allocation2 + $0x50] sm:$0xff]
      %v713 = vld [vmem:[#allocation2 + $0x58] sm:$0xff]
      %v714 = vld [vmem:[#allocation2 + $0x60] sm:$0xff]
      %v715 = vld [vmem:[#allocation2 + $0x68] sm:$0xff]
      %v716 = vld [vmem:[#allocation2 + $0x70] sm:$0xff]
      %v717 = vld [vmem:[#allocation2 + $0x78] sm:$0xff]
      %v718 = vld [vmem:[#allocation2 + $0x80] sm:$0xff]
      %v719 = vld [vmem:[#allocation2 + $0x88] sm:$0xff]
      %v720 = vld [vmem:[#allocation2 + $0x90] sm:$0xff]
      %v721 = vld [vmem:[#allocation2 + $0x98] sm:$0xff]
      %v722 = vld [vmem:[#allocation2 + $0xa0] sm:$0xff]
      %v723 = vld [vmem:[#allocation2 + $0xa8] sm:$0xff]
      %v724 = vld [vmem:[#allocation2 + $0xb0] sm:$0xff]
      %v725 = vld [vmem:[#allocation2 + $0xb8] sm:$0xff]
      %v726 = vld [vmem:[#allocation2 + $0xc0] sm:$0xff]
      %v727 = vld [vmem:[#allocation2 + $0xc8] sm:$0xff]
      %v728 = vld [vmem:[#allocation2 + $0xd0] sm:$0xff]
      %v729 = vld [vmem:[#allocation2 + $0xd8] sm:$0xff]
      %v730 = vld [vmem:[#allocation2 + $0xe0] sm:$0xff]
      %v731 = vld [vmem:[#allocation2 + $0xe8] sm:$0xff]
      %v732 = vld [vmem:[#allocation2 + $0xf0] sm:$0xff]
      %v733 = vld [vmem:[#allocation2 + $0xf8] sm:$0xff]
      %v734 = vld [vmem:[#allocation2 + $0x100] sm:$0xff]
      %v735 = vld [vmem:[#allocation2 + $0x108] sm:$0xff]
      %v736 = vld [vmem:[#allocation2 + $0x110] sm:$0xff]
      %v737 = vld [vmem:[#allocation2 + $0x118] sm:$0xff]
      %v738 = vld [vmem:[#allocation2 + $0x120] sm:$0xff]
      %v739 = vld [vmem:[#allocation2 + $0x128] sm:$0xff]
      %v740 = vld [vmem:[#allocation2 + $0x130] sm:$0xff]
      %v741 = vld [vmem:[#allocation2 + $0x138] sm:$0xff]
      %v742 = vld [vmem:[#allocation2 + $0x140] sm:$0xff]
      %v743 = vld [vmem:[#allocation2 + $0x148] sm:$0xff]
      %v744 = vld [vmem:[#allocation2 + $0x150] sm:$0xff]
      %v745 = vld [vmem:[#allocation2 + $0x158] sm:$0xff]
      %v746 = vld [vmem:[#allocation2 + $0x160] sm:$0xff]
      %v747 = vld [vmem:[#allocation2 + $0x168] sm:$0xff]
      %v748 = vld [vmem:[#allocation2 + $0x170] sm:$0xff]
      %v749 = vld [vmem:[#allocation2 + $0x178] sm:$0xff]
      %v750 = vld [vmem:[#allocation2 + $0x180] sm:$0xff]
      %v751 = vld [vmem:[#allocation2 + $0x188] sm:$0xff]
      %v752 = vld [vmem:[#allocation2 + $0x190] sm:$0xff]
      %v753 = vld [vmem:[#allocation2 + $0x198] sm:$0xff]
      %v754 = vld [vmem:[#allocation2 + $0x1a0] sm:$0xff]
      %v755 = vld [vmem:[#allocation2 + $0x1a8] sm:$0xff]
      %v756 = vld [vmem:[%s2] sm:$0xff]
      %v757 = vld [vmem:[%s2 + $0x8] sm:$0xff]
      %759 = vset.pattern.permute.xlu0 0
      %760 = vperm.xlu0 %759, %v756
      %v761 = vpop.permute.xlu0 %760
      %764 = vset.pattern.permute.xlu0 0
      %765 = vperm.xlu0 %764, %v757
      %v766 = vpop.permute.xlu0 %765
      %vm768 = vcmask 719872
      %v770 = vsel %vm768, %v699, 0
      %v773 = vsel %vm768, %v701, 0
      %775 = vmatpush.msra.mxu0 %v732
      %776 = vmatpush.msra.mxu0 %v730
      %777 = vmatpush.msra.mxu0 %v728
      %778 = vmatpush.msra.mxu0 %v726
      %779 = vmatpush.msra.mxu0 %v724
      %780 = vmatpush.msra.mxu0 %v722
      %781 = vmatpush.msra.mxu0 %v720
      %782 = vmatpush.msra.mxu0 %v718
      %783 = vmatpush.msra.mxu0 %v716
      %784 = vmatpush.msra.mxu0 %v714
      %785 = vmatpush.msra.mxu0 %v712
      %786 = vmatpush.msra.mxu0 %v710
      %787 = vmatpush.msra.mxu0 %v708
      %788 = vmatpush.msra.mxu0 %v706
      %789 = vmatpush.msra.mxu0 %v704
      %790 = vmatpush.msra.mxu0 %v702
      %791 = vmatmul.f32.gmra.mxu0 %v698
      %v792 = vpop.f32.mrf.mxu0
      %v793 = vadd.f32 %v761, %v792
      %794 = vmatmul.f32.gmra.mxu0 %v700
      %v795 = vpop.f32.mrf.mxu0
      %v796 = vadd.f32 %v766, %v795
      %797 = vdwg.mxu0
      %798 = vmatpush.msra.mxu0 0.0
      %799 = vmatpush.msra.mxu0 0.0
      %800 = vmatpush.msra.mxu0 0.0
      %801 = vmatpush.msra.mxu0 0.0
      %802 = vmatpush.msra.mxu0 0.0
      %803 = vmatpush.msra.mxu0 %v754
      %804 = vmatpush.msra.mxu0 %v752
      %805 = vmatpush.msra.mxu0 %v750
      %806 = vmatpush.msra.mxu0 %v748
      %807 = vmatpush.msra.mxu0 %v746
      %808 = vmatpush.msra.mxu0 %v744
      %809 = vmatpush.msra.mxu0 %v742
      %810 = vmatpush.msra.mxu0 %v740
      %811 = vmatpush.msra.mxu0 %v738
      %812 = vmatpush.msra.mxu0 %v736
      %813 = vmatpush.msra.mxu0 %v734
      %814 = vmatmul.f32.gmra.mxu0 %v770
      %v815 = vpop.f32.mrf.mxu0
      %v816 = vadd.f32 %v793, %v815
      %817 = vmatmul.f32.gmra.mxu0 %v773
      %v818 = vpop.f32.mrf.mxu0
      %v819 = vadd.f32 %v796, %v818
      %820 = vdwg.mxu0
      %821 = vmatpush.msra.mxu0 %v733
      %822 = vmatpush.msra.mxu0 %v731
      %823 = vmatpush.msra.mxu0 %v729
      %824 = vmatpush.msra.mxu0 %v727
      %825 = vmatpush.msra.mxu0 %v725
      %826 = vmatpush.msra.mxu0 %v723
      %827 = vmatpush.msra.mxu0 %v721
      %828 = vmatpush.msra.mxu0 %v719
      %829 = vmatpush.msra.mxu0 %v717
      %830 = vmatpush.msra.mxu0 %v715
      %831 = vmatpush.msra.mxu0 %v713
      %832 = vmatpush.msra.mxu0 %v711
      %833 = vmatpush.msra.mxu0 %v709
      %834 = vmatpush.msra.mxu0 %v707
      %835 = vmatpush.msra.mxu0 %v705
      %836 = vmatpush.msra.mxu0 %v703
      %837 = vmatmul.f32.gmra.mxu0 %v698
      %v838 = vpop.f32.mrf.mxu0
      %v839 = vadd.f32 %v761, %v838
      %840 = vmatmul.f32.gmra.mxu0 %v700
      %v841 = vpop.f32.mrf.mxu0
      %v842 = vadd.f32 %v766, %v841
      %843 = vdwg.mxu0
      %844 = vmatpush.msra.mxu0 0.0
      %845 = vmatpush.msra.mxu0 0.0
      %846 = vmatpush.msra.mxu0 0.0
      %847 = vmatpush.msra.mxu0 0.0
      %848 = vmatpush.msra.mxu0 0.0
      %849 = vmatpush.msra.mxu0 %v755
      %850 = vmatpush.msra.mxu0 %v753
      %851 = vmatpush.msra.mxu0 %v751
      %852 = vmatpush.msra.mxu0 %v749
      %853 = vmatpush.msra.mxu0 %v747
      %854 = vmatpush.msra.mxu0 %v745
      %855 = vmatpush.msra.mxu0 %v743
      %856 = vmatpush.msra.mxu0 %v741
      %857 = vmatpush.msra.mxu0 %v739
      %858 = vmatpush.msra.mxu0 %v737
      %859 = vmatpush.msra.mxu0 %v735
      %860 = vmatmul.f32.gmra.mxu0 %v770
      %v861 = vpop.f32.mrf.mxu0
      %v862 = vadd.f32 %v839, %v861
      %863 = vmatmul.f32.gmra.mxu0 %v773
      %v864 = vpop.f32.mrf.mxu0
      %v865 = vadd.f32 %v842, %v864
      %866 = vdwg.mxu0
      %867 = vst [vmem:[%s170] sm:$0xff] %v816
      %868 = vst [vmem:[%s170 + $0x8] sm:$0xff] %v862
      %869 = vst [vmem:[%s170 + $0x10] sm:$0xff] %v819
      %870 = vst [vmem:[%s170 + $0x18] sm:$0xff] %v865
      %p871 = scmp.lt.s32.totalorder %s14, 1
      %s872 = scalar_select %p871, %s14, 1
      %s873 = smul.addr %s872, 4
      %s874 = smul.addr %s873, 8
      %s875 = scalar_lea.vmem %s3, %s874
      // Predicated region
      $region33: #{fresup_forward.6} parent=31 // pred_check
        %p876 = pneg %p100
      $region34: #{fresup_forward.6} parent=31 // pred_check_branch
        %878 = sbr.rel (%p876) target = $region36
      $region35: #{fresup_forward.6} parent=31 // pred_region
        _
      $region36: #{fresup_forward.6} parent=31 // pred_fallthru
        _
    $region32: #{fresup_forward.6} parent=5 // pred_fallthru
      _
    %p879 = scmp.le.s32.totalorder 2, %s9
    // Predicated region
    $region37: #{fresup_forward.6} parent=5 // pred_check
      %p880 = pneg %p879
    $region38: #{fresup_forward.6} parent=5 // pred_check_branch
      %882 = sbr.rel (%p880) target = $region40
    $region39: #{fresup_forward.6} parent=5 // pred_region
      %s883 = ssub.s32 %s9, 2
      // Predicated region
      $region41: #{fresup_forward.6} parent=39 // pred_check
        %p884 = pneg %p106
      $region42: #{fresup_forward.6} parent=39 // pred_check_branch
        %886 = sbr.rel (%p884) target = $region44
      $region43: #{fresup_forward.6} parent=39 // pred_region
        %p887 = scmp.lt.s32.totalorder %s15, 1
        %s888 = scalar_select %p887, %s15, 1
        %s889 = smul.addr %s888, 4
        %s890 = smul.addr %s889, 8
        %s891 = scalar_lea.vmem %s3, %s890
      $region44: #{fresup_forward.6} parent=39 // pred_fallthru
        _
    $region40: #{fresup_forward.6} parent=5 // pred_fallthru
      _
  $region6: #{fresup_forward.6} parent=0 // loop_footer
    %s13 = sadd.s32 1, %s9
  $region7: #{fresup_forward.6} parent=0 // loop_footer_branch
    %8 = sbr.rel target = $region3
  $region8: #{fresup_forward.6} parent=0 // loop_exit
    _

// kernel: fresup_forward.7
$region0: #{fresup_forward.7}
  #allocation0 [shape = 'u32[]', space=smem, size = 0x4, offset = 0x4, fixed_abs, tag = 'smem constant byte address 0x4 - core index']
  #allocation1 [shape = 'u32[72,128]{1,0:T(1,128)}', space=vmem, size = 0x9000, scoped, tag = 'internal scratch']
  #allocation2 [shape = 'f32[72,1024]{1,0:T(8,128)}', space=vmem, size = 0x48000, scoped, tag = 'scratch operand']
  %s0 = inlined_call_operand.vmem [shape: f32[2,8,1090], index: 0, kind: input, shape index: {}]
  %s1 = inlined_call_operand.vmem [shape: f32[4,72], index: 1, kind: input, shape index: {}]
  %s2 = inlined_call_operand.vmem [shape: f32[4,1], index: 2, kind: input, shape index: {}]
  %s3 = inlined_call_operand.vmem [shape: f32[2,4,1024], index: 3, kind: output, shape index: {}]
  %s4 = sld [smem:[#allocation0]]
  $region45: #{fresup_forward.7} parent=0
    _
  %s6 = ssub.s32 1, %s4
  %s7 = scalar_select 0, %s6, %s4
  loop: start=0, step=1, limit=4
  $region2: #{fresup_forward.7} parent=0 // loop_pre_header
    _
  $region3: #{fresup_forward.7} parent=0 // loop_header
    %s9 = sphi 0, %s13
    %p10 = scmp.ge.s32.totalorder %s9, 4
    %s19 = sphi 0, %s21
    %s22 = sphi 0, %s19
    %s23 = sphi 0, %s22
    %s39 = sphi 0, %s23
    %s43 = sphi 0, %s43
    %s45 = sphi 0, %s43
    %s46 = sphi 0, %s45
    %s60 = sphi 0, %s46
    %s64 = sphi 0, %s64
    %s66 = sphi 0, %s64
    %s67 = sphi 0, %s66
    %s81 = sphi 0, %s67
    %s87 = sphi 0, %s89
    %s90 = sphi 0, %s87
    %s91 = sphi 0, %s90
    %s107 = sphi 0, %s91
  $region4: #{fresup_forward.7} parent=0 // loop_header_branch
    %12 = sbr.rel (%p10) target = $region8
  $region5: #{fresup_forward.7} parent=0 // loop_body
    %s14 = ssub.s32 %s9, 1
    %s15 = ssub.s32 %s9, 2
    %s16 = sadd.s32 %s9, 1
    %s17 = ssub.s32 %s9, %s16
    %p18 = scmp.eq.s32.totalorder %s17, 0
    %s20 = sadd.s32 %s19, 1
    %s21 = scalar_select %p18, %s19, %s20
    %p24 = pneg %p18
    %p25 = scmp.eq.s32.totalorder %s9, 1
    %p26 = por %p24, %p25
    %p27 = scmp.ne.s32.totalorder %s19, %s22
    %p28 = scmp.eq.s32.totalorder %s9, 0
    %p29 = por %p27, %p28
    %p30 = scmp.ne.s32.totalorder %s19, %s22
    %p31 = scmp.eq.s32.totalorder %s14, 1
    %p32 = por %p30, %p31
    %p33 = scmp.ne.s32.totalorder %s22, %s23
    %p34 = scmp.eq.s32.totalorder %s14, 0
    %p35 = por %p33, %p34
    %p36 = scmp.ne.s32.totalorder %s22, %s23
    %p37 = scmp.eq.s32.totalorder %s15, 1
    %p38 = por %p36, %p37
    %p40 = scmp.ne.s32.totalorder %s23, %s39
    %p41 = scmp.eq.s32.totalorder %s15, 0
    %p42 = por %p40, %p41
    %s44 = sadd.s32 %s43, 1
    %p47 = scmp.eq.s32.totalorder %s9, 1
    %p48 = scmp.ne.s32.totalorder %s43, %s45
    %p49 = scmp.eq.s32.totalorder %s9, 0
    %p50 = por %p48, %p49
    %p51 = scmp.ne.s32.totalorder %s43, %s45
    %p52 = scmp.eq.s32.totalorder %s14, 1
    %p53 = por %p51, %p52
    %p54 = scmp.ne.s32.totalorder %s45, %s46
    %p55 = scmp.eq.s32.totalorder %s14, 0
    %p56 = por %p54, %p55
    %p57 = scmp.ne.s32.totalorder %s45, %s46
    %p58 = scmp.eq.s32.totalorder %s15, 1
    %p59 = por %p57, %p58
    %p61 = scmp.ne.s32.totalorder %s46, %s60
    %p62 = scmp.eq.s32.totalorder %s15, 0
    %p63 = por %p61, %p62
    %s65 = sadd.s32 %s64, 1
    %p68 = scmp.eq.s32.totalorder %s9, 1
    %p69 = scmp.ne.s32.totalorder %s64, %s66
    %p70 = scmp.eq.s32.totalorder %s9, 0
    %p71 = por %p69, %p70
    %p72 = scmp.ne.s32.totalorder %s64, %s66
    %p73 = scmp.eq.s32.totalorder %s14, 1
    %p74 = por %p72, %p73
    %p75 = scmp.ne.s32.totalorder %s66, %s67
    %p76 = scmp.eq.s32.totalorder %s14, 0
    %p77 = por %p75, %p76
    %p78 = scmp.ne.s32.totalorder %s66, %s67
    %p79 = scmp.eq.s32.totalorder %s15, 1
    %p80 = por %p78, %p79
    %p82 = scmp.ne.s32.totalorder %s67, %s81
    %p83 = scmp.eq.s32.totalorder %s15, 0
    %p84 = por %p82, %p83
    %s85 = ssub.s32 %s9, %s16
    %p86 = scmp.eq.s32.totalorder %s85, 0
    %s88 = sadd.s32 %s87, 1
    %s89 = scalar_select %p86, %s87, %s88
    %p92 = pneg %p86
    %p93 = scmp.eq.s32.totalorder %s9, 1
    %p94 = por %p92, %p93
    %p95 = scmp.ne.s32.totalorder %s87, %s90
    %p96 = scmp.eq.s32.totalorder %s9, 0
    %p97 = por %p95, %p96
    %p98 = scmp.ne.s32.totalorder %s87, %s90
    %p99 = scmp.eq.s32.totalorder %s14, 1
    %p100 = por %p98, %p99
    %p101 = scmp.ne.s32.totalorder %s90, %s91
    %p102 = scmp.eq.s32.totalorder %s14, 0
    %p103 = por %p101, %p102
    %p104 = scmp.ne.s32.totalorder %s90, %s91
    %p105 = scmp.eq.s32.totalorder %s15, 1
    %p106 = por %p104, %p105
    %p108 = scmp.ne.s32.totalorder %s91, %s107
    %p109 = scmp.eq.s32.totalorder %s15, 0
    %p110 = por %p108, %p109
    %p111 = scmp.le.s32.totalorder 1, %s9
    %p112 = scmp.lt.s32.totalorder %s9, 3
    %p113 = pnand %p111, %p112
    %p114 = pneg %p113
    // Predicated region
    $region9: #{fresup_forward.7} parent=5 // pred_check
      _
    $region10: #{fresup_forward.7} parent=5 // pred_check_branch
      %116 = sbr.rel (%p113) target = $region12
    $region11: #{fresup_forward.7} parent=5 // pred_region
      %s117 = ssub.s32 %s9, 1
      // Predicated region
      $region13: #{fresup_forward.7} parent=11 // pred_check
        %p118 = pneg %p56
      $region14: #{fresup_forward.7} parent=11 // pred_check_branch
        %120 = sbr.rel (%p118) target = $region16
      $region15: #{fresup_forward.7} parent=11 // pred_region
        _
      $region16: #{fresup_forward.7} parent=11 // pred_fallthru
        _
      // Predicated region
      $region17: #{fresup_forward.7} parent=11 // pred_check
        %p121 = pneg %p77
      $region18: #{fresup_forward.7} parent=11 // pred_check_branch
        %123 = sbr.rel (%p121) target = $region20
      $region19: #{fresup_forward.7} parent=11 // pred_region
        _
      $region20: #{fresup_forward.7} parent=11 // pred_fallthru
        _
    $region12: #{fresup_forward.7} parent=5 // pred_fallthru
      _
    %p124 = scmp.lt.s32.totalorder %s9, 2
    // Predicated region
    $region21: #{fresup_forward.7} parent=5 // pred_check
      %p125 = pneg %p124
    $region22: #{fresup_forward.7} parent=5 // pred_check_branch
      %127 = sbr.rel (%p125) target = $region24
    $region23: #{fresup_forward.7} parent=5 // pred_region
      // Predicated region
      $region25: #{fresup_forward.7} parent=23 // pred_check
        %p128 = pneg %p29
      $region26: #{fresup_forward.7} parent=23 // pred_check_branch
        %130 = sbr.rel (%p128) target = $region28
      $region27: #{fresup_forward.7} parent=23 // pred_region
        %p131 = scmp.lt.s32.totalorder %s9, 1
        %s132 = scalar_select %p131, %s9, 1
        %s133 = smul.addr %s132, 9
        %s134 = smul.addr %s133, 8
        %s135 = scalar_lea.vmem %s0, %s134
      $region28: #{fresup_forward.7} parent=23 // pred_fallthru
        _
    $region24: #{fresup_forward.7} parent=5 // pred_fallthru
      _
    %p136 = scmp.le.s32.totalorder 1, %s9
    %p137 = scmp.lt.s32.totalorder %s9, 3
    %p138 = pnand %p136, %p137
    %p139 = pneg %p138
    // Predicated region
    $region29: #{fresup_forward.7} parent=5 // pred_check
      _
    $region30: #{fresup_forward.7} parent=5 // pred_check_branch
      %141 = sbr.rel (%p138) target = $region32
    $region31: #{fresup_forward.7} parent=5 // pred_region
      %s142 = ssub.s32 %s9, 1
      %p143 = scmp.lt.s32.totalorder %s14, 1
      %s144 = scalar_select %p143, %s14, 1
      %s145 = smul.addr %s144, 9
      %s146 = smul.addr %s145, 8
      %s147 = scalar_lea.vmem %s0, %s146
      %p148 = pneg %p35
      %p149 = pneg %p32
      %p150 = pneg %p56
      %p151 = pneg %p53
      %p152 = pneg %p77
      %p153 = pneg %p74
      %p154 = pneg %p103
      %p155 = pneg %p100
      %p156 = scmp.lt.s32.totalorder %s14, 1
      %s157 = scalar_select %p156, %s14, 1
      %s158 = smul.addr %s157, 8
      %s159 = smul.addr %s158, 4
      %s160 = scalar_lea.vmem %s3, %s159
      %p161 = scmp.lt.s32.totalorder %s14, 1
      %s162 = scalar_select %p161, %s14, 1
      %s163 = smul.addr %s162, 9
      %s164 = smul.addr %s163, 8
      %s165 = scalar_lea.vmem %s0, %s164
      %p166 = scmp.lt.s32.totalorder %s14, 1
      %s167 = scalar_select %p166, %s14, 1
      %s168 = smul.addr %s167, 8
      %s169 = smul.addr %s168, 4
      %s170 = scalar_lea.vmem %s3, %s169
      %v171 = vlaneseq
      %v172 = vand.u32 %v171, 127
      %v173 = vadd.s32 %v172, 128
      %v174 = vadd.s32 %v172, 256
      %v175 = vadd.s32 %v172, 384
      %v176 = vadd.s32 %v172, 512
      %v177 = vadd.s32 %v172, 640
      %v178 = vadd.s32 %v172, 768
      %v179 = vadd.s32 %v172, 896
      %vm180 = vcmp.lt.s32.totalorder %v172, 0
      %v181 = vsub.s32 0, %v172
      %v182 = vsel %vm180, %v181, %v172
      %v183 = vshrl.u32 %v182, 5
      %v184 = vand.u32 %v182, 31
      %v185 = vsub.s32 0, %v184
      %v186 = vsel %vm180, %v185, %v184
      %vm187 = vcmp.lt.s32.totalorder %v173, 0
      %v188 = vsub.s32 0, %v173
      %v189 = vsel %vm187, %v188, %v173
      %v190 = vshrl.u32 %v189, 5
      %v191 = vand.u32 %v189, 31
      %v192 = vsub.s32 0, %v191
      %v193 = vsel %vm187, %v192, %v191
      %vm194 = vcmp.lt.s32.totalorder %v174, 0
      %v195 = vsub.s32 0, %v174
      %v196 = vsel %vm194, %v195, %v174
      %v197 = vshrl.u32 %v196, 5
      %v198 = vand.u32 %v196, 31
      %v199 = vsub.s32 0, %v198
      %v200 = vsel %vm194, %v199, %v198
      %vm201 = vcmp.lt.s32.totalorder %v175, 0
      %v202 = vsub.s32 0, %v175
      %v203 = vsel %vm201, %v202, %v175
      %v204 = vshrl.u32 %v203, 5
      %v205 = vand.u32 %v203, 31
      %v206 = vsub.s32 0, %v205
      %v207 = vsel %vm201, %v206, %v205
      %vm208 = vcmp.lt.s32.totalorder %v176, 0
      %v209 = vsub.s32 0, %v176
      %v210 = vsel %vm208, %v209, %v176
      %v211 = vshrl.u32 %v210, 5
      %v212 = vand.u32 %v210, 31
      %v213 = vsub.s32 0, %v212
      %v214 = vsel %vm208, %v213, %v212
      %vm215 = vcmp.lt.s32.totalorder %v177, 0
      %v216 = vsub.s32 0, %v177
      %v217 = vsel %vm215, %v216, %v177
      %v218 = vshrl.u32 %v217, 5
      %v219 = vand.u32 %v217, 31
      %v220 = vsub.s32 0, %v219
      %v221 = vsel %vm215, %v220, %v219
      %vm222 = vcmp.lt.s32.totalorder %v178, 0
      %v223 = vsub.s32 0, %v178
      %v224 = vsel %vm222, %v223, %v178
      %v225 = vshrl.u32 %v224, 5
      %v226 = vand.u32 %v224, 31
      %v227 = vsub.s32 0, %v226
      %v228 = vsel %vm222, %v227, %v226
      %vm229 = vcmp.lt.s32.totalorder %v179, 0
      %v230 = vsub.s32 0, %v179
      %v231 = vsel %vm229, %v230, %v179
      %v232 = vshrl.u32 %v231, 5
      %v233 = vand.u32 %v231, 31
      %v234 = vsub.s32 0, %v233
      %v235 = vsel %vm229, %v234, %v233
      %vm236 = vcmp.ne.s32.totalorder %v186, 0
      %vm237 = vcmp.ne.s32.totalorder %v193, 0
      %vm238 = vcmp.ne.s32.totalorder %v200, 0
      %vm239 = vcmp.ne.s32.totalorder %v207, 0
      %vm240 = vcmp.ne.s32.totalorder %v214, 0
      %vm241 = vcmp.ne.s32.totalorder %v221, 0
      %vm242 = vcmp.ne.s32.totalorder %v228, 0
      %vm243 = vcmp.ne.s32.totalorder %v235, 0
      %vm244 = vcmp.lt.s32.totalorder %v186, 0
      %vm245 = vcmp.lt.s32.totalorder %v193, 0
      %vm246 = vcmp.lt.s32.totalorder %v200, 0
      %vm247 = vcmp.lt.s32.totalorder %v207, 0
      %vm248 = vcmp.lt.s32.totalorder %v214, 0
      %vm249 = vcmp.lt.s32.totalorder %v221, 0
      %vm250 = vcmp.lt.s32.totalorder %v228, 0
      %vm251 = vcmp.lt.s32.totalorder %v235, 0
      %vm252 = vmand %vm244, %vm236
      %vm253 = vmand %vm245, %vm237
      %vm254 = vmand %vm246, %vm238
      %vm255 = vmand %vm247, %vm239
      %vm256 = vmand %vm248, %vm240
      %vm257 = vmand %vm249, %vm241
      %vm258 = vmand %vm250, %vm242
      %vm259 = vmand %vm251, %vm243
      %v260 = vadd.s32 %v186, 32
      %v261 = vadd.s32 %v193, 32
      %v262 = vadd.s32 %v200, 32
      %v263 = vadd.s32 %v207, 32
      %v264 = vadd.s32 %v214, 32
      %v265 = vadd.s32 %v221, 32
      %v266 = vadd.s32 %v228, 32
      %v267 = vadd.s32 %v235, 32
      %v268 = vsel %vm252, %v260, %v186
      %v269 = vsel %vm253, %v261, %v193
      %v270 = vsel %vm254, %v262, %v200
      %v271 = vsel %vm255, %v263, %v207
      %v272 = vsel %vm256, %v264, %v214
      %v273 = vsel %vm257, %v265, %v221
      %v274 = vsel %vm258, %v266, %v228
      %v275 = vsel %vm259, %v267, %v235
      %v276 = vld [vmem:[%s165] sm:$0xff]
      %v277 = vld [vmem:[%s165 + $0x8] sm:$0xff]
      %v278 = vld [vmem:[%s165 + $0x10] sm:$0xff]
      %v279 = vld [vmem:[%s165 + $0x18] sm:$0xff]
      %v280 = vld [vmem:[%s165 + $0x20] sm:$0xff]
      %v281 = vld [vmem:[%s165 + $0x28] sm:$0xff]
      %v282 = vld [vmem:[%s165 + $0x30] sm:$0xff]
      %v283 = vld [vmem:[%s165 + $0x38] sm:$0xff]
      %vm284 = vcmp.ge.s32.totalorder %v268, 1
      %vm285 = vcmp.ge.s32.totalorder %v269, 1
      %vm286 = vcmp.ge.s32.totalorder %v270, 1
      %vm287 = vcmp.ge.s32.totalorder %v271, 1
      %vm288 = vcmp.ge.s32.totalorder %v272, 1
      %vm289 = vcmp.ge.s32.totalorder %v273, 1
      %vm290 = vcmp.ge.s32.totalorder %v274, 1
      %vm291 = vcmp.ge.s32.totalorder %v275, 1
      %v292 = vsel %vm284, 1, 0
      %v293 = vsel %vm285, 1, 0
      %v294 = vsel %vm286, 1, 0
      %v295 = vsel %vm287, 1, 0
      %v296 = vsel %vm288, 1, 0
      %v297 = vsel %vm289, 1, 0
      %v298 = vsel %vm290, 1, 0
      %v299 = vsel %vm291, 1, 0
      %vm300 = vcmp.eq.s32.totalorder %v292, 1
      %vm301 = vcmp.eq.s32.totalorder %v293, 1
      %vm302 = vcmp.eq.s32.totalorder %v294, 1
      %vm303 = vcmp.eq.s32.totalorder %v295, 1
      %vm304 = vcmp.eq.s32.totalorder %v296, 1
      %vm305 = vcmp.eq.s32.totalorder %v297, 1
      %vm306 = vcmp.eq.s32.totalorder %v298, 1
      %vm307 = vcmp.eq.s32.totalorder %v299, 1
      %v308 = vsel %vm300, %v276, 0.0
      %v309 = vsel %vm301, %v277, 0.0
      %v310 = vsel %vm302, %v278, 0.0
      %v311 = vsel %vm303, %v279, 0.0
      %v312 = vsel %vm304, %v280, 0.0
      %v313 = vsel %vm305, %v281, 0.0
      %v314 = vsel %vm306, %v282, 0.0
      %v315 = vsel %vm307, %v283, 0.0
      %316 = vst [vmem:[#allocation2] sm:$0xff] %v308
      %317 = vst [vmem:[#allocation2 + $0x8] sm:$0xff] %v309
      %318 = vst [vmem:[#allocation2 + $0x10] sm:$0xff] %v310
      %319 = vst [vmem:[#allocation2 + $0x18] sm:$0xff] %v311
      %320 = vst [vmem:[#allocation2 + $0x20] sm:$0xff] %v312
      %321 = vst [vmem:[#allocation2 + $0x28] sm:$0xff] %v313
      %322 = vst [vmem:[#allocation2 + $0x30] sm:$0xff] %v314
      %323 = vst [vmem:[#allocation2 + $0x38] sm:$0xff] %v315
      %v324 = vld [vmem:[%s165] sm:$0xff]
      %v325 = vld [vmem:[%s165 + $0x8] sm:$0xff]
      %v326 = vld [vmem:[%s165 + $0x10] sm:$0xff]
      %v327 = vld [vmem:[%s165 + $0x18] sm:$0xff]
      %v328 = vld [vmem:[%s165 + $0x20] sm:$0xff]
      %v329 = vld [vmem:[%s165 + $0x28] sm:$0xff]
      %v330 = vld [vmem:[%s165 + $0x30] sm:$0xff]
      %v331 = vld [vmem:[%s165 + $0x38] sm:$0xff]
      %v332 = vld [vmem:[%s165 + $0x40] sm:$0xff]
      %342 = vrot.lane.b32.xlu0 %v324, 127
      %v343 = vpop.permute.xlu0 %342
      %344 = vrot.lane.b32.xlu0 %v325, 127
      %v345 = vpop.permute.xlu0 %344
      %346 = vrot.lane.b32.xlu0 %v326, 127
      %v347 = vpop.permute.xlu0 %346
      %348 = vrot.lane.b32.xlu0 %v327, 127
      %v349 = vpop.permute.xlu0 %348
      %350 = vrot.lane.b32.xlu0 %v328, 127
      %v351 = vpop.permute.xlu0 %350
      %352 = vrot.lane.b32.xlu0 %v329, 127
      %v353 = vpop.permute.xlu0 %352
      %354 = vrot.lane.b32.xlu0 %v330, 127
      %v355 = vpop.permute.xlu0 %354
      %356 = vrot.lane.b32.xlu0 %v331, 127
      %v357 = vpop.permute.xlu0 %356
      %358 = vrot.lane.b32.xlu0 %v332, 127
      %v359 = vpop.permute.xlu0 %358
      %vm360 = vcmask 1039360
      %v361 = vsel %vm360, %v343, %v345
      %v362 = vsel %vm360, %v345, %v347
      %v363 = vsel %vm360, %v347, %v349
      %v364 = vsel %vm360, %v349, %v351
      %v365 = vsel %vm360, %v351, %v353
      %v366 = vsel %vm360, %v353, %v355
      %v367 = vsel %vm360, %v355, %v357
      %v368 = vsel %vm360, %v357, %v359
      %377 = vst [vmem:[#allocation2 + $0x40] sm:$0xff] %v361
      %378 = vst [vmem:[#allocation2 + $0x48] sm:$0xff] %v362
      %379 = vst [vmem:[#allocation2 + $0x50] sm:$0xff] %v363
      %380 = vst [vmem:[#allocation2 + $0x58] sm:$0xff] %v364
      %381 = vst [vmem:[#allocation2 + $0x60] sm:$0xff] %v365
      %382 = vst [vmem:[#allocation2 + $0x68] sm:$0xff] %v366
      %383 = vst [vmem:[#allocation2 + $0x70] sm:$0xff] %v367
      %384 = vst [vmem:[#allocation2 + $0x78] sm:$0xff] %v368
      %v385 = vld [vmem:[%s165] sm:$0xff]
      %v386 = vld [vmem:[%s165 + $0x8] sm:$0xff]
      %v387 = vld [vmem:[%s165 + $0x10] sm:$0xff]
      %v388 = vld [vmem:[%s165 + $0x18] sm:$0xff]
      %v389 = vld [vmem:[%s165 + $0x20] sm:$0xff]
      %v390 = vld [vmem:[%s165 + $0x28] sm:$0xff]
      %v391 = vld [vmem:[%s165 + $0x30] sm:$0xff]
      %v392 = vld [vmem:[%s165 + $0x38] sm:$0xff]
      %v393 = vld [vmem:[%s165 + $0x40] sm:$0xff]
      %vm394 = vcmp.lt.s32.totalorder %v268, 31
      %vm395 = vcmp.lt.s32.totalorder %v269, 31
      %vm396 = vcmp.lt.s32.totalorder %v270, 31
      %vm397 = vcmp.lt.s32.totalorder %v271, 31
      %vm398 = vcmp.lt.s32.totalorder %v272, 31
      %vm399 = vcmp.lt.s32.totalorder %v273, 31
      %vm400 = vcmp.lt.s32.totalorder %v274, 31
      %vm401 = vcmp.lt.s32.totalorder %v275, 31
      %v402 = vsel %vm394, 1, 0
      %v403 = vsel %vm395, 1, 0
      %v404 = vsel %vm396, 1, 0
      %v405 = vsel %vm397, 1, 0
      %v406 = vsel %vm398, 1, 0
      %v407 = vsel %vm399, 1, 0
      %v408 = vsel %vm400, 1, 0
      %v409 = vsel %vm401, 1, 0
      %vm410 = vcmp.eq.s32.totalorder %v402, 1
      %vm411 = vcmp.eq.s32.totalorder %v403, 1
      %vm412 = vcmp.eq.s32.totalorder %v404, 1
      %vm413 = vcmp.eq.s32.totalorder %v405, 1
      %vm414 = vcmp.eq.s32.totalorder %v406, 1
      %vm415 = vcmp.eq.s32.totalorder %v407, 1
      %vm416 = vcmp.eq.s32.totalorder %v408, 1
      %vm417 = vcmp.eq.s32.totalorder %v409, 1
      %427 = vrot.lane.b32.xlu0 %v385, 126
      %v428 = vpop.permute.xlu0 %427
      %429 = vrot.lane.b32.xlu0 %v386, 126
      %v430 = vpop.permute.xlu0 %429
      %431 = vrot.lane.b32.xlu0 %v387, 126
      %v432 = vpop.permute.xlu0 %431
      %433 = vrot.lane.b32.xlu0 %v388, 126
      %v434 = vpop.permute.xlu0 %433
      %435 = vrot.lane.b32.xlu0 %v389, 126
      %v436 = vpop.permute.xlu0 %435
      %437 = vrot.lane.b32.xlu0 %v390, 126
      %v438 = vpop.permute.xlu0 %437
      %439 = vrot.lane.b32.xlu0 %v391, 126
      %v440 = vpop.permute.xlu0 %439
      %441 = vrot.lane.b32.xlu0 %v392, 126
      %v442 = vpop.permute.xlu0 %441
      %443 = vrot.lane.b32.xlu0 %v393, 126
      %v444 = vpop.permute.xlu0 %443
      %vm445 = vcmask 1031168
      %v446 = vsel %vm445, %v428, %v430
      %v447 = vsel %vm445, %v430, %v432
      %v448 = vsel %vm445, %v432, %v434
      %v449 = vsel %vm445, %v434, %v436
      %v450 = vsel %vm445, %v436, %v438
      %v451 = vsel %vm445, %v438, %v440
      %v452 = vsel %vm445, %v440, %v442
      %v453 = vsel %vm445, %v442, %v444
      %v462 = vsel %vm410, %v446, 0.0
      %v463 = vsel %vm411, %v447, 0.0
      %v464 = vsel %vm412, %v448, 0.0
      %v465 = vsel %vm413, %v449, 0.0
      %v466 = vsel %vm414, %v450, 0.0
      %v467 = vsel %vm415, %v451, 0.0
      %v468 = vsel %vm416, %v452, 0.0
      %v469 = vsel %vm417, %v453, 0.0
      %470 = vst [vmem:[#allocation2 + $0x80] sm:$0xff] %v462
      %471 = vst [vmem:[#allocation2 + $0x88] sm:$0xff] %v463
      %472 = vst [vmem:[#allocation2 + $0x90] sm:$0xff] %v464
      %473 = vst [vmem:[#allocation2 + $0x98] sm:$0xff] %v465
      %474 = vst [vmem:[#allocation2 + $0xa0] sm:$0xff] %v466
      %475 = vst [vmem:[#allocation2 + $0xa8] sm:$0xff] %v467
      %476 = vst [vmem:[#allocation2 + $0xb0] sm:$0xff] %v468
      %477 = vst [vmem:[#allocation2 + $0xb8] sm:$0xff] %v469
      %v478 = vld [vmem:[%s165] sm:$0xff]
      %v479 = vld [vmem:[%s165 + $0x8] sm:$0xff]
      %v480 = vld [vmem:[%s165 + $0x10] sm:$0xff]
      %v481 = vld [vmem:[%s165 + $0x18] sm:$0xff]
      %v482 = vld [vmem:[%s165 + $0x20] sm:$0xff]
      %v483 = vld [vmem:[%s165 + $0x28] sm:$0xff]
      %v484 = vld [vmem:[%s165 + $0x30] sm:$0xff]
      %v485 = vld [vmem:[%s165 + $0x38] sm:$0xff]
      %v486 = vld [vmem:[%s165 + $0x40] sm:$0xff]
      %496 = vrot.lane.b32.xlu0 %v478, 96
      %v497 = vpop.permute.xlu0 %496
      %498 = vrot.lane.b32.xlu0 %v479, 96
      %v499 = vpop.permute.xlu0 %498
      %500 = vrot.lane.b32.xlu0 %v480, 96
      %v501 = vpop.permute.xlu0 %500
      %502 = vrot.lane.b32.xlu0 %v481, 96
      %v503 = vpop.permute.xlu0 %502
      %504 = vrot.lane.b32.xlu0 %v482, 96
      %v505 = vpop.permute.xlu0 %504
      %506 = vrot.lane.b32.xlu0 %v483, 96
      %v507 = vpop.permute.xlu0 %506
      %508 = vrot.lane.b32.xlu0 %v484, 96
      %v509 = vpop.permute.xlu0 %508
      %510 = vrot.lane.b32.xlu0 %v485, 96
      %v511 = vpop.permute.xlu0 %510
      %512 = vrot.lane.b32.xlu0 %v486, 96
      %v513 = vpop.permute.xlu0 %512
      %vm514 = vcmask 785408
      %v515 = vsel %vm514, %v497, %v499
      %v516 = vsel %vm514, %v499, %v501
      %v517 = vsel %vm514, %v501, %v503
      %v518 = vsel %vm514, %v503, %v505
      %v519 = vsel %vm514, %v505, %v507
      %v520 = vsel %vm514, %v507, %v509
      %v521 = vsel %vm514, %v509, %v511
      %v522 = vsel %vm514, %v511, %v513
      %v531 = vsel %vm300, %v515, 0.0
      %v532 = vsel %vm301, %v516, 0.0
      %v533 = vsel %vm302, %v517, 0.0
      %v534 = vsel %vm303, %v518, 0.0
      %v535 = vsel %vm304, %v519, 0.0
      %v536 = vsel %vm305, %v520, 0.0
      %v537 = vsel %vm306, %v521, 0.0
      %v538 = vsel %vm307, %v522, 0.0
      %539 = vst [vmem:[#allocation2 + $0xc0] sm:$0xff] %v531
      %540 = vst [vmem:[#allocation2 + $0xc8] sm:$0xff] %v532
      %541 = vst [vmem:[#allocation2 + $0xd0] sm:$0xff] %v533
      %542 = vst [vmem:[#allocation2 + $0xd8] sm:$0xff] %v534
      %543 = vst [vmem:[#allocation2 + $0xe0] sm:$0xff] %v535
      %544 = vst [vmem:[#allocation2 + $0xe8] sm:$0xff] %v536
      %545 = vst [vmem:[#allocation2 + $0xf0] sm:$0xff] %v537
      %546 = vst [vmem:[#allocation2 + $0xf8] sm:$0xff] %v538
      %v547 = vld [vmem:[%s165] sm:$0xff]
      %v548 = vld [vmem:[%s165 + $0x8] sm:$0xff]
      %v549 = vld [vmem:[%s165 + $0x10] sm:$0xff]
      %v550 = vld [vmem:[%s165 + $0x18] sm:$0xff]
      %v551 = vld [vmem:[%s165 + $0x20] sm:$0xff]
      %v552 = vld [vmem:[%s165 + $0x28] sm:$0xff]
      %v553 = vld [vmem:[%s165 + $0x30] sm:$0xff]
      %v554 = vld [vmem:[%s165 + $0x38] sm:$0xff]
      %v555 = vld [vmem:[%s165 + $0x40] sm:$0xff]
      %565 = vrot.lane.b32.xlu0 %v547, 95
      %v566 = vpop.permute.xlu0 %565
      %567 = vrot.lane.b32.xlu0 %v548, 95
      %v568 = vpop.permute.xlu0 %567
      %569 = vrot.lane.b32.xlu0 %v549, 95
      %v570 = vpop.permute.xlu0 %569
      %571 = vrot.lane.b32.xlu0 %v550, 95
      %v572 = vpop.permute.xlu0 %571
      %573 = vrot.lane.b32.xlu0 %v551, 95
      %v574 = vpop.permute.xlu0 %573
      %575 = vrot.lane.b32.xlu0 %v552, 95
      %v576 = vpop.permute.xlu0 %575
      %577 = vrot.lane.b32.xlu0 %v553, 95
      %v578 = vpop.permute.xlu0 %577
      %579 = vrot.lane.b32.xlu0 %v554, 95
      %v580 = vpop.permute.xlu0 %579
      %581 = vrot.lane.b32.xlu0 %v555, 95
      %v582 = vpop.permute.xlu0 %581
      %vm583 = vcmask 777216
      %v584 = vsel %vm583, %v566, %v568
      %v585 = vsel %vm583, %v568, %v570
      %v586 = vsel %vm583, %v570, %v572
      %v587 = vsel %vm583, %v572, %v574
      %v588 = vsel %vm583, %v574, %v576
      %v589 = vsel %vm583, %v576, %v578
      %v590 = vsel %vm583, %v578, %v580
      %v591 = vsel %vm583, %v580, %v582
      %600 = vst [vmem:[#allocation2 + $0x100] sm:$0xff] %v584
      %601 = vst [vmem:[#allocation2 + $0x108] sm:$0xff] %v585
      %602 = vst [vmem:[#allocation2 + $0x110] sm:$0xff] %v586
      %603 = vst [vmem:[#allocation2 + $0x118] sm:$0xff] %v587
      %604 = vst [vmem:[#allocation2 + $0x120] sm:$0xff] %v588
      %605 = vst [vmem:[#allocation2 + $0x128] sm:$0xff] %v589
      %606 = vst [vmem:[#allocation2 + $0x130] sm:$0xff] %v590
      %607 = vst [vmem:[#allocation2 + $0x138] sm:$0xff] %v591
      %v608 = vld [vmem:[%s165] sm:$0xff]
      %v609 = vld [vmem:[%s165 + $0x8] sm:$0xff]
      %v610 = vld [vmem:[%s165 + $0x10] sm:$0xff]
      %v611 = vld [vmem:[%s165 + $0x18] sm:$0xff]
      %v612 = vld [vmem:[%s165 + $0x20] sm:$0xff]
      %v613 = vld [vmem:[%s165 + $0x28] sm:$0xff]
      %v614 = vld [vmem:[%s165 + $0x30] sm:$0xff]
      %v615 = vld [vmem:[%s165 + $0x38] sm:$0xff]
      %v616 = vld [vmem:[%s165 + $0x40] sm:$0xff]
      %626 = vrot.lane.b32.xlu0 %v608, 94
      %v627 = vpop.permute.xlu0 %626
      %628 = vrot.lane.b32.xlu0 %v609, 94
      %v629 = vpop.permute.xlu0 %628
      %630 = vrot.lane.b32.xlu0 %v610, 94
      %v631 = vpop.permute.xlu0 %630
      %632 = vrot.lane.b32.xlu0 %v611, 94
      %v633 = vpop.permute.xlu0 %632
      %634 = vrot.lane.b32.xlu0 %v612, 94
      %v635 = vpop.permute.xlu0 %634
      %636 = vrot.lane.b32.xlu0 %v613, 94
      %v637 = vpop.permute.xlu0 %636
      %638 = vrot.lane.b32.xlu0 %v614, 94
      %v639 = vpop.permute.xlu0 %638
      %640 = vrot.lane.b32.xlu0 %v615, 94
      %v641 = vpop.permute.xlu0 %640
      %642 = vrot.lane.b32.xlu0 %v616, 94
      %v643 = vpop.permute.xlu0 %642
      %vm644 = vcmask 769024
      %v645 = vsel %vm644, %v627, %v629
      %v646 = vsel %vm644, %v629, %v631
      %v647 = vsel %vm644, %v631, %v633
      %v648 = vsel %vm644, %v633, %v635
      %v649 = vsel %vm644, %v635, %v637
      %v650 = vsel %vm644, %v637, %v639
      %v651 = vsel %vm644, %v639, %v641
      %v652 = vsel %vm644, %v641, %v643
      %v661 = vsel %vm410, %v645, 0.0
      %v662 = vsel %vm411, %v646, 0.0
      %v663 = vsel %vm412, %v647, 0.0
      %v664 = vsel %vm413, %v648, 0.0
      %v665 = vsel %vm414, %v649, 0.0
      %v666 = vsel %vm415, %v650, 0.0
      %v667 = vsel %vm416, %v651, 0.0
      %v668 = vsel %vm417, %v652, 0.0
      %669 = vst [vmem:[#allocation2 + $0x140] sm:$0xff] %v661
      %670 = vst [vmem:[#allocation2 + $0x148] sm:$0xff] %v662
      %671 = vst [vmem:[#allocation2 + $0x150] sm:$0xff] %v663
      %672 = vst [vmem:[#allocation2 + $0x158] sm:$0xff] %v664
      %673 = vst [vmem:[#allocation2 + $0x160] sm:$0xff] %v665
      %674 = vst [vmem:[#allocation2 + $0x168] sm:$0xff] %v666
      %675 = vst [vmem:[#allocation2 + $0x170] sm:$0xff] %v667
      %676 = vst [vmem:[#allocation2 + $0x178] sm:$0xff] %v668
      %v677 = vld [vmem:[%s165] sm:$0xff]
      %v678 = vld [vmem:[%s165 + $0x8] sm:$0xff]
      %v679 = vld [vmem:[%s165 + $0x10] sm:$0xff]
      %v680 = vld [vmem:[%s165 + $0x18] sm:$0xff]
      %v681 = vld [vmem:[%s165 + $0x20] sm:$0xff]
      %v682 = vld [vmem:[%s165 + $0x28] sm:$0xff]
      %v683 = vld [vmem:[%s165 + $0x30] sm:$0xff]
      %v684 = vld [vmem:[%s165 + $0x38] sm:$0xff]
      %v685 = vld [vmem:[%s165 + $0x40] sm:$0xff]
      %695 = vrot.lane.b32.xlu0 %v677, 64
      %v696 = vpop.permute.xlu0 %695
      %697 = vrot.lane.b32.xlu0 %v678, 64
      %v698 = vpop.permute.xlu0 %697
      %699 = vrot.lane.b32.xlu0 %v679, 64
      %v700 = vpop.permute.xlu0 %699
      %701 = vrot.lane.b32.xlu0 %v680, 64
      %v702 = vpop.permute.xlu0 %701
      %703 = vrot.lane.b32.xlu0 %v681, 64
      %v704 = vpop.permute.xlu0 %703
      %705 = vrot.lane.b32.xlu0 %v682, 64
      %v706 = vpop.permute.xlu0 %705
      %707 = vrot.lane.b32.xlu0 %v683, 64
      %v708 = vpop.permute.xlu0 %707
      %709 = vrot.lane.b32.xlu0 %v684, 64
      %v710 = vpop.permute.xlu0 %709
      %711 = vrot.lane.b32.xlu0 %v685, 64
      %v712 = vpop.permute.xlu0 %711
      %vm713 = vcmask 523264
      %v714 = vsel %vm713, %v696, %v698
      %v715 = vsel %vm713, %v698, %v700
      %v716 = vsel %vm713, %v700, %v702
      %v717 = vsel %vm713, %v702, %v704
      %v718 = vsel %vm713, %v704, %v706
      %v719 = vsel %vm713, %v706, %v708
      %v720 = vsel %vm713, %v708, %v710
      %v721 = vsel %vm713, %v710, %v712
      %v730 = vsel %vm300, %v714, 0.0
      %v731 = vsel %vm301, %v715, 0.0
      %v732 = vsel %vm302, %v716, 0.0
      %v733 = vsel %vm303, %v717, 0.0
      %v734 = vsel %vm304, %v718, 0.0
      %v735 = vsel %vm305, %v719, 0.0
      %v736 = vsel %vm306, %v720, 0.0
      %v737 = vsel %vm307, %v721, 0.0
      %738 = vst [vmem:[#allocation2 + $0x180] sm:$0xff] %v730
      %739 = vst [vmem:[#allocation2 + $0x188] sm:$0xff] %v731
      %740 = vst [vmem:[#allocation2 + $0x190] sm:$0xff] %v732
      %741 = vst [vmem:[#allocation2 + $0x198] sm:$0xff] %v733
      %742 = vst [vmem:[#allocation2 + $0x1a0] sm:$0xff] %v734
      %743 = vst [vmem:[#allocation2 + $0x1a8] sm:$0xff] %v735
      %744 = vst [vmem:[#allocation2 + $0x1b0] sm:$0xff] %v736
      %745 = vst [vmem:[#allocation2 + $0x1b8] sm:$0xff] %v737
      %v746 = vld [vmem:[%s165] sm:$0xff]
      %v747 = vld [vmem:[%s165 + $0x8] sm:$0xff]
      %v748 = vld [vmem:[%s165 + $0x10] sm:$0xff]
      %v749 = vld [vmem:[%s165 + $0x18] sm:$0xff]
      %v750 = vld [vmem:[%s165 + $0x20] sm:$0xff]
      %v751 = vld [vmem:[%s165 + $0x28] sm:$0xff]
      %v752 = vld [vmem:[%s165 + $0x30] sm:$0xff]
      %v753 = vld [vmem:[%s165 + $0x38] sm:$0xff]
      %v754 = vld [vmem:[%s165 + $0x40] sm:$0xff]
      %764 = vrot.lane.b32.xlu0 %v746, 63
      %v765 = vpop.permute.xlu0 %764
      %766 = vrot.lane.b32.xlu0 %v747, 63
      %v767 = vpop.permute.xlu0 %766
      %768 = vrot.lane.b32.xlu0 %v748, 63
      %v769 = vpop.permute.xlu0 %768
      %770 = vrot.lane.b32.xlu0 %v749, 63
      %v771 = vpop.permute.xlu0 %770
      %772 = vrot.lane.b32.xlu0 %v750, 63
      %v773 = vpop.permute.xlu0 %772
      %774 = vrot.lane.b32.xlu0 %v751, 63
      %v775 = vpop.permute.xlu0 %774
      %776 = vrot.lane.b32.xlu0 %v752, 63
      %v777 = vpop.permute.xlu0 %776
      %778 = vrot.lane.b32.xlu0 %v753, 63
      %v779 = vpop.permute.xlu0 %778
      %780 = vrot.lane.b32.xlu0 %v754, 63
      %v781 = vpop.permute.xlu0 %780
      %vm782 = vcmask 515072
      %v783 = vsel %vm782, %v765, %v767
      %v784 = vsel %vm782, %v767, %v769
      %v785 = vsel %vm782, %v769, %v771
      %v786 = vsel %vm782, %v771, %v773
      %v787 = vsel %vm782, %v773, %v775
      %v788 = vsel %vm782, %v775, %v777
      %v789 = vsel %vm782, %v777, %v779
      %v790 = vsel %vm782, %v779, %v781
      %799 = vst [vmem:[#allocation2 + $0x1c0] sm:$0xff] %v783
      %800 = vst [vmem:[#allocation2 + $0x1c8] sm:$0xff] %v784
      %801 = vst [vmem:[#allocation2 + $0x1d0] sm:$0xff] %v785
      %802 = vst [vmem:[#allocation2 + $0x1d8] sm:$0xff] %v786
      %803 = vst [vmem:[#allocation2 + $0x1e0] sm:$0xff] %v787
      %804 = vst [vmem:[#allocation2 + $0x1e8] sm:$0xff] %v788
      %805 = vst [vmem:[#allocation2 + $0x1f0] sm:$0xff] %v789
      %806 = vst [vmem:[#allocation2 + $0x1f8] sm:$0xff] %v790
      %v807 = vld [vmem:[%s165] sm:$0xff]
      %v808 = vld [vmem:[%s165 + $0x8] sm:$0xff]
      %v809 = vld [vmem:[%s165 + $0x10] sm:$0xff]
      %v810 = vld [vmem:[%s165 + $0x18] sm:$0xff]
      %v811 = vld [vmem:[%s165 + $0x20] sm:$0xff]
      %v812 = vld [vmem:[%s165 + $0x28] sm:$0xff]
      %v813 = vld [vmem:[%s165 + $0x30] sm:$0xff]
      %v814 = vld [vmem:[%s165 + $0x38] sm:$0xff]
      %v815 = vld [vmem:[%s165 + $0x40] sm:$0xff]
      %825 = vrot.lane.b32.xlu0 %v807, 62
      %v826 = vpop.permute.xlu0 %825
      %827 = vrot.lane.b32.xlu0 %v808, 62
      %v828 = vpop.permute.xlu0 %827
      %829 = vrot.lane.b32.xlu0 %v809, 62
      %v830 = vpop.permute.xlu0 %829
      %831 = vrot.lane.b32.xlu0 %v810, 62
      %v832 = vpop.permute.xlu0 %831
      %833 = vrot.lane.b32.xlu0 %v811, 62
      %v834 = vpop.permute.xlu0 %833
      %835 = vrot.lane.b32.xlu0 %v812, 62
      %v836 = vpop.permute.xlu0 %835
      %837 = vrot.lane.b32.xlu0 %v813, 62
      %v838 = vpop.permute.xlu0 %837
      %839 = vrot.lane.b32.xlu0 %v814, 62
      %v840 = vpop.permute.xlu0 %839
      %841 = vrot.lane.b32.xlu0 %v815, 62
      %v842 = vpop.permute.xlu0 %841
      %vm843 = vcmask 506880
      %v844 = vsel %vm843, %v826, %v828
      %v845 = vsel %vm843, %v828, %v830
      %v846 = vsel %vm843, %v830, %v832
      %v847 = vsel %vm843, %v832, %v834
      %v848 = vsel %vm843, %v834, %v836
      %v849 = vsel %vm843, %v836, %v838
      %v850 = vsel %vm843, %v838, %v840
      %v851 = vsel %vm843, %v840, %v842
      %v860 = vsel %vm410, %v844, 0.0
      %v861 = vsel %vm411, %v845, 0.0
      %v862 = vsel %vm412, %v846, 0.0
      %v863 = vsel %vm413, %v847, 0.0
      %v864 = vsel %vm414, %v848, 0.0
      %v865 = vsel %vm415, %v849, 0.0
      %v866 = vsel %vm416, %v850, 0.0
      %v867 = vsel %vm417, %v851, 0.0
      %868 = vst [vmem:[#allocation2 + $0x200] sm:$0xff] %v860
      %869 = vst [vmem:[#allocation2 + $0x208] sm:$0xff] %v861
      %870 = vst [vmem:[#allocation2 + $0x210] sm:$0xff] %v862
      %871 = vst [vmem:[#allocation2 + $0x218] sm:$0xff] %v863
      %872 = vst [vmem:[#allocation2 + $0x220] sm:$0xff] %v864
      %873 = vst [vmem:[#allocation2 + $0x228] sm:$0xff] %v865
      %874 = vst [vmem:[#allocation2 + $0x230] sm:$0xff] %v866
      %875 = vst [vmem:[#allocation2 + $0x238] sm:$0xff] %v867
      %v876 = vld [vmem:[%s1] sm:$0xf]
      %v877 = vld [vmem:[#allocation2] sm:$0xff]
      %v878 = vld [vmem:[#allocation2 + $0x8] sm:$0xff]
      %v879 = vld [vmem:[#allocation2 + $0x10] sm:$0xff]
      %v880 = vld [vmem:[#allocation2 + $0x18] sm:$0xff]
      %v881 = vld [vmem:[#allocation2 + $0x20] sm:$0xff]
      %v882 = vld [vmem:[#allocation2 + $0x28] sm:$0xff]
      %v883 = vld [vmem:[#allocation2 + $0x30] sm:$0xff]
      %v884 = vld [vmem:[#allocation2 + $0x38] sm:$0xff]
      %v885 = vld [vmem:[#allocation2 + $0x40] sm:$0xff]
      %v886 = vld [vmem:[#allocation2 + $0x48] sm:$0xff]
      %v887 = vld [vmem:[#allocation2 + $0x50] sm:$0xff]
      %v888 = vld [vmem:[#allocation2 + $0x58] sm:$0xff]
      %v889 = vld [vmem:[#allocation2 + $0x60] sm:$0xff]
      %v890 = vld [vmem:[#allocation2 + $0x68] sm:$0xff]
      %v891 = vld [vmem:[#allocation2 + $0x70] sm:$0xff]
      %v892 = vld [vmem:[#allocation2 + $0x78] sm:$0xff]
      %v893 = vld [vmem:[#allocation2 + $0x80] sm:$0xff]
      %v894 = vld [vmem:[#allocation2 + $0x88] sm:$0xff]
      %v895 = vld [vmem:[#allocation2 + $0x90] sm:$0xff]
      %v896 = vld [vmem:[#allocation2 + $0x98] sm:$0xff]
      %v897 = vld [vmem:[#allocation2 + $0xa0] sm:$0xff]
      %v898 = vld [vmem:[#allocation2 + $0xa8] sm:$0xff]
      %v899 = vld [vmem:[#allocation2 + $0xb0] sm:$0xff]
      %v900 = vld [vmem:[#allocation2 + $0xb8] sm:$0xff]
      %v901 = vld [vmem:[#allocation2 + $0xc0] sm:$0xff]
      %v902 = vld [vmem:[#allocation2 + $0xc8] sm:$0xff]
      %v903 = vld [vmem:[#allocation2 + $0xd0] sm:$0xff]
      %v904 = vld [vmem:[#allocation2 + $0xd8] sm:$0xff]
      %v905 = vld [vmem:[#allocation2 + $0xe0] sm:$0xff]
      %v906 = vld [vmem:[#allocation2 + $0xe8] sm:$0xff]
      %v907 = vld [vmem:[#allocation2 + $0xf0] sm:$0xff]
      %v908 = vld [vmem:[#allocation2 + $0xf8] sm:$0xff]
      %v909 = vld [vmem:[#allocation2 + $0x100] sm:$0xff]
      %v910 = vld [vmem:[#allocation2 + $0x108] sm:$0xff]
      %v911 = vld [vmem:[#allocation2 + $0x110] sm:$0xff]
      %v912 = vld [vmem:[#allocation2 + $0x118] sm:$0xff]
      %v913 = vld [vmem:[#allocation2 + $0x120] sm:$0xff]
      %v914 = vld [vmem:[#allocation2 + $0x128] sm:$0xff]
      %v915 = vld [vmem:[#allocation2 + $0x130] sm:$0xff]
      %v916 = vld [vmem:[#allocation2 + $0x138] sm:$0xff]
      %v917 = vld [vmem:[#allocation2 + $0x140] sm:$0xff]
      %v918 = vld [vmem:[#allocation2 + $0x148] sm:$0xff]
      %v919 = vld [vmem:[#allocation2 + $0x150] sm:$0xff]
      %v920 = vld [vmem:[#allocation2 + $0x158] sm:$0xff]
      %v921 = vld [vmem:[#allocation2 + $0x160] sm:$0xff]
      %v922 = vld [vmem:[#allocation2 + $0x168] sm:$0xff]
      %v923 = vld [vmem:[#allocation2 + $0x170] sm:$0xff]
      %v924 = vld [vmem:[#allocation2 + $0x178] sm:$0xff]
      %v925 = vld [vmem:[#allocation2 + $0x180] sm:$0xff]
      %v926 = vld [vmem:[#allocation2 + $0x188] sm:$0xff]
      %v927 = vld [vmem:[#allocation2 + $0x190] sm:$0xff]
      %v928 = vld [vmem:[#allocation2 + $0x198] sm:$0xff]
      %v929 = vld [vmem:[#allocation2 + $0x1a0] sm:$0xff]
      %v930 = vld [vmem:[#allocation2 + $0x1a8] sm:$0xff]
      %v931 = vld [vmem:[#allocation2 + $0x1b0] sm:$0xff]
      %v932 = vld [vmem:[#allocation2 + $0x1b8] sm:$0xff]
      %v933 = vld [vmem:[#allocation2 + $0x1c0] sm:$0xff]
      %v934 = vld [vmem:[#allocation2 + $0x1c8] sm:$0xff]
      %v935 = vld [vmem:[#allocation2 + $0x1d0] sm:$0xff]
      %v936 = vld [vmem:[#allocation2 + $0x1d8] sm:$0xff]
      %v937 = vld [vmem:[#allocation2 + $0x1e0] sm:$0xff]
      %v938 = vld [vmem:[#allocation2 + $0x1e8] sm:$0xff]
      %v939 = vld [vmem:[#allocation2 + $0x1f0] sm:$0xff]
      %v940 = vld [vmem:[#allocation2 + $0x1f8] sm:$0xff]
      %v941 = vld [vmem:[#allocation2 + $0x200] sm:$0xff]
      %v942 = vld [vmem:[#allocation2 + $0x208] sm:$0xff]
      %v943 = vld [vmem:[#allocation2 + $0x210] sm:$0xff]
      %v944 = vld [vmem:[#allocation2 + $0x218] sm:$0xff]
      %v945 = vld [vmem:[#allocation2 + $0x220] sm:$0xff]
      %v946 = vld [vmem:[#allocation2 + $0x228] sm:$0xff]
      %v947 = vld [vmem:[#allocation2 + $0x230] sm:$0xff]
      %v948 = vld [vmem:[#allocation2 + $0x238] sm:$0xff]
      %v949 = vld [vmem:[%s2] sm:$0xf]
      %951 = vset.pattern.permute.xlu0 0
      %952 = vperm.xlu0 %951, %v949
      %v953 = vpop.permute.xlu0 %952
      %vm955 = vcmask 588800
      %v957 = vsel %vm955, %v876, 0
      %959 = vmatpush.msra.mxu0 0.0
      %960 = vmatpush.msra.mxu0 0.0
      %961 = vmatpush.msra.mxu0 0.0
      %962 = vmatpush.msra.mxu0 0.0
      %963 = vmatpush.msra.mxu0 0.0
      %964 = vmatpush.msra.mxu0 0.0
      %965 = vmatpush.msra.mxu0 0.0
      %966 = vmatpush.msra.mxu0 %v941
      %967 = vmatpush.msra.mxu0 %v933
      %968 = vmatpush.msra.mxu0 %v925
      %969 = vmatpush.msra.mxu0 %v917
      %970 = vmatpush.msra.mxu0 %v909
      %971 = vmatpush.msra.mxu0 %v901
      %972 = vmatpush.msra.mxu0 %v893
      %973 = vmatpush.msra.mxu0 %v885
      %974 = vmatpush.msra.mxu0 %v877
      %975 = vmatmul.f32.gmra.mxu0 %v957
      %v976 = vpop.f32.mrf.mxu0
      %v977 = vadd.f32 %v953, %v976
      %978 = vdwg.mxu0
      %979 = vmatpush.msra.mxu0 0.0
      %980 = vmatpush.msra.mxu0 0.0
      %981 = vmatpush.msra.mxu0 0.0
      %982 = vmatpush.msra.mxu0 0.0
      %983 = vmatpush.msra.mxu0 0.0
      %984 = vmatpush.msra.mxu0 0.0
      %985 = vmatpush.msra.mxu0 0.0
      %986 = vmatpush.msra.mxu0 %v942
      %987 = vmatpush.msra.mxu0 %v934
      %988 = vmatpush.msra.mxu0 %v926
      %989 = vmatpush.msra.mxu0 %v918
      %990 = vmatpush.msra.mxu0 %v910
      %991 = vmatpush.msra.mxu0 %v902
      %992 = vmatpush.msra.mxu0 %v894
      %993 = vmatpush.msra.mxu0 %v886
      %994 = vmatpush.msra.mxu0 %v878
      %995 = vmatmul.f32.gmra.mxu0 %v957
      %v996 = vpop.f32.mrf.mxu0
      %v997 = vadd.f32 %v953, %v996
      %998 = vdwg.mxu0
      %999 = vmatpush.msra.mxu0 0.0
      %1000 = vmatpush.msra.mxu0 0.0
      %1001 = vmatpush.msra.mxu0 0.0
      %1002 = vmatpush.msra.mxu0 0.0
      %1003 = vmatpush.msra.mxu0 0.0
      %1004 = vmatpush.msra.mxu0 0.0
      %1005 = vmatpush.msra.mxu0 0.0
      %1006 = vmatpush.msra.mxu0 %v943
      %1007 = vmatpush.msra.mxu0 %v935
      %1008 = vmatpush.msra.mxu0 %v927
      %1009 = vmatpush.msra.mxu0 %v919
      %1010 = vmatpush.msra.mxu0 %v911
      %1011 = vmatpush.msra.mxu0 %v903
      %1012 = vmatpush.msra.mxu0 %v895
      %1013 = vmatpush.msra.mxu0 %v887
      %1014 = vmatpush.msra.mxu0 %v879
      %1015 = vmatmul.f32.gmra.mxu0 %v957
      %v1016 = vpop.f32.mrf.mxu0
      %v1017 = vadd.f32 %v953, %v1016
      %1018 = vdwg.mxu0
      %1019 = vmatpush.msra.mxu0 0.0
      %1020 = vmatpush.msra.mxu0 0.0
      %1021 = vmatpush.msra.mxu0 0.0
      %1022 = vmatpush.msra.mxu0 0.0
      %1023 = vmatpush.msra.mxu0 0.0
      %1024 = vmatpush.msra.mxu0 0.0
      %1025 = vmatpush.msra.mxu0 0.0
      %1026 = vmatpush.msra.mxu0 %v944
      %1027 = vmatpush.msra.mxu0 %v936
      %1028 = vmatpush.msra.mxu0 %v928
      %1029 = vmatpush.msra.mxu0 %v920
      %1030 = vmatpush.msra.mxu0 %v912
      %1031 = vmatpush.msra.mxu0 %v904
      %1032 = vmatpush.msra.mxu0 %v896
      %1033 = vmatpush.msra.mxu0 %v888
      %1034 = vmatpush.msra.mxu0 %v880
      %1035 = vmatmul.f32.gmra.mxu0 %v957
      %v1036 = vpop.f32.mrf.mxu0
      %v1037 = vadd.f32 %v953, %v1036
      %1038 = vdwg.mxu0
      %1039 = vmatpush.msra.mxu0 0.0
      %1040 = vmatpush.msra.mxu0 0.0
      %1041 = vmatpush.msra.mxu0 0.0
      %1042 = vmatpush.msra.mxu0 0.0
      %1043 = vmatpush.msra.mxu0 0.0
      %1044 = vmatpush.msra.mxu0 0.0
      %1045 = vmatpush.msra.mxu0 0.0
      %1046 = vmatpush.msra.mxu0 %v945
      %1047 = vmatpush.msra.mxu0 %v937
      %1048 = vmatpush.msra.mxu0 %v929
      %1049 = vmatpush.msra.mxu0 %v921
      %1050 = vmatpush.msra.mxu0 %v913
      %1051 = vmatpush.msra.mxu0 %v905
      %1052 = vmatpush.msra.mxu0 %v897
      %1053 = vmatpush.msra.mxu0 %v889
      %1054 = vmatpush.msra.mxu0 %v881
      %1055 = vmatmul.f32.gmra.mxu0 %v957
      %v1056 = vpop.f32.mrf.mxu0
      %v1057 = vadd.f32 %v953, %v1056
      %1058 = vdwg.mxu0
      %1059 = vmatpush.msra.mxu0 0.0
      %1060 = vmatpush.msra.mxu0 0.0
      %1061 = vmatpush.msra.mxu0 0.0
      %1062 = vmatpush.msra.mxu0 0.0
      %1063 = vmatpush.msra.mxu0 0.0
      %1064 = vmatpush.msra.mxu0 0.0
      %1065 = vmatpush.msra.mxu0 0.0
      %1066 = vmatpush.msra.mxu0 %v946
      %1067 = vmatpush.msra.mxu0 %v938
      %1068 = vmatpush.msra.mxu0 %v930
      %1069 = vmatpush.msra.mxu0 %v922
      %1070 = vmatpush.msra.mxu0 %v914
      %1071 = vmatpush.msra.mxu0 %v906
      %1072 = vmatpush.msra.mxu0 %v898
      %1073 = vmatpush.msra.mxu0 %v890
      %1074 = vmatpush.msra.mxu0 %v882
      %1075 = vmatmul.f32.gmra.mxu0 %v957
      %v1076 = vpop.f32.mrf.mxu0
      %v1077 = vadd.f32 %v953, %v1076
      %1078 = vdwg.mxu0
      %1079 = vmatpush.msra.mxu0 0.0
      %1080 = vmatpush.msra.mxu0 0.0
      %1081 = vmatpush.msra.mxu0 0.0
      %1082 = vmatpush.msra.mxu0 0.0
      %1083 = vmatpush.msra.mxu0 0.0
      %1084 = vmatpush.msra.mxu0 0.0
      %1085 = vmatpush.msra.mxu0 0.0
      %1086 = vmatpush.msra.mxu0 %v947
      %1087 = vmatpush.msra.mxu0 %v939
      %1088 = vmatpush.msra.mxu0 %v931
      %1089 = vmatpush.msra.mxu0 %v923
      %1090 = vmatpush.msra.mxu0 %v915
      %1091 = vmatpush.msra.mxu0 %v907
      %1092 = vmatpush.msra.mxu0 %v899
      %1093 = vmatpush.msra.mxu0 %v891
      %1094 = vmatpush.msra.mxu0 %v883
      %1095 = vmatmul.f32.gmra.mxu0 %v957
      %v1096 = vpop.f32.mrf.mxu0
      %v1097 = vadd.f32 %v953, %v1096
      %1098 = vdwg.mxu0
      %1099 = vmatpush.msra.mxu0 0.0
      %1100 = vmatpush.msra.mxu0 0.0
      %1101 = vmatpush.msra.mxu0 0.0
      %1102 = vmatpush.msra.mxu0 0.0
      %1103 = vmatpush.msra.mxu0 0.0
      %1104 = vmatpush.msra.mxu0 0.0
      %1105 = vmatpush.msra.mxu0 0.0
      %1106 = vmatpush.msra.mxu0 %v948
      %1107 = vmatpush.msra.mxu0 %v940
      %1108 = vmatpush.msra.mxu0 %v932
      %1109 = vmatpush.msra.mxu0 %v924
      %1110 = vmatpush.msra.mxu0 %v916
      %1111 = vmatpush.msra.mxu0 %v908
      %1112 = vmatpush.msra.mxu0 %v900
      %1113 = vmatpush.msra.mxu0 %v892
      %1114 = vmatpush.msra.mxu0 %v884
      %1115 = vmatmul.f32.gmra.mxu0 %v957
      %v1116 = vpop.f32.mrf.mxu0
      %v1117 = vadd.f32 %v953, %v1116
      %1118 = vdwg.mxu0
      %v1119 = vtanh.pop %v977
      %v1120 = vtanh.pop %v997
      %v1121 = vtanh.pop %v1017
      %v1122 = vtanh.pop %v1037
      %v1123 = vtanh.pop %v1057
      %v1124 = vtanh.pop %v1077
      %v1125 = vtanh.pop %v1097
      %v1126 = vtanh.pop %v1117
      %v1135 = vrot.slane %v1120, 4
      %v1136 = vrot.slane %v1122, 4
      %v1137 = vrot.slane %v1124, 4
      %v1138 = vrot.slane %v1126, 4
      %vm1139 = vcmask 1043456
      %v1140 = vsel %vm1139, %v1119, %v1135
      %v1141 = vsel %vm1139, %v1121, %v1136
      %v1142 = vsel %vm1139, %v1123, %v1137
      %v1143 = vsel %vm1139, %v1125, %v1138
      %1148 = vst [vmem:[%s170] sm:$0xff] %v1140
      %1149 = vst [vmem:[%s170 + $0x8] sm:$0xff] %v1141
      %1150 = vst [vmem:[%s170 + $0x10] sm:$0xff] %v1142
      %1151 = vst [vmem:[%s170 + $0x18] sm:$0xff] %v1143
      %p1152 = scmp.lt.s32.totalorder %s14, 1
      %s1153 = scalar_select %p1152, %s14, 1
      %s1154 = smul.addr %s1153, 8
      %s1155 = smul.addr %s1154, 4
      %s1156 = scalar_lea.vmem %s3, %s1155
      // Predicated region
      $region33: #{fresup_forward.7} parent=31 // pred_check
        %p1157 = pneg %p100
      $region34: #{fresup_forward.7} parent=31 // pred_check_branch
        %1159 = sbr.rel (%p1157) target = $region36
      $region35: #{fresup_forward.7} parent=31 // pred_region
        _
      $region36: #{fresup_forward.7} parent=31 // pred_fallthru
        _
    $region32: #{fresup_forward.7} parent=5 // pred_fallthru
      _
    %p1160 = scmp.le.s32.totalorder 2, %s9
    // Predicated region
    $region37: #{fresup_forward.7} parent=5 // pred_check
      %p1161 = pneg %p1160
    $region38: #{fresup_forward.7} parent=5 // pred_check_branch
      %1163 = sbr.rel (%p1161) target = $region40
    $region39: #{fresup_forward.7} parent=5 // pred_region
      %s1164 = ssub.s32 %s9, 2
      // Predicated region
      $region41: #{fresup_forward.7} parent=39 // pred_check
        %p1165 = pneg %p106
      $region42: #{fresup_forward.7} parent=39 // pred_check_branch
        %1167 = sbr.rel (%p1165) target = $region44
      $region43: #{fresup_forward.7} parent=39 // pred_region
        %p1168 = scmp.lt.s32.totalorder %s15, 1
        %s1169 = scalar_select %p1168, %s15, 1
        %s1170 = smul.addr %s1169, 8
        %s1171 = smul.addr %s1170, 4
        %s1172 = scalar_lea.vmem %s3, %s1171
      $region44: #{fresup_forward.7} parent=39 // pred_fallthru
        _
    $region40: #{fresup_forward.7} parent=5 // pred_fallthru
      _
  $region6: #{fresup_forward.7} parent=0 // loop_footer
    %s13 = sadd.s32 1, %s9
  $region7: #{fresup_forward.7} parent=0 // loop_footer_branch
    %8 = sbr.rel target = $region3
  $region8: #{fresup_forward.7} parent=0 // loop_exit
    _

</llo_original>
